<compile_context>
chip_gen: v7x
topology: tpu7x:2x2x1
jax: 0.10.0
libtpu: 0.0.40
codegen_flags: <defaults>
</compile_context>

<pallas_src>
import functools
import math

import jax
import jax.numpy as jnp
from jax import lax
from jax.experimental import pallas as pl
from jax.experimental.pallas import tpu as pltpu

_VMEM_LIMIT = 32 * 1024 * 1024   # safe scoped budget on v5e/v6e/v7x
_LN_EPS = 1e-12


# ----------------------------- tiling helpers --------------------------------------

def _round_up(x, m):
    return (x + m - 1) // m * m


def _pick_tile(dim, target, align):
    """Largest tile <= target that divides `dim` and is `align`-aligned, else full dim."""
    if dim <= target:
        return dim
    t = (target // align) * align
    while t >= align:
        if dim % t == 0:
            return t
        t -= align
    return dim


def _row_tiling(M, target=256):
    """Row tile + padded row count. Never returns one giant full-M block for large M."""
    if M <= target:
        Mp = _round_up(M, 8)
        return Mp, Mp
    tm = _pick_tile(M, target, 16)
    if tm != M:
        return tm, M
    # no aligned divisor of M -> pad rows to a tile multiple instead of a giant block
    return target, _round_up(M, target)


def _pad_rows(x, Mp):
    M = x.shape[0]
    if Mp == M:
        return x
    return jnp.pad(x, ((0, Mp - M), (0, 0)))


# ----------------------- dense: tiled matmul + bias (+GELU) ------------------------

def _dense_kernel(x_ref, w_ref, b_ref, o_ref, acc_ref, *, activation):
    @pl.when(pl.program_id(2) == 0)
    def _():
        acc_ref[...] = jnp.zeros_like(acc_ref)

    acc_ref[...] += jnp.dot(x_ref[...], w_ref[...],
                            preferred_element_type=jnp.float32)

    @pl.when(pl.program_id(2) == pl.num_programs(2) - 1)
    def _():
        y = acc_ref[...] + b_ref[...]                      # f32 epilogue
        if activation == "gelu":
            # TODO(synk): HF BERT defaults to exact erf GELU; tanh approx has tiny drift.
            c = math.sqrt(2.0 / math.pi)
            y = 0.5 * y * (1.0 + jnp.tanh(c * (y + 0.044715 * y * y * y)))
        o_ref[...] = y.astype(o_ref.dtype)


def dense(x2d, w_bf16, b_f32, activation=None, out_dtype=jnp.bfloat16):
    """x2d: (M, K), w: (K, N) bf16, b: (1, N) f32 -> (M, N) out_dtype."""
    M, K = x2d.shape
    K2, N = w_bf16.shape
    assert K == K2
    tm, Mp = _row_tiling(M)
    xp = _pad_rows(x2d.astype(jnp.bfloat16), Mp)
    tn = _pick_tile(N, 512, 128)
    tk = _pick_tile(K, 1024, 128)
    grid = (Mp // tm, N // tn, K // tk)
    kern = functools.partial(_dense_kernel, activation=activation)
    out = pl.pallas_call(
        kern,
        out_shape=jax.ShapeDtypeStruct((Mp, N), out_dtype),
        grid=grid,
        in_specs=[
            pl.BlockSpec((tm, tk), lambda i, j, k: (i, k)),
            pl.BlockSpec((tk, tn), lambda i, j, k: (k, j)),
            pl.BlockSpec((1, tn), lambda i, j, k: (0, j)),
        ],
        out_specs=pl.BlockSpec((tm, tn), lambda i, j, k: (i, j)),
        scratch_shapes=[pltpu.VMEM((tm, tn), jnp.float32)],
        compiler_params=pltpu.CompilerParams(
            dimension_semantics=("parallel", "parallel", "arbitrary"),
            vmem_limit_bytes=_VMEM_LIMIT),
    )(xp, w_bf16, b_f32)
    return out if Mp == M else out[:M]


# ------------- dense + residual + LayerNorm fused epilogue (full-N tiles) ----------

def _dense_res_ln_kernel(x_ref, w_ref, b_ref, res_ref, g_ref, beta_ref,
                         o_ref, acc_ref):
    @pl.when(pl.program_id(1) == 0)
    def _():
        acc_ref[...] = jnp.zeros_like(acc_ref)

    acc_ref[...] += jnp.dot(x_ref[...], w_ref[...],
                            preferred_element_type=jnp.float32)

    @pl.when(pl.program_id(1) == pl.num_programs(1) - 1)
    def _():
        y = acc_ref[...] + b_ref[...] + res_ref[...].astype(jnp.float32)
        mu = jnp.mean(y, axis=-1, keepdims=True)
        d = y - mu
        var = jnp.mean(d * d, axis=-1, keepdims=True)
        y = d * lax.rsqrt(var + _LN_EPS) * g_ref[...] + beta_ref[...]
        o_ref[...] = y.astype(o_ref.dtype)


def dense_res_ln(x2d, w_bf16, b_f32, residual_bf16, gamma, beta,
                 out_dtype=jnp.bfloat16):
    """LayerNorm(x @ w + b + residual); LN needs the full output row, so tn = N."""
    M, K = x2d.shape
    K2, N = w_bf16.shape
    assert K == K2 and residual_bf16.shape == (M, N)
    tm, Mp = _row_tiling(M)
    xp = _pad_rows(x2d.astype(jnp.bfloat16), Mp)
    rp = _pad_rows(residual_bf16.astype(jnp.bfloat16), Mp)
    tk = _pick_tile(K, 1024, 128)
    grid = (Mp // tm, K // tk)
    out = pl.pallas_call(
        _dense_res_ln_kernel,
        out_shape=jax.ShapeDtypeStruct((Mp, N), out_dtype),
        grid=grid,
        in_specs=[
            pl.BlockSpec((tm, tk), lambda i, k: (i, k)),
            pl.BlockSpec((tk, N), lambda i, k: (k, 0)),
            pl.BlockSpec((1, N), lambda i, k: (0, 0)),
            pl.BlockSpec((tm, N), lambda i, k: (i, 0)),
            pl.BlockSpec((1, N), lambda i, k: (0, 0)),
            pl.BlockSpec((1, N), lambda i, k: (0, 0)),
        ],
        out_specs=pl.BlockSpec((tm, N), lambda i, k: (i, 0)),
        scratch_shapes=[pltpu.VMEM((tm, N), jnp.float32)],
        compiler_params=pltpu.CompilerParams(
            dimension_semantics=("parallel", "arbitrary"),
            vmem_limit_bytes=_VMEM_LIMIT),
    )(xp, w_bf16, b_f32, rp, gamma, beta)
    return out if Mp == M else out[:M]


# --------------- attention: q-tile x batch grid, heads looped in-kernel ------------

def _attention_kernel(q_ref, kv_ref, mask_ref, *out_refs,
                      n_heads, head_dim, hidden, scale, save_probs):
    ctx_ref = out_refs[0]
    m = mask_ref[0]                                    # (1, S) additive mask, f32
    ctx_heads = []
    for h in range(n_heads):                           # static unroll over heads
        q_h = q_ref[0, :, h * head_dim:(h + 1) * head_dim]                    # (tq, Dh)
        k_h = kv_ref[0, :, hidden + h * head_dim:hidden + (h + 1) * head_dim]  # (S, Dh)
        v_h = kv_ref[0, :, 2 * hidden + h * head_dim:
                     2 * hidden + (h + 1) * head_dim]                          # (S, Dh)
        s = lax.dot_general(q_h, k_h, (((1,), (1,)), ((), ())),
                            preferred_element_type=jnp.float32)                # (tq, S)
        s = s * scale + m                              # 1/sqrt(Dh) applied in f32
        s_max = jnp.max(s, axis=-1, keepdims=True)
        p = jnp.exp(s - s_max)
        p = p / jnp.sum(p, axis=-1, keepdims=True)     # exact (probs are returned)
        ctx_h = lax.dot_general(p.astype(v_h.dtype), v_h, (((1,), (0,)), ((), ())),
                                preferred_element_type=jnp.float32)            # (tq, Dh)
        ctx_heads.append(ctx_h)
        if save_probs:
            out_refs[1][0, h] = p                      # (tq, S) f32, lane-dense block
    ctx = jnp.concatenate(ctx_heads, axis=-1)          # (tq, hidden): lane-dense store
    ctx_ref[0] = ctx.astype(ctx_ref.dtype)


def attention(qkv, add_mask, *, n_heads, save_probs):
    """qkv: (B, S, 3*hidden) bf16 in [Q|K|V] column order; add_mask: (B, 1, S) f32.
    Returns (ctx (B, S, hidden) bf16, probs (B, H, S, S) f32 or None)."""
    B, S, threeh = qkv.shape
    hidden = threeh // 3
    H = n_heads
    Dh = hidden // H
    tq = _pick_tile(S, 128, 8)
    n_qt = S // tq
    kern = functools.partial(_attention_kernel, n_heads=H, head_dim=Dh,
                             hidden=hidden, scale=1.0 / math.sqrt(Dh),
                             save_probs=save_probs)
    in_specs = [
        pl.BlockSpec((1, tq, threeh), lambda b, qi: (b, qi, 0)),   # Q rows (tiled)
        pl.BlockSpec((1, S, threeh), lambda b, qi: (b, 0, 0)),     # full K/V rows
        pl.BlockSpec((1, 1, S), lambda b, qi: (b, 0, 0)),
    ]
    ctx_spec = pl.BlockSpec((1, tq, hidden), lambda b, qi: (b, qi, 0))
    if save_probs:
        out_shape = (jax.ShapeDtypeStruct((B, S, hidden), jnp.bfloat16),
                     jax.ShapeDtypeStruct((B, H, S, S), jnp.float32))
        out_specs = (ctx_spec,
                     pl.BlockSpec((1, H, tq, S), lambda b, qi: (b, 0, qi, 0)))
    else:
        out_shape = jax.ShapeDtypeStruct((B, S, hidden), jnp.bfloat16)
        out_specs = ctx_spec
    out = pl.pallas_call(
        kern,
        out_shape=out_shape,
        grid=(B, n_qt),
        in_specs=in_specs,
        out_specs=out_specs,
        compiler_params=pltpu.CompilerParams(
            dimension_semantics=("parallel", "parallel"),
            vmem_limit_bytes=_VMEM_LIMIT),
    )(qkv, qkv, add_mask)
    if save_probs:
        return out
    return out, None


# --------------------------------- JAX glue ----------------------------------------

def layer_norm(x, gamma, beta, eps=_LN_EPS):
    mu = jnp.mean(x, axis=-1, keepdims=True)
    var = jnp.mean((x - mu) ** 2, axis=-1, keepdims=True)
    return (x - mu) / jnp.sqrt(var + eps) * gamma + beta


def init_params(key, *, vocab, n_types, max_seq, hidden, n_heads, ffn, n_layers,
                n_classes):
    def nrm(k, shape, scale=0.02):
        return scale * jax.random.normal(k, shape, dtype=jnp.float32)

    keys = jax.random.split(key, 8 + 8 * n_layers)
    ki = iter(range(len(keys)))
    p = {
        "word_emb": nrm(keys[next(ki)], (vocab, hidden)),
        "type_emb": nrm(keys[next(ki)], (n_types, hidden)),
        "pos_emb": nrm(keys[next(ki)], (max_seq, hidden)),
        "emb_ln_g": jnp.ones((hidden,), jnp.float32),
        "emb_ln_b": jnp.zeros((hidden,), jnp.float32),
        "cls_w": nrm(keys[next(ki)], (hidden, n_classes)),
        "cls_b": jnp.zeros((1, n_classes), jnp.float32),
        # TODO(synk): attr_classifier is unused in forward(); kept only for parity.
        "attr_w": nrm(keys[next(ki)], (max_seq, 1)),
        "attr_b": jnp.zeros((1, 1), jnp.float32),
        "layers": [],
    }
    for _ in range(n_layers):
        wq = nrm(keys[next(ki)], (hidden, hidden))
        wk = nrm(keys[next(ki)], (hidden, hidden))
        wv = nrm(keys[next(ki)], (hidden, hidden))
        lyr = {
            # fused QKV projection: one MXU pass over the activations per layer
            "wqkv": jnp.concatenate([wq, wk, wv], axis=1).astype(jnp.bfloat16),
            "bqkv": jnp.zeros((1, 3 * hidden), jnp.float32),
            "wo": nrm(keys[next(ki)], (hidden, hidden)).astype(jnp.bfloat16),
            "bo": jnp.zeros((1, hidden), jnp.float32),
            "ln1_g": jnp.ones((1, hidden), jnp.float32),
            "ln1_b": jnp.zeros((1, hidden), jnp.float32),
            "w1": nrm(keys[next(ki)], (hidden, ffn)).astype(jnp.bfloat16),
            "b1": jnp.zeros((1, ffn), jnp.float32),
            "w2": nrm(keys[next(ki)], (ffn, hidden)).astype(jnp.bfloat16),
            "b2": jnp.zeros((1, hidden), jnp.float32),
            "ln2_g": jnp.ones((1, hidden), jnp.float32),
            "ln2_b": jnp.zeros((1, hidden), jnp.float32),
        }
        p["layers"].append(lyr)
    return p


def model_forward(params, input_ids, segment_ids, attention_mask, *, n_heads):
    """Mirrors Model.forward: returns (logits, weights_or) where weights_or is the
    last layer's attention probabilities (B, H, S, S)."""
    B, S = input_ids.shape
    hidden = params["word_emb"].shape[1]

    # Embeddings + LayerNorm (gathers + one-off LN left to XLA), bf16 residual stream.
    emb = (params["word_emb"][input_ids]
           + params["type_emb"][segment_ids]
           + params["pos_emb"][:S][None, :, :])
    h2d = layer_norm(emb, params["emb_ln_g"], params["emb_ln_b"]
                     ).reshape(B * S, hidden).astype(jnp.bfloat16)

    # Additive attention mask kept at (B, 1, S): indexed per-batch in the kernel.
    add_mask = ((1.0 - attention_mask.astype(jnp.float32)) * -1e9)[:, None, :]

    n_layers = len(params["layers"])
    probs_last = None
    for li, lyr in enumerate(params["layers"]):
        save_probs = (li == n_layers - 1)   # probs written to HBM only for last layer

        # fused QKV projection; output layout (B, S, [Q|K|V]) consumed directly by
        # the attention kernel (no HBM transpose).
        qkv = dense(h2d, lyr["wqkv"], lyr["bqkv"]).reshape(B, S, 3 * hidden)

        ctx, probs = attention(qkv, add_mask, n_heads=n_heads,
                               save_probs=save_probs)
        if save_probs:
            probs_last = probs

        # attention output projection + residual + LayerNorm, fused epilogue
        h2d = dense_res_ln(ctx.reshape(B * S, hidden), lyr["wo"], lyr["bo"],
                           h2d, lyr["ln1_g"], lyr["ln1_b"])

        # FFN: GELU projection, then down-projection + residual + LayerNorm fused
        f = dense(h2d, lyr["w1"], lyr["b1"], activation="gelu")
        h2d = dense_res_ln(f, lyr["w2"], lyr["b2"],
                           h2d, lyr["ln2_g"], lyr["ln2_b"])

    # CLS pooling + classifier (non-SWAG branch): (B, hidden) @ (hidden, n_classes)
    # is negligible work -> plain XLA matmul instead of a pallas_call.
    cls_output = h2d.reshape(B, S, hidden)[:, 0, :].astype(jnp.float32)
    logits = cls_output @ params["cls_w"] + params["cls_b"]
    return logits, probs_last


# ----------------------------------- main -------------------------------------------

if __name__ == "__main__":
    # Small, BERT-like hyperparameters (hidden=32 stands in for 768).
    B, S = 2, 8
    HIDDEN, N_HEADS, FFN, N_LAYERS = 32, 4, 64, 2
    VOCAB, N_TYPES, N_CLASSES = 100, 2, 3

    key = jax.random.PRNGKey(0)
    k_param, k_ids, k_seg = jax.random.split(key, 3)

    params = init_params(k_param, vocab=VOCAB, n_types=N_TYPES, max_seq=S,
                         hidden=HIDDEN, n_heads=N_HEADS, ffn=FFN,
                         n_layers=N_LAYERS, n_classes=N_CLASSES)

    input_ids = jax.random.randint(k_ids, (B, S), 0, VOCAB, dtype=jnp.int32)
    segment_ids = jax.random.randint(k_seg, (B, S), 0, N_TYPES, dtype=jnp.int32)
    # second example has 2 padding positions
    attention_mask = jnp.array(
        [[1, 1, 1, 1, 1, 1, 1, 1],
         [1, 1, 1, 1, 1, 1, 0, 0]], dtype=jnp.int32)

    fwd = jax.jit(functools.partial(model_forward, n_heads=N_HEADS))
    logits, weights_or = fwd(params, input_ids, segment_ids, attention_mask)
    jax.block_until_ready((logits, weights_or))

    assert logits.shape == (B, N_CLASSES)
    assert weights_or.shape == (B, N_HEADS, S, S)
    assert bool(jnp.isfinite(logits).all())
    assert bool(jnp.isfinite(weights_or).all())
    print("KERNEL_OK")
</pallas_src>

<mosaic_0001>
module attributes {stable_mosaic.version = 11 : i64} {
  func.func @_dense_kernel(%arg0: i32, %arg1: i32, %arg2: i32, %arg3: memref<16x32xbf16, #tpu.memory_space<vmem>>, %arg4: memref<32x96xbf16, #tpu.memory_space<vmem>>, %arg5: memref<1x96xf32, #tpu.memory_space<vmem>>, %arg6: memref<16x96xbf16, #tpu.memory_space<vmem>>, %arg7: memref<16x96xf32, #tpu.memory_space<vmem>>) attributes {dimension_semantics = [#tpu.dimension_semantics<parallel>, #tpu.dimension_semantics<parallel>, #tpu.dimension_semantics<arbitrary>], iteration_bounds = array<i64: 1, 1, 1>, scalar_prefetch = 0 : i64, scratch_operands = 1 : i64, tpu.core_type = #tpu.core_type<tc>, window_params = [{transform_indices = @transform_0, window_bounds = array<i64: 16, 32>}, {transform_indices = @transform_1, window_bounds = array<i64: 32, 96>}, {transform_indices = @transform_2, window_bounds = array<i64: 1, 96>}, {transform_indices = @transform_3, window_bounds = array<i64: 16, 96>}]} {
    %c0_i32 = arith.constant 0 : i32
    %0 = arith.cmpi eq, %arg2, %c0_i32 : i32
    %1 = arith.extui %0 : i1 to i32
    %c0_i32_0 = arith.constant 0 : i32
    %2 = arith.cmpi ne, %1, %c0_i32_0 : i32
    scf.if %2 {
      %cst_10 = arith.constant 0.000000e+00 : f32
      %12 = vector.broadcast %cst_10 : f32 to vector<16x96xf32>
      %c0_11 = arith.constant 0 : index
      %c0_12 = arith.constant 0 : index
      %13 = vector.load %arg7[%c0_11, %c0_12] : memref<16x96xf32, #tpu.memory_space<vmem>>, vector<16x96xf32>
      tpu.vector_store %arg7[%c0_11, %c0_12], %12 {strides = array<i32>} : memref<16x96xf32, #tpu.memory_space<vmem>>, vector<16x96xf32>,
    } else {
    }
    %c0 = arith.constant 0 : index
    %c0_1 = arith.constant 0 : index
    %3 = vector.load %arg7[%c0, %c0_1] : memref<16x96xf32, #tpu.memory_space<vmem>>, vector<16x96xf32>
    %c0_2 = arith.constant 0 : index
    %c0_3 = arith.constant 0 : index
    %4 = vector.load %arg3[%c0_2, %c0_3] : memref<16x32xbf16, #tpu.memory_space<vmem>>, vector<16x32xbf16>
    %c0_4 = arith.constant 0 : index
    %c0_5 = arith.constant 0 : index
    %5 = vector.load %arg4[%c0_4, %c0_5] : memref<32x96xbf16, #tpu.memory_space<vmem>>, vector<32x96xbf16>
    %cst = arith.constant dense<0.000000e+00> : vector<16x96xf32>
    %6 = tpu.matmul %4, %5, %cst {dimension_numbers = #tpu.dot_dimension_numbers<[1], [0], [0], [1], [0, 0, 1, 1], [], []>} : vector<16x32xbf16>, vector<32x96xbf16>, vector<16x96xf32> -> vector<16x96xf32>
    %7 = arith.addf %3, %6 : vector<16x96xf32>
    %c0_6 = arith.constant 0 : index
    %c0_7 = arith.constant 0 : index
    %8 = vector.load %arg7[%c0_6, %c0_7] : memref<16x96xf32, #tpu.memory_space<vmem>>, vector<16x96xf32>
    tpu.vector_store %arg7[%c0_6, %c0_7], %7 {strides = array<i32>} : memref<16x96xf32, #tpu.memory_space<vmem>>, vector<16x96xf32>,
    %c0_i32_8 = arith.constant 0 : i32
    %9 = arith.cmpi eq, %arg2, %c0_i32_8 : i32
    %10 = arith.extui %9 : i1 to i32
    %c0_i32_9 = arith.constant 0 : i32
    %11 = arith.cmpi ne, %10, %c0_i32_9 : i32
    scf.if %11 {
      %c0_10 = arith.constant 0 : index
      %c0_11 = arith.constant 0 : index
      %12 = vector.load %arg7[%c0_10, %c0_11] : memref<16x96xf32, #tpu.memory_space<vmem>>, vector<16x96xf32>
      %c0_12 = arith.constant 0 : index
      %c0_13 = arith.constant 0 : index
      %13 = vector.load %arg5[%c0_12, %c0_13] : memref<1x96xf32, #tpu.memory_space<vmem>>, vector<1x96xf32>
      %14 = vector.broadcast %13 : vector<1x96xf32> to vector<16x96xf32>
      %15 = arith.addf %12, %14 : vector<16x96xf32>
      %16 = arith.truncf %15 : vector<16x96xf32> to vector<16x96xbf16>
      %c0_14 = arith.constant 0 : index
      %c0_15 = arith.constant 0 : index
      %17 = vector.load %arg6[%c0_14, %c0_15] : memref<16x96xbf16, #tpu.memory_space<vmem>>, vector<16x96xbf16>
      tpu.vector_store %arg6[%c0_14, %c0_15], %16 {strides = array<i32>} : memref<16x96xbf16, #tpu.memory_space<vmem>>, vector<16x96xbf16>,
    } else {
    }
    return
  }
  func.func @transform_0(%arg0: i32, %arg1: i32, %arg2: i32) -> (i32, i32) {
    %c0_i32 = arith.constant 0 : i32
    return %arg0, %arg2 : i32, i32
  }
  func.func @transform_1(%arg0: i32, %arg1: i32, %arg2: i32) -> (i32, i32) {
    %c0_i32 = arith.constant 0 : i32
    return %arg2, %arg1 : i32, i32
  }
  func.func @transform_2(%arg0: i32, %arg1: i32, %arg2: i32) -> (i32, i32) {
    %c0_i32 = arith.constant 0 : i32
    %c0_i32_0 = arith.constant 0 : i32
    return %c0_i32, %arg1 : i32, i32
  }
  func.func @transform_3(%arg0: i32, %arg1: i32, %arg2: i32) -> (i32, i32) {
    %c0_i32 = arith.constant 0 : i32
    return %arg0, %arg1 : i32, i32
  }
}

module attributes {stable_mosaic.version = 11 : i64} {
  func.func @_dense_kernel(%arg0: i32, %arg1: i32, %arg2: i32, %arg3: memref<16x32xbf16, #tpu.memory_space<vmem>>, %arg4: memref<32x64xbf16, #tpu.memory_space<vmem>>, %arg5: memref<1x64xf32, #tpu.memory_space<vmem>>, %arg6: memref<16x64xbf16, #tpu.memory_space<vmem>>, %arg7: memref<16x64xf32, #tpu.memory_space<vmem>>) attributes {dimension_semantics = [#tpu.dimension_semantics<parallel>, #tpu.dimension_semantics<parallel>, #tpu.dimension_semantics<arbitrary>], iteration_bounds = array<i64: 1, 1, 1>, scalar_prefetch = 0 : i64, scratch_operands = 1 : i64, tpu.core_type = #tpu.core_type<tc>, window_params = [{transform_indices = @transform_0, window_bounds = array<i64: 16, 32>}, {transform_indices = @transform_1, window_bounds = array<i64: 32, 64>}, {transform_indices = @transform_2, window_bounds = array<i64: 1, 64>}, {transform_indices = @transform_3, window_bounds = array<i64: 16, 64>}]} {
    %c0_i32 = arith.constant 0 : i32
    %0 = arith.cmpi eq, %arg2, %c0_i32 : i32
    %1 = arith.extui %0 : i1 to i32
    %c0_i32_0 = arith.constant 0 : i32
    %2 = arith.cmpi ne, %1, %c0_i32_0 : i32
    scf.if %2 {
      %cst_10 = arith.constant 0.000000e+00 : f32
      %12 = vector.broadcast %cst_10 : f32 to vector<16x64xf32>
      %c0_11 = arith.constant 0 : index
      %c0_12 = arith.constant 0 : index
      %13 = vector.load %arg7[%c0_11, %c0_12] : memref<16x64xf32, #tpu.memory_space<vmem>>, vector<16x64xf32>
      tpu.vector_store %arg7[%c0_11, %c0_12], %12 {strides = array<i32>} : memref<16x64xf32, #tpu.memory_space<vmem>>, vector<16x64xf32>,
    } else {
    }
    %c0 = arith.constant 0 : index
    %c0_1 = arith.constant 0 : index
    %3 = vector.load %arg7[%c0, %c0_1] : memref<16x64xf32, #tpu.memory_space<vmem>>, vector<16x64xf32>
    %c0_2 = arith.constant 0 : index
    %c0_3 = arith.constant 0 : index
    %4 = vector.load %arg3[%c0_2, %c0_3] : memref<16x32xbf16, #tpu.memory_space<vmem>>, vector<16x32xbf16>
    %c0_4 = arith.constant 0 : index
    %c0_5 = arith.constant 0 : index
    %5 = vector.load %arg4[%c0_4, %c0_5] : memref<32x64xbf16, #tpu.memory_space<vmem>>, vector<32x64xbf16>
    %cst = arith.constant dense<0.000000e+00> : vector<16x64xf32>
    %6 = tpu.matmul %4, %5, %cst {dimension_numbers = #tpu.dot_dimension_numbers<[1], [0], [0], [1], [0, 0, 1, 1], [], []>} : vector<16x32xbf16>, vector<32x64xbf16>, vector<16x64xf32> -> vector<16x64xf32>
    %7 = arith.addf %3, %6 : vector<16x64xf32>
    %c0_6 = arith.constant 0 : index
    %c0_7 = arith.constant 0 : index
    %8 = vector.load %arg7[%c0_6, %c0_7] : memref<16x64xf32, #tpu.memory_space<vmem>>, vector<16x64xf32>
    tpu.vector_store %arg7[%c0_6, %c0_7], %7 {strides = array<i32>} : memref<16x64xf32, #tpu.memory_space<vmem>>, vector<16x64xf32>,
    %c0_i32_8 = arith.constant 0 : i32
    %9 = arith.cmpi eq, %arg2, %c0_i32_8 : i32
    %10 = arith.extui %9 : i1 to i32
    %c0_i32_9 = arith.constant 0 : i32
    %11 = arith.cmpi ne, %10, %c0_i32_9 : i32
    scf.if %11 {
      %c0_10 = arith.constant 0 : index
      %c0_11 = arith.constant 0 : index
      %12 = vector.load %arg7[%c0_10, %c0_11] : memref<16x64xf32, #tpu.memory_space<vmem>>, vector<16x64xf32>
      %c0_12 = arith.constant 0 : index
      %c0_13 = arith.constant 0 : index
      %13 = vector.load %arg5[%c0_12, %c0_13] : memref<1x64xf32, #tpu.memory_space<vmem>>, vector<1x64xf32>
      %14 = vector.broadcast %13 : vector<1x64xf32> to vector<16x64xf32>
      %15 = arith.addf %12, %14 : vector<16x64xf32>
      %cst_14 = arith.constant 5.000000e-01 : f32
      %16 = vector.broadcast %cst_14 : f32 to vector<16x64xf32>
      %17 = arith.mulf %16, %15 : vector<16x64xf32>
      %cst_15 = arith.constant 4.471500e-02 : f32
      %18 = vector.broadcast %cst_15 : f32 to vector<16x64xf32>
      %19 = arith.mulf %18, %15 : vector<16x64xf32>
      %20 = arith.mulf %19, %15 : vector<16x64xf32>
      %21 = arith.mulf %20, %15 : vector<16x64xf32>
      %22 = arith.addf %15, %21 : vector<16x64xf32>
      %cst_16 = arith.constant 0.797884583 : f32
      %23 = vector.broadcast %cst_16 : f32 to vector<16x64xf32>
      %24 = arith.mulf %23, %22 : vector<16x64xf32>
      %25 = math.tanh %24 : vector<16x64xf32>
      %cst_17 = arith.constant 1.000000e+00 : f32
      %26 = vector.broadcast %cst_17 : f32 to vector<16x64xf32>
      %27 = arith.addf %26, %25 : vector<16x64xf32>
      %28 = arith.mulf %17, %27 : vector<16x64xf32>
      %29 = arith.truncf %28 : vector<16x64xf32> to vector<16x64xbf16>
      %c0_18 = arith.constant 0 : index
      %c0_19 = arith.constant 0 : index
      %30 = vector.load %arg6[%c0_18, %c0_19] : memref<16x64xbf16, #tpu.memory_space<vmem>>, vector<16x64xbf16>
      tpu.vector_store %arg6[%c0_18, %c0_19], %29 {strides = array<i32>} : memref<16x64xbf16, #tpu.memory_space<vmem>>, vector<16x64xbf16>,
    } else {
    }
    return
  }
  func.func @transform_0(%arg0: i32, %arg1: i32, %arg2: i32) -> (i32, i32) {
    %c0_i32 = arith.constant 0 : i32
    return %arg0, %arg2 : i32, i32
  }
  func.func @transform_1(%arg0: i32, %arg1: i32, %arg2: i32) -> (i32, i32) {
    %c0_i32 = arith.constant 0 : i32
    return %arg2, %arg1 : i32, i32
  }
  func.func @transform_2(%arg0: i32, %arg1: i32, %arg2: i32) -> (i32, i32) {
    %c0_i32 = arith.constant 0 : i32
    %c0_i32_0 = arith.constant 0 : i32
    return %c0_i32, %arg1 : i32, i32
  }
  func.func @transform_3(%arg0: i32, %arg1: i32, %arg2: i32) -> (i32, i32) {
    %c0_i32 = arith.constant 0 : i32
    return %arg0, %arg1 : i32, i32
  }
}

module attributes {stable_mosaic.version = 11 : i64} {
  func.func @_attention_kernel(%arg0: i32, %arg1: i32, %arg2: memref<1x8x96xbf16, #tpu.memory_space<vmem>>, %arg3: memref<1x8x96xbf16, #tpu.memory_space<vmem>>, %arg4: memref<1x1x8xf32, #tpu.memory_space<vmem>>, %arg5: memref<1x8x32xbf16, #tpu.memory_space<vmem>>) attributes {dimension_semantics = [#tpu.dimension_semantics<parallel>, #tpu.dimension_semantics<parallel>], iteration_bounds = array<i64: 2, 1>, scalar_prefetch = 0 : i64, scratch_operands = 0 : i64, tpu.core_type = #tpu.core_type<tc>, window_params = [{transform_indices = @transform_0, window_bounds = array<i64: 1, 8, 96>}, {transform_indices = @transform_1, window_bounds = array<i64: 1, 8, 96>}, {transform_indices = @transform_2, window_bounds = array<i64: 1, 1, 8>}, {transform_indices = @transform_3, window_bounds = array<i64: 1, 8, 32>}]} {
    %c0 = arith.constant 0 : index
    %c0_0 = arith.constant 0 : index
    %c0_1 = arith.constant 0 : index
    %0 = vector.load %arg4[%c0, %c0_0, %c0_1] : memref<1x1x8xf32, #tpu.memory_space<vmem>>, vector<1x1x8xf32>
    %1 = vector.shape_cast %0 : vector<1x1x8xf32> to vector<1x8xf32>
    %c0_2 = arith.constant 0 : index
    %c0_3 = arith.constant 0 : index
    %c0_4 = arith.constant 0 : index
    %2 = vector.load %arg2[%c0_2, %c0_3, %c0_4] : memref<1x8x96xbf16, #tpu.memory_space<vmem>>, vector<1x8x8xbf16>
    %3 = vector.shape_cast %2 : vector<1x8x8xbf16> to vector<8x8xbf16>
    %c0_5 = arith.constant 0 : index
    %c0_6 = arith.constant 0 : index
    %c32 = arith.constant 32 : index
    %4 = vector.load %arg3[%c0_5, %c0_6, %c32] : memref<1x8x96xbf16, #tpu.memory_space<vmem>>, vector<1x8x8xbf16>
    %5 = vector.shape_cast %4 : vector<1x8x8xbf16> to vector<8x8xbf16>
    %c0_7 = arith.constant 0 : index
    %c0_8 = arith.constant 0 : index
    %c64 = arith.constant 64 : index
    %6 = vector.load %arg3[%c0_7, %c0_8, %c64] : memref<1x8x96xbf16, #tpu.memory_space<vmem>>, vector<1x8x8xbf16>
    %7 = vector.shape_cast %6 : vector<1x8x8xbf16> to vector<8x8xbf16>
    %cst = arith.constant dense<0.000000e+00> : vector<8x8xf32>
    %8 = tpu.matmul %3, %5, %cst {dimension_numbers = #tpu.dot_dimension_numbers<[1], [1], [0], [0], [0, 0, 1, 0], [], []>} : vector<8x8xbf16>, vector<8x8xbf16>, vector<8x8xf32> -> vector<8x8xf32>
    %cst_9 = arith.constant 0.353553385 : f32
    %9 = vector.broadcast %cst_9 : f32 to vector<8x8xf32>
    %10 = arith.mulf %8, %9 : vector<8x8xf32>
    %11 = vector.broadcast %1 : vector<1x8xf32> to vector<8x8xf32>
    %12 = arith.addf %10, %11 : vector<8x8xf32>
    %cst_10 = arith.constant dense<0xFF800000> : vector<8xf32>
    %13 = vector.multi_reduction <maximumf>, %12, %cst_10 [1] : vector<8x8xf32> to vector<8xf32>
    %14 = vector.shape_cast %13 : vector<8xf32> to vector<8x1xf32>
    %15 = vector.broadcast %14 : vector<8x1xf32> to vector<8x8xf32>
    %16 = arith.subf %12, %15 : vector<8x8xf32>
    %17 = math.exp %16 : vector<8x8xf32>
    %cst_11 = arith.constant dense<0.000000e+00> : vector<8xf32>
    %18 = vector.multi_reduction <add>, %17, %cst_11 [1] : vector<8x8xf32> to vector<8xf32>
    %19 = vector.shape_cast %18 : vector<8xf32> to vector<8x1xf32>
    %20 = vector.broadcast %19 : vector<8x1xf32> to vector<8x8xf32>
    %21 = arith.divf %17, %20 : vector<8x8xf32>
    %22 = arith.truncf %21 : vector<8x8xf32> to vector<8x8xbf16>
    %cst_12 = arith.constant dense<0.000000e+00> : vector<8x8xf32>
    %23 = tpu.matmul %22, %7, %cst_12 {dimension_numbers = #tpu.dot_dimension_numbers<[1], [0], [0], [1], [0, 0, 1, 1], [], []>} : vector<8x8xbf16>, vector<8x8xbf16>, vector<8x8xf32> -> vector<8x8xf32>
    %c0_13 = arith.constant 0 : index
    %c0_14 = arith.constant 0 : index
    %c8 = arith.constant 8 : index
    %24 = vector.load %arg2[%c0_13, %c0_14, %c8] : memref<1x8x96xbf16, #tpu.memory_space<vmem>>, vector<1x8x8xbf16>
    %25 = vector.shape_cast %24 : vector<1x8x8xbf16> to vector<8x8xbf16>
    %c0_15 = arith.constant 0 : index
    %c0_16 = arith.constant 0 : index
    %c40 = arith.constant 40 : index
    %26 = vector.load %arg3[%c0_15, %c0_16, %c40] : memref<1x8x96xbf16, #tpu.memory_space<vmem>>, vector<1x8x8xbf16>
    %27 = vector.shape_cast %26 : vector<1x8x8xbf16> to vector<8x8xbf16>
    %c0_17 = arith.constant 0 : index
    %c0_18 = arith.constant 0 : index
    %c72 = arith.constant 72 : index
    %28 = vector.load %arg3[%c0_17, %c0_18, %c72] : memref<1x8x96xbf16, #tpu.memory_space<vmem>>, vector<1x8x8xbf16>
    %29 = vector.shape_cast %28 : vector<1x8x8xbf16> to vector<8x8xbf16>
    %cst_19 = arith.constant dense<0.000000e+00> : vector<8x8xf32>
    %30 = tpu.matmul %25, %27, %cst_19 {dimension_numbers = #tpu.dot_dimension_numbers<[1], [1], [0], [0], [0, 0, 1, 0], [], []>} : vector<8x8xbf16>, vector<8x8xbf16>, vector<8x8xf32> -> vector<8x8xf32>
    %cst_20 = arith.constant 0.353553385 : f32
    %31 = vector.broadcast %cst_20 : f32 to vector<8x8xf32>
    %32 = arith.mulf %30, %31 : vector<8x8xf32>
    %33 = vector.broadcast %1 : vector<1x8xf32> to vector<8x8xf32>
    %34 = arith.addf %32, %33 : vector<8x8xf32>
    %cst_21 = arith.constant dense<0xFF800000> : vector<8xf32>
    %35 = vector.multi_reduction <maximumf>, %34, %cst_21 [1] : vector<8x8xf32> to vector<8xf32>
    %36 = vector.shape_cast %35 : vector<8xf32> to vector<8x1xf32>
    %37 = vector.broadcast %36 : vector<8x1xf32> to vector<8x8xf32>
    %38 = arith.subf %34, %37 : vector<8x8xf32>
    %39 = math.exp %38 : vector<8x8xf32>
    %cst_22 = arith.constant dense<0.000000e+00> : vector<8xf32>
    %40 = vector.multi_reduction <add>, %39, %cst_22 [1] : vector<8x8xf32> to vector<8xf32>
    %41 = vector.shape_cast %40 : vector<8xf32> to vector<8x1xf32>
    %42 = vector.broadcast %41 : vector<8x1xf32> to vector<8x8xf32>
    %43 = arith.divf %39, %42 : vector<8x8xf32>
    %44 = arith.truncf %43 : vector<8x8xf32> to vector<8x8xbf16>
    %cst_23 = arith.constant dense<0.000000e+00> : vector<8x8xf32>
    %45 = tpu.matmul %44, %29, %cst_23 {dimension_numbers = #tpu.dot_dimension_numbers<[1], [0], [0], [1], [0, 0, 1, 1], [], []>} : vector<8x8xbf16>, vector<8x8xbf16>, vector<8x8xf32> -> vector<8x8xf32>
    %c0_24 = arith.constant 0 : index
    %c0_25 = arith.constant 0 : index
    %c16 = arith.constant 16 : index
    %46 = vector.load %arg2[%c0_24, %c0_25, %c16] : memref<1x8x96xbf16, #tpu.memory_space<vmem>>, vector<1x8x8xbf16>
    %47 = vector.shape_cast %46 : vector<1x8x8xbf16> to vector<8x8xbf16>
    %c0_26 = arith.constant 0 : index
    %c0_27 = arith.constant 0 : index
    %c48 = arith.constant 48 : index
    %48 = vector.load %arg3[%c0_26, %c0_27, %c48] : memref<1x8x96xbf16, #tpu.memory_space<vmem>>, vector<1x8x8xbf16>
    %49 = vector.shape_cast %48 : vector<1x8x8xbf16> to vector<8x8xbf16>
    %c0_28 = arith.constant 0 : index
    %c0_29 = arith.constant 0 : index
    %c80 = arith.constant 80 : index
    %50 = vector.load %arg3[%c0_28, %c0_29, %c80] : memref<1x8x96xbf16, #tpu.memory_space<vmem>>, vector<1x8x8xbf16>
    %51 = vector.shape_cast %50 : vector<1x8x8xbf16> to vector<8x8xbf16>
    %cst_30 = arith.constant dense<0.000000e+00> : vector<8x8xf32>
    %52 = tpu.matmul %47, %49, %cst_30 {dimension_numbers = #tpu.dot_dimension_numbers<[1], [1], [0], [0], [0, 0, 1, 0], [], []>} : vector<8x8xbf16>, vector<8x8xbf16>, vector<8x8xf32> -> vector<8x8xf32>
    %cst_31 = arith.constant 0.353553385 : f32
    %53 = vector.broadcast %cst_31 : f32 to vector<8x8xf32>
    %54 = arith.mulf %52, %53 : vector<8x8xf32>
    %55 = vector.broadcast %1 : vector<1x8xf32> to vector<8x8xf32>
    %56 = arith.addf %54, %55 : vector<8x8xf32>
    %cst_32 = arith.constant dense<0xFF800000> : vector<8xf32>
    %57 = vector.multi_reduction <maximumf>, %56, %cst_32 [1] : vector<8x8xf32> to vector<8xf32>
    %58 = vector.shape_cast %57 : vector<8xf32> to vector<8x1xf32>
    %59 = vector.broadcast %58 : vector<8x1xf32> to vector<8x8xf32>
    %60 = arith.subf %56, %59 : vector<8x8xf32>
    %61 = math.exp %60 : vector<8x8xf32>
    %cst_33 = arith.constant dense<0.000000e+00> : vector<8xf32>
    %62 = vector.multi_reduction <add>, %61, %cst_33 [1] : vector<8x8xf32> to vector<8xf32>
    %63 = vector.shape_cast %62 : vector<8xf32> to vector<8x1xf32>
    %64 = vector.broadcast %63 : vector<8x1xf32> to vector<8x8xf32>
    %65 = arith.divf %61, %64 : vector<8x8xf32>
    %66 = arith.truncf %65 : vector<8x8xf32> to vector<8x8xbf16>
    %cst_34 = arith.constant dense<0.000000e+00> : vector<8x8xf32>
    %67 = tpu.matmul %66, %51, %cst_34 {dimension_numbers = #tpu.dot_dimension_numbers<[1], [0], [0], [1], [0, 0, 1, 1], [], []>} : vector<8x8xbf16>, vector<8x8xbf16>, vector<8x8xf32> -> vector<8x8xf32>
    %c0_35 = arith.constant 0 : index
    %c0_36 = arith.constant 0 : index
    %c24 = arith.constant 24 : index
    %68 = vector.load %arg2[%c0_35, %c0_36, %c24] : memref<1x8x96xbf16, #tpu.memory_space<vmem>>, vector<1x8x8xbf16>
    %69 = vector.shape_cast %68 : vector<1x8x8xbf16> to vector<8x8xbf16>
    %c0_37 = arith.constant 0 : index
    %c0_38 = arith.constant 0 : index
    %c56 = arith.constant 56 : index
    %70 = vector.load %arg3[%c0_37, %c0_38, %c56] : memref<1x8x96xbf16, #tpu.memory_space<vmem>>, vector<1x8x8xbf16>
    %71 = vector.shape_cast %70 : vector<1x8x8xbf16> to vector<8x8xbf16>
    %c0_39 = arith.constant 0 : index
    %c0_40 = arith.constant 0 : index
    %c88 = arith.constant 88 : index
    %72 = vector.load %arg3[%c0_39, %c0_40, %c88] : memref<1x8x96xbf16, #tpu.memory_space<vmem>>, vector<1x8x8xbf16>
    %73 = vector.shape_cast %72 : vector<1x8x8xbf16> to vector<8x8xbf16>
    %cst_41 = arith.constant dense<0.000000e+00> : vector<8x8xf32>
    %74 = tpu.matmul %69, %71, %cst_41 {dimension_numbers = #tpu.dot_dimension_numbers<[1], [1], [0], [0], [0, 0, 1, 0], [], []>} : vector<8x8xbf16>, vector<8x8xbf16>, vector<8x8xf32> -> vector<8x8xf32>
    %cst_42 = arith.constant 0.353553385 : f32
    %75 = vector.broadcast %cst_42 : f32 to vector<8x8xf32>
    %76 = arith.mulf %74, %75 : vector<8x8xf32>
    %77 = vector.broadcast %1 : vector<1x8xf32> to vector<8x8xf32>
    %78 = arith.addf %76, %77 : vector<8x8xf32>
    %cst_43 = arith.constant dense<0xFF800000> : vector<8xf32>
    %79 = vector.multi_reduction <maximumf>, %78, %cst_43 [1] : vector<8x8xf32> to vector<8xf32>
    %80 = vector.shape_cast %79 : vector<8xf32> to vector<8x1xf32>
    %81 = vector.broadcast %80 : vector<8x1xf32> to vector<8x8xf32>
    %82 = arith.subf %78, %81 : vector<8x8xf32>
    %83 = math.exp %82 : vector<8x8xf32>
    %cst_44 = arith.constant dense<0.000000e+00> : vector<8xf32>
    %84 = vector.multi_reduction <add>, %83, %cst_44 [1] : vector<8x8xf32> to vector<8xf32>
    %85 = vector.shape_cast %84 : vector<8xf32> to vector<8x1xf32>
    %86 = vector.broadcast %85 : vector<8x1xf32> to vector<8x8xf32>
    %87 = arith.divf %83, %86 : vector<8x8xf32>
    %88 = arith.truncf %87 : vector<8x8xf32> to vector<8x8xbf16>
    %cst_45 = arith.constant dense<0.000000e+00> : vector<8x8xf32>
    %89 = tpu.matmul %88, %73, %cst_45 {dimension_numbers = #tpu.dot_dimension_numbers<[1], [0], [0], [1], [0, 0, 1, 1], [], []>} : vector<8x8xbf16>, vector<8x8xbf16>, vector<8x8xf32> -> vector<8x8xf32>
    %90 = tpu.concatenate %23, %45, %67, %89 in 1 : vector<8x8xf32>, vector<8x8xf32>, vector<8x8xf32>, vector<8x8xf32> -> vector<8x32xf32>
    %91 = arith.truncf %90 : vector<8x32xf32> to vector<8x32xbf16>
    %c0_46 = arith.constant 0 : index
    %c0_47 = arith.constant 0 : index
    %c0_48 = arith.constant 0 : index
    %92 = vector.load %arg5[%c0_46, %c0_47, %c0_48] : memref<1x8x32xbf16, #tpu.memory_space<vmem>>, vector<1x8x32xbf16>
    %93 = vector.shape_cast %92 : vector<1x8x32xbf16> to vector<8x32xbf16>
    %94 = vector.shape_cast %91 : vector<8x32xbf16> to vector<1x8x32xbf16>
    tpu.vector_store %arg5[%c0_46, %c0_47, %c0_48], %94 {strides = array<i32>} : memref<1x8x32xbf16, #tpu.memory_space<vmem>>, vector<1x8x32xbf16>,
    return
  }
  func.func @transform_0(%arg0: i32, %arg1: i32) -> (i32, i32, i32) {
    %c0_i32 = arith.constant 0 : i32
    %c0_i32_0 = arith.constant 0 : i32
    return %arg0, %arg1, %c0_i32 : i32, i32, i32
  }
  func.func @transform_1(%arg0: i32, %arg1: i32) -> (i32, i32, i32) {
    %c0_i32 = arith.constant 0 : i32
    %c0_i32_0 = arith.constant 0 : i32
    %c0_i32_1 = arith.constant 0 : i32
    return %arg0, %c0_i32, %c0_i32_0 : i32, i32, i32
  }
  func.func @transform_2(%arg0: i32, %arg1: i32) -> (i32, i32, i32) {
    %c0_i32 = arith.constant 0 : i32
    %c0_i32_0 = arith.constant 0 : i32
    %c0_i32_1 = arith.constant 0 : i32
    return %arg0, %c0_i32, %c0_i32_0 : i32, i32, i32
  }
  func.func @transform_3(%arg0: i32, %arg1: i32) -> (i32, i32, i32) {
    %c0_i32 = arith.constant 0 : i32
    %c0_i32_0 = arith.constant 0 : i32
    return %arg0, %arg1, %c0_i32 : i32, i32, i32
  }
}

module attributes {stable_mosaic.version = 11 : i64} {
  func.func @_dense_res_ln_kernel(%arg0: i32, %arg1: i32, %arg2: memref<16x32xbf16, #tpu.memory_space<vmem>>, %arg3: memref<32x32xbf16, #tpu.memory_space<vmem>>, %arg4: memref<1x32xf32, #tpu.memory_space<vmem>>, %arg5: memref<16x32xbf16, #tpu.memory_space<vmem>>, %arg6: memref<1x32xf32, #tpu.memory_space<vmem>>, %arg7: memref<1x32xf32, #tpu.memory_space<vmem>>, %arg8: memref<16x32xbf16, #tpu.memory_space<vmem>>, %arg9: memref<16x32xf32, #tpu.memory_space<vmem>>) attributes {dimension_semantics = [#tpu.dimension_semantics<parallel>, #tpu.dimension_semantics<arbitrary>], iteration_bounds = array<i64: 1, 1>, scalar_prefetch = 0 : i64, scratch_operands = 1 : i64, tpu.core_type = #tpu.core_type<tc>, window_params = [{transform_indices = @transform_0, window_bounds = array<i64: 16, 32>}, {transform_indices = @transform_1, window_bounds = array<i64: 32, 32>}, {pipeline_mode = #tpu.pipeline_mode<synchronous>, transform_indices = @transform_2, window_bounds = array<i64: 1, 32>}, {transform_indices = @transform_3, window_bounds = array<i64: 16, 32>}, {pipeline_mode = #tpu.pipeline_mode<synchronous>, transform_indices = @transform_4, window_bounds = array<i64: 1, 32>}, {pipeline_mode = #tpu.pipeline_mode<synchronous>, transform_indices = @transform_5, window_bounds = array<i64: 1, 32>}, {transform_indices = @transform_6, window_bounds = array<i64: 16, 32>}]} {
    %c0_i32 = arith.constant 0 : i32
    %0 = arith.cmpi eq, %arg1, %c0_i32 : i32
    %1 = arith.extui %0 : i1 to i32
    %c0_i32_0 = arith.constant 0 : i32
    %2 = arith.cmpi ne, %1, %c0_i32_0 : i32
    scf.if %2 {
      %cst_10 = arith.constant 0.000000e+00 : f32
      %12 = vector.broadcast %cst_10 : f32 to vector<16x32xf32>
      %c0_11 = arith.constant 0 : index
      %c0_12 = arith.constant 0 : index
      %13 = vector.load %arg9[%c0_11, %c0_12] : memref<16x32xf32, #tpu.memory_space<vmem>>, vector<16x32xf32>
      tpu.vector_store %arg9[%c0_11, %c0_12], %12 {strides = array<i32>} : memref<16x32xf32, #tpu.memory_space<vmem>>, vector<16x32xf32>,
    } else {
    }
    %c0 = arith.constant 0 : index
    %c0_1 = arith.constant 0 : index
    %3 = vector.load %arg9[%c0, %c0_1] : memref<16x32xf32, #tpu.memory_space<vmem>>, vector<16x32xf32>
    %c0_2 = arith.constant 0 : index
    %c0_3 = arith.constant 0 : index
    %4 = vector.load %arg2[%c0_2, %c0_3] : memref<16x32xbf16, #tpu.memory_space<vmem>>, vector<16x32xbf16>
    %c0_4 = arith.constant 0 : index
    %c0_5 = arith.constant 0 : index
    %5 = vector.load %arg3[%c0_4, %c0_5] : memref<32x32xbf16, #tpu.memory_space<vmem>>, vector<32x32xbf16>
    %cst = arith.constant dense<0.000000e+00> : vector<16x32xf32>
    %6 = tpu.matmul %4, %5, %cst {dimension_numbers = #tpu.dot_dimension_numbers<[1], [0], [0], [1], [0, 0, 1, 1], [], []>} : vector<16x32xbf16>, vector<32x32xbf16>, vector<16x32xf32> -> vector<16x32xf32>
    %7 = arith.addf %3, %6 : vector<16x32xf32>
    %c0_6 = arith.constant 0 : index
    %c0_7 = arith.constant 0 : index
    %8 = vector.load %arg9[%c0_6, %c0_7] : memref<16x32xf32, #tpu.memory_space<vmem>>, vector<16x32xf32>
    tpu.vector_store %arg9[%c0_6, %c0_7], %7 {strides = array<i32>} : memref<16x32xf32, #tpu.memory_space<vmem>>, vector<16x32xf32>,
    %c0_i32_8 = arith.constant 0 : i32
    %9 = arith.cmpi eq, %arg1, %c0_i32_8 : i32
    %10 = arith.extui %9 : i1 to i32
    %c0_i32_9 = arith.constant 0 : i32
    %11 = arith.cmpi ne, %10, %c0_i32_9 : i32
    scf.if %11 {
      %c0_10 = arith.constant 0 : index
      %c0_11 = arith.constant 0 : index
      %12 = vector.load %arg9[%c0_10, %c0_11] : memref<16x32xf32, #tpu.memory_space<vmem>>, vector<16x32xf32>
      %c0_12 = arith.constant 0 : index
      %c0_13 = arith.constant 0 : index
      %13 = vector.load %arg4[%c0_12, %c0_13] : memref<1x32xf32, #tpu.memory_space<vmem>>, vector<1x32xf32>
      %14 = vector.broadcast %13 : vector<1x32xf32> to vector<16x32xf32>
      %15 = arith.addf %12, %14 : vector<16x32xf32>
      %c0_14 = arith.constant 0 : index
      %c0_15 = arith.constant 0 : index
      %16 = vector.load %arg5[%c0_14, %c0_15] : memref<16x32xbf16, #tpu.memory_space<vmem>>, vector<16x32xbf16>
      %17 = arith.extf %16 : vector<16x32xbf16> to vector<16x32xf32>
      %18 = arith.addf %15, %17 : vector<16x32xf32>
      %cst_16 = arith.constant dense<0.000000e+00> : vector<16xf32>
      %19 = vector.multi_reduction <add>, %18, %cst_16 [1] : vector<16x32xf32> to vector<16xf32>
      %20 = vector.shape_cast %19 : vector<16xf32> to vector<16x1xf32>
      %cst_17 = arith.constant 3.200000e+01 : f32
      %21 = vector.broadcast %cst_17 : f32 to vector<16x1xf32>
      %22 = arith.divf %20, %21 : vector<16x1xf32>
      %23 = vector.broadcast %22 : vector<16x1xf32> to vector<16x32xf32>
      %24 = arith.subf %18, %23 : vector<16x32xf32>
      %25 = arith.mulf %24, %24 : vector<16x32xf32>
      %cst_18 = arith.constant dense<0.000000e+00> : vector<16xf32>
      %26 = vector.multi_reduction <add>, %25, %cst_18 [1] : vector<16x32xf32> to vector<16xf32>
      %27 = vector.shape_cast %26 : vector<16xf32> to vector<16x1xf32>
      %cst_19 = arith.constant 3.200000e+01 : f32
      %28 = vector.broadcast %cst_19 : f32 to vector<16x1xf32>
      %29 = arith.divf %27, %28 : vector<16x1xf32>
      %cst_20 = arith.constant 9.99999996E-13 : f32
      %30 = vector.broadcast %cst_20 : f32 to vector<16x1xf32>
      %31 = arith.addf %29, %30 : vector<16x1xf32>
      %32 = math.rsqrt %31 : vector<16x1xf32>
      %33 = vector.broadcast %32 : vector<16x1xf32> to vector<16x32xf32>
      %34 = arith.mulf %24, %33 : vector<16x32xf32>
      %c0_21 = arith.constant 0 : index
      %c0_22 = arith.constant 0 : index
      %35 = vector.load %arg6[%c0_21, %c0_22] : memref<1x32xf32, #tpu.memory_space<vmem>>, vector<1x32xf32>
      %36 = vector.broadcast %35 : vector<1x32xf32> to vector<16x32xf32>
      %37 = arith.mulf %34, %36 : vector<16x32xf32>
      %c0_23 = arith.constant 0 : index
      %c0_24 = arith.constant 0 : index
      %38 = vector.load %arg7[%c0_23, %c0_24] : memref<1x32xf32, #tpu.memory_space<vmem>>, vector<1x32xf32>
      %39 = vector.broadcast %38 : vector<1x32xf32> to vector<16x32xf32>
      %40 = arith.addf %37, %39 : vector<16x32xf32>
      %41 = arith.truncf %40 : vector<16x32xf32> to vector<16x32xbf16>
      %c0_25 = arith.constant 0 : index
      %c0_26 = arith.constant 0 : index
      %42 = vector.load %arg8[%c0_25, %c0_26] : memref<16x32xbf16, #tpu.memory_space<vmem>>, vector<16x32xbf16>
      tpu.vector_store %arg8[%c0_25, %c0_26], %41 {strides = array<i32>} : memref<16x32xbf16, #tpu.memory_space<vmem>>, vector<16x32xbf16>,
    } else {
    }
    return
  }
  func.func @transform_0(%arg0: i32, %arg1: i32) -> (i32, i32) {
    %c0_i32 = arith.constant 0 : i32
    return %arg0, %arg1 : i32, i32
  }
  func.func @transform_1(%arg0: i32, %arg1: i32) -> (i32, i32) {
    %c0_i32 = arith.constant 0 : i32
    %c0_i32_0 = arith.constant 0 : i32
    return %arg1, %c0_i32 : i32, i32
  }
  func.func @transform_2(%arg0: i32, %arg1: i32) -> (i32, i32) {
    %c0_i32 = arith.constant 0 : i32
    %c0_i32_0 = arith.constant 0 : i32
    %c0_i32_1 = arith.constant 0 : i32
    return %c0_i32, %c0_i32_0 : i32, i32
  }
  func.func @transform_3(%arg0: i32, %arg1: i32) -> (i32, i32) {
    %c0_i32 = arith.constant 0 : i32
    %c0_i32_0 = arith.constant 0 : i32
    return %arg0, %c0_i32 : i32, i32
  }
  func.func @transform_4(%arg0: i32, %arg1: i32) -> (i32, i32) {
    %c0_i32 = arith.constant 0 : i32
    %c0_i32_0 = arith.constant 0 : i32
    %c0_i32_1 = arith.constant 0 : i32
    return %c0_i32, %c0_i32_0 : i32, i32
  }
  func.func @transform_5(%arg0: i32, %arg1: i32) -> (i32, i32) {
    %c0_i32 = arith.constant 0 : i32
    %c0_i32_0 = arith.constant 0 : i32
    %c0_i32_1 = arith.constant 0 : i32
    return %c0_i32, %c0_i32_0 : i32, i32
  }
  func.func @transform_6(%arg0: i32, %arg1: i32) -> (i32, i32) {
    %c0_i32 = arith.constant 0 : i32
    %c0_i32_0 = arith.constant 0 : i32
    return %arg0, %c0_i32 : i32, i32
  }
}

module attributes {stable_mosaic.version = 11 : i64} {
  func.func @_dense_res_ln_kernel(%arg0: i32, %arg1: i32, %arg2: memref<16x64xbf16, #tpu.memory_space<vmem>>, %arg3: memref<64x32xbf16, #tpu.memory_space<vmem>>, %arg4: memref<1x32xf32, #tpu.memory_space<vmem>>, %arg5: memref<16x32xbf16, #tpu.memory_space<vmem>>, %arg6: memref<1x32xf32, #tpu.memory_space<vmem>>, %arg7: memref<1x32xf32, #tpu.memory_space<vmem>>, %arg8: memref<16x32xbf16, #tpu.memory_space<vmem>>, %arg9: memref<16x32xf32, #tpu.memory_space<vmem>>) attributes {dimension_semantics = [#tpu.dimension_semantics<parallel>, #tpu.dimension_semantics<arbitrary>], iteration_bounds = array<i64: 1, 1>, scalar_prefetch = 0 : i64, scratch_operands = 1 : i64, tpu.core_type = #tpu.core_type<tc>, window_params = [{transform_indices = @transform_0, window_bounds = array<i64: 16, 64>}, {transform_indices = @transform_1, window_bounds = array<i64: 64, 32>}, {pipeline_mode = #tpu.pipeline_mode<synchronous>, transform_indices = @transform_2, window_bounds = array<i64: 1, 32>}, {transform_indices = @transform_3, window_bounds = array<i64: 16, 32>}, {pipeline_mode = #tpu.pipeline_mode<synchronous>, transform_indices = @transform_4, window_bounds = array<i64: 1, 32>}, {pipeline_mode = #tpu.pipeline_mode<synchronous>, transform_indices = @transform_5, window_bounds = array<i64: 1, 32>}, {transform_indices = @transform_6, window_bounds = array<i64: 16, 32>}]} {
    %c0_i32 = arith.constant 0 : i32
    %0 = arith.cmpi eq, %arg1, %c0_i32 : i32
    %1 = arith.extui %0 : i1 to i32
    %c0_i32_0 = arith.constant 0 : i32
    %2 = arith.cmpi ne, %1, %c0_i32_0 : i32
    scf.if %2 {
      %cst_10 = arith.constant 0.000000e+00 : f32
      %12 = vector.broadcast %cst_10 : f32 to vector<16x32xf32>
      %c0_11 = arith.constant 0 : index
      %c0_12 = arith.constant 0 : index
      %13 = vector.load %arg9[%c0_11, %c0_12] : memref<16x32xf32, #tpu.memory_space<vmem>>, vector<16x32xf32>
      tpu.vector_store %arg9[%c0_11, %c0_12], %12 {strides = array<i32>} : memref<16x32xf32, #tpu.memory_space<vmem>>, vector<16x32xf32>,
    } else {
    }
    %c0 = arith.constant 0 : index
    %c0_1 = arith.constant 0 : index
    %3 = vector.load %arg9[%c0, %c0_1] : memref<16x32xf32, #tpu.memory_space<vmem>>, vector<16x32xf32>
    %c0_2 = arith.constant 0 : index
    %c0_3 = arith.constant 0 : index
    %4 = vector.load %arg2[%c0_2, %c0_3] : memref<16x64xbf16, #tpu.memory_space<vmem>>, vector<16x64xbf16>
    %c0_4 = arith.constant 0 : index
    %c0_5 = arith.constant 0 : index
    %5 = vector.load %arg3[%c0_4, %c0_5] : memref<64x32xbf16, #tpu.memory_space<vmem>>, vector<64x32xbf16>
    %cst = arith.constant dense<0.000000e+00> : vector<16x32xf32>
    %6 = tpu.matmul %4, %5, %cst {dimension_numbers = #tpu.dot_dimension_numbers<[1], [0], [0], [1], [0, 0, 1, 1], [], []>} : vector<16x64xbf16>, vector<64x32xbf16>, vector<16x32xf32> -> vector<16x32xf32>
    %7 = arith.addf %3, %6 : vector<16x32xf32>
    %c0_6 = arith.constant 0 : index
    %c0_7 = arith.constant 0 : index
    %8 = vector.load %arg9[%c0_6, %c0_7] : memref<16x32xf32, #tpu.memory_space<vmem>>, vector<16x32xf32>
    tpu.vector_store %arg9[%c0_6, %c0_7], %7 {strides = array<i32>} : memref<16x32xf32, #tpu.memory_space<vmem>>, vector<16x32xf32>,
    %c0_i32_8 = arith.constant 0 : i32
    %9 = arith.cmpi eq, %arg1, %c0_i32_8 : i32
    %10 = arith.extui %9 : i1 to i32
    %c0_i32_9 = arith.constant 0 : i32
    %11 = arith.cmpi ne, %10, %c0_i32_9 : i32
    scf.if %11 {
      %c0_10 = arith.constant 0 : index
      %c0_11 = arith.constant 0 : index
      %12 = vector.load %arg9[%c0_10, %c0_11] : memref<16x32xf32, #tpu.memory_space<vmem>>, vector<16x32xf32>
      %c0_12 = arith.constant 0 : index
      %c0_13 = arith.constant 0 : index
      %13 = vector.load %arg4[%c0_12, %c0_13] : memref<1x32xf32, #tpu.memory_space<vmem>>, vector<1x32xf32>
      %14 = vector.broadcast %13 : vector<1x32xf32> to vector<16x32xf32>
      %15 = arith.addf %12, %14 : vector<16x32xf32>
      %c0_14 = arith.constant 0 : index
      %c0_15 = arith.constant 0 : index
      %16 = vector.load %arg5[%c0_14, %c0_15] : memref<16x32xbf16, #tpu.memory_space<vmem>>, vector<16x32xbf16>
      %17 = arith.extf %16 : vector<16x32xbf16> to vector<16x32xf32>
      %18 = arith.addf %15, %17 : vector<16x32xf32>
      %cst_16 = arith.constant dense<0.000000e+00> : vector<16xf32>
      %19 = vector.multi_reduction <add>, %18, %cst_16 [1] : vector<16x32xf32> to vector<16xf32>
      %20 = vector.shape_cast %19 : vector<16xf32> to vector<16x1xf32>
      %cst_17 = arith.constant 3.200000e+01 : f32
      %21 = vector.broadcast %cst_17 : f32 to vector<16x1xf32>
      %22 = arith.divf %20, %21 : vector<16x1xf32>
      %23 = vector.broadcast %22 : vector<16x1xf32> to vector<16x32xf32>
      %24 = arith.subf %18, %23 : vector<16x32xf32>
      %25 = arith.mulf %24, %24 : vector<16x32xf32>
      %cst_18 = arith.constant dense<0.000000e+00> : vector<16xf32>
      %26 = vector.multi_reduction <add>, %25, %cst_18 [1] : vector<16x32xf32> to vector<16xf32>
      %27 = vector.shape_cast %26 : vector<16xf32> to vector<16x1xf32>
      %cst_19 = arith.constant 3.200000e+01 : f32
      %28 = vector.broadcast %cst_19 : f32 to vector<16x1xf32>
      %29 = arith.divf %27, %28 : vector<16x1xf32>
      %cst_20 = arith.constant 9.99999996E-13 : f32
      %30 = vector.broadcast %cst_20 : f32 to vector<16x1xf32>
      %31 = arith.addf %29, %30 : vector<16x1xf32>
      %32 = math.rsqrt %31 : vector<16x1xf32>
      %33 = vector.broadcast %32 : vector<16x1xf32> to vector<16x32xf32>
      %34 = arith.mulf %24, %33 : vector<16x32xf32>
      %c0_21 = arith.constant 0 : index
      %c0_22 = arith.constant 0 : index
      %35 = vector.load %arg6[%c0_21, %c0_22] : memref<1x32xf32, #tpu.memory_space<vmem>>, vector<1x32xf32>
      %36 = vector.broadcast %35 : vector<1x32xf32> to vector<16x32xf32>
      %37 = arith.mulf %34, %36 : vector<16x32xf32>
      %c0_23 = arith.constant 0 : index
      %c0_24 = arith.constant 0 : index
      %38 = vector.load %arg7[%c0_23, %c0_24] : memref<1x32xf32, #tpu.memory_space<vmem>>, vector<1x32xf32>
      %39 = vector.broadcast %38 : vector<1x32xf32> to vector<16x32xf32>
      %40 = arith.addf %37, %39 : vector<16x32xf32>
      %41 = arith.truncf %40 : vector<16x32xf32> to vector<16x32xbf16>
      %c0_25 = arith.constant 0 : index
      %c0_26 = arith.constant 0 : index
      %42 = vector.load %arg8[%c0_25, %c0_26] : memref<16x32xbf16, #tpu.memory_space<vmem>>, vector<16x32xbf16>
      tpu.vector_store %arg8[%c0_25, %c0_26], %41 {strides = array<i32>} : memref<16x32xbf16, #tpu.memory_space<vmem>>, vector<16x32xbf16>,
    } else {
    }
    return
  }
  func.func @transform_0(%arg0: i32, %arg1: i32) -> (i32, i32) {
    %c0_i32 = arith.constant 0 : i32
    return %arg0, %arg1 : i32, i32
  }
  func.func @transform_1(%arg0: i32, %arg1: i32) -> (i32, i32) {
    %c0_i32 = arith.constant 0 : i32
    %c0_i32_0 = arith.constant 0 : i32
    return %arg1, %c0_i32 : i32, i32
  }
  func.func @transform_2(%arg0: i32, %arg1: i32) -> (i32, i32) {
    %c0_i32 = arith.constant 0 : i32
    %c0_i32_0 = arith.constant 0 : i32
    %c0_i32_1 = arith.constant 0 : i32
    return %c0_i32, %c0_i32_0 : i32, i32
  }
  func.func @transform_3(%arg0: i32, %arg1: i32) -> (i32, i32) {
    %c0_i32 = arith.constant 0 : i32
    %c0_i32_0 = arith.constant 0 : i32
    return %arg0, %c0_i32 : i32, i32
  }
  func.func @transform_4(%arg0: i32, %arg1: i32) -> (i32, i32) {
    %c0_i32 = arith.constant 0 : i32
    %c0_i32_0 = arith.constant 0 : i32
    %c0_i32_1 = arith.constant 0 : i32
    return %c0_i32, %c0_i32_0 : i32, i32
  }
  func.func @transform_5(%arg0: i32, %arg1: i32) -> (i32, i32) {
    %c0_i32 = arith.constant 0 : i32
    %c0_i32_0 = arith.constant 0 : i32
    %c0_i32_1 = arith.constant 0 : i32
    return %c0_i32, %c0_i32_0 : i32, i32
  }
  func.func @transform_6(%arg0: i32, %arg1: i32) -> (i32, i32) {
    %c0_i32 = arith.constant 0 : i32
    %c0_i32_0 = arith.constant 0 : i32
    return %arg0, %c0_i32 : i32, i32
  }
}

module attributes {stable_mosaic.version = 11 : i64} {
  func.func @_attention_kernel(%arg0: i32, %arg1: i32, %arg2: memref<1x8x96xbf16, #tpu.memory_space<vmem>>, %arg3: memref<1x8x96xbf16, #tpu.memory_space<vmem>>, %arg4: memref<1x1x8xf32, #tpu.memory_space<vmem>>, %arg5: memref<1x8x32xbf16, #tpu.memory_space<vmem>>, %arg6: memref<1x4x8x8xf32, #tpu.memory_space<vmem>>) attributes {dimension_semantics = [#tpu.dimension_semantics<parallel>, #tpu.dimension_semantics<parallel>], iteration_bounds = array<i64: 2, 1>, scalar_prefetch = 0 : i64, scratch_operands = 0 : i64, tpu.core_type = #tpu.core_type<tc>, window_params = [{transform_indices = @transform_0, window_bounds = array<i64: 1, 8, 96>}, {transform_indices = @transform_1, window_bounds = array<i64: 1, 8, 96>}, {transform_indices = @transform_2, window_bounds = array<i64: 1, 1, 8>}, {transform_indices = @transform_3, window_bounds = array<i64: 1, 8, 32>}, {transform_indices = @transform_4, window_bounds = array<i64: 1, 4, 8, 8>}]} {
    %c0 = arith.constant 0 : index
    %c0_0 = arith.constant 0 : index
    %c0_1 = arith.constant 0 : index
    %0 = vector.load %arg4[%c0, %c0_0, %c0_1] : memref<1x1x8xf32, #tpu.memory_space<vmem>>, vector<1x1x8xf32>
    %1 = vector.shape_cast %0 : vector<1x1x8xf32> to vector<1x8xf32>
    %c0_2 = arith.constant 0 : index
    %c0_3 = arith.constant 0 : index
    %c0_4 = arith.constant 0 : index
    %2 = vector.load %arg2[%c0_2, %c0_3, %c0_4] : memref<1x8x96xbf16, #tpu.memory_space<vmem>>, vector<1x8x8xbf16>
    %3 = vector.shape_cast %2 : vector<1x8x8xbf16> to vector<8x8xbf16>
    %c0_5 = arith.constant 0 : index
    %c0_6 = arith.constant 0 : index
    %c32 = arith.constant 32 : index
    %4 = vector.load %arg3[%c0_5, %c0_6, %c32] : memref<1x8x96xbf16, #tpu.memory_space<vmem>>, vector<1x8x8xbf16>
    %5 = vector.shape_cast %4 : vector<1x8x8xbf16> to vector<8x8xbf16>
    %c0_7 = arith.constant 0 : index
    %c0_8 = arith.constant 0 : index
    %c64 = arith.constant 64 : index
    %6 = vector.load %arg3[%c0_7, %c0_8, %c64] : memref<1x8x96xbf16, #tpu.memory_space<vmem>>, vector<1x8x8xbf16>
    %7 = vector.shape_cast %6 : vector<1x8x8xbf16> to vector<8x8xbf16>
    %cst = arith.constant dense<0.000000e+00> : vector<8x8xf32>
    %8 = tpu.matmul %3, %5, %cst {dimension_numbers = #tpu.dot_dimension_numbers<[1], [1], [0], [0], [0, 0, 1, 0], [], []>} : vector<8x8xbf16>, vector<8x8xbf16>, vector<8x8xf32> -> vector<8x8xf32>
    %cst_9 = arith.constant 0.353553385 : f32
    %9 = vector.broadcast %cst_9 : f32 to vector<8x8xf32>
    %10 = arith.mulf %8, %9 : vector<8x8xf32>
    %11 = vector.broadcast %1 : vector<1x8xf32> to vector<8x8xf32>
    %12 = arith.addf %10, %11 : vector<8x8xf32>
    %cst_10 = arith.constant dense<0xFF800000> : vector<8xf32>
    %13 = vector.multi_reduction <maximumf>, %12, %cst_10 [1] : vector<8x8xf32> to vector<8xf32>
    %14 = vector.shape_cast %13 : vector<8xf32> to vector<8x1xf32>
    %15 = vector.broadcast %14 : vector<8x1xf32> to vector<8x8xf32>
    %16 = arith.subf %12, %15 : vector<8x8xf32>
    %17 = math.exp %16 : vector<8x8xf32>
    %cst_11 = arith.constant dense<0.000000e+00> : vector<8xf32>
    %18 = vector.multi_reduction <add>, %17, %cst_11 [1] : vector<8x8xf32> to vector<8xf32>
    %19 = vector.shape_cast %18 : vector<8xf32> to vector<8x1xf32>
    %20 = vector.broadcast %19 : vector<8x1xf32> to vector<8x8xf32>
    %21 = arith.divf %17, %20 : vector<8x8xf32>
    %22 = arith.truncf %21 : vector<8x8xf32> to vector<8x8xbf16>
    %cst_12 = arith.constant dense<0.000000e+00> : vector<8x8xf32>
    %23 = tpu.matmul %22, %7, %cst_12 {dimension_numbers = #tpu.dot_dimension_numbers<[1], [0], [0], [1], [0, 0, 1, 1], [], []>} : vector<8x8xbf16>, vector<8x8xbf16>, vector<8x8xf32> -> vector<8x8xf32>
    %c0_13 = arith.constant 0 : index
    %c0_14 = arith.constant 0 : index
    %c0_15 = arith.constant 0 : index
    %c0_16 = arith.constant 0 : index
    %24 = vector.load %arg6[%c0_13, %c0_14, %c0_15, %c0_16] : memref<1x4x8x8xf32, #tpu.memory_space<vmem>>, vector<1x1x8x8xf32>
    %25 = vector.shape_cast %24 : vector<1x1x8x8xf32> to vector<8x8xf32>
    %26 = vector.shape_cast %21 : vector<8x8xf32> to vector<1x1x8x8xf32>
    tpu.vector_store %arg6[%c0_13, %c0_14, %c0_15, %c0_16], %26 {strides = array<i32>} : memref<1x4x8x8xf32, #tpu.memory_space<vmem>>, vector<1x1x8x8xf32>,
    %c0_17 = arith.constant 0 : index
    %c0_18 = arith.constant 0 : index
    %c8 = arith.constant 8 : index
    %27 = vector.load %arg2[%c0_17, %c0_18, %c8] : memref<1x8x96xbf16, #tpu.memory_space<vmem>>, vector<1x8x8xbf16>
    %28 = vector.shape_cast %27 : vector<1x8x8xbf16> to vector<8x8xbf16>
    %c0_19 = arith.constant 0 : index
    %c0_20 = arith.constant 0 : index
    %c40 = arith.constant 40 : index
    %29 = vector.load %arg3[%c0_19, %c0_20, %c40] : memref<1x8x96xbf16, #tpu.memory_space<vmem>>, vector<1x8x8xbf16>
    %30 = vector.shape_cast %29 : vector<1x8x8xbf16> to vector<8x8xbf16>
    %c0_21 = arith.constant 0 : index
    %c0_22 = arith.constant 0 : index
    %c72 = arith.constant 72 : index
    %31 = vector.load %arg3[%c0_21, %c0_22, %c72] : memref<1x8x96xbf16, #tpu.memory_space<vmem>>, vector<1x8x8xbf16>
    %32 = vector.shape_cast %31 : vector<1x8x8xbf16> to vector<8x8xbf16>
    %cst_23 = arith.constant dense<0.000000e+00> : vector<8x8xf32>
    %33 = tpu.matmul %28, %30, %cst_23 {dimension_numbers = #tpu.dot_dimension_numbers<[1], [1], [0], [0], [0, 0, 1, 0], [], []>} : vector<8x8xbf16>, vector<8x8xbf16>, vector<8x8xf32> -> vector<8x8xf32>
    %cst_24 = arith.constant 0.353553385 : f32
    %34 = vector.broadcast %cst_24 : f32 to vector<8x8xf32>
    %35 = arith.mulf %33, %34 : vector<8x8xf32>
    %36 = vector.broadcast %1 : vector<1x8xf32> to vector<8x8xf32>
    %37 = arith.addf %35, %36 : vector<8x8xf32>
    %cst_25 = arith.constant dense<0xFF800000> : vector<8xf32>
    %38 = vector.multi_reduction <maximumf>, %37, %cst_25 [1] : vector<8x8xf32> to vector<8xf32>
    %39 = vector.shape_cast %38 : vector<8xf32> to vector<8x1xf32>
    %40 = vector.broadcast %39 : vector<8x1xf32> to vector<8x8xf32>
    %41 = arith.subf %37, %40 : vector<8x8xf32>
    %42 = math.exp %41 : vector<8x8xf32>
    %cst_26 = arith.constant dense<0.000000e+00> : vector<8xf32>
    %43 = vector.multi_reduction <add>, %42, %cst_26 [1] : vector<8x8xf32> to vector<8xf32>
    %44 = vector.shape_cast %43 : vector<8xf32> to vector<8x1xf32>
    %45 = vector.broadcast %44 : vector<8x1xf32> to vector<8x8xf32>
    %46 = arith.divf %42, %45 : vector<8x8xf32>
    %47 = arith.truncf %46 : vector<8x8xf32> to vector<8x8xbf16>
    %cst_27 = arith.constant dense<0.000000e+00> : vector<8x8xf32>
    %48 = tpu.matmul %47, %32, %cst_27 {dimension_numbers = #tpu.dot_dimension_numbers<[1], [0], [0], [1], [0, 0, 1, 1], [], []>} : vector<8x8xbf16>, vector<8x8xbf16>, vector<8x8xf32> -> vector<8x8xf32>
    %c0_28 = arith.constant 0 : index
    %c1 = arith.constant 1 : index
    %c0_29 = arith.constant 0 : index
    %c0_30 = arith.constant 0 : index
    %49 = vector.load %arg6[%c0_28, %c1, %c0_29, %c0_30] : memref<1x4x8x8xf32, #tpu.memory_space<vmem>>, vector<1x1x8x8xf32>
    %50 = vector.shape_cast %49 : vector<1x1x8x8xf32> to vector<8x8xf32>
    %51 = vector.shape_cast %46 : vector<8x8xf32> to vector<1x1x8x8xf32>
    tpu.vector_store %arg6[%c0_28, %c1, %c0_29, %c0_30], %51 {strides = array<i32>} : memref<1x4x8x8xf32, #tpu.memory_space<vmem>>, vector<1x1x8x8xf32>,
    %c0_31 = arith.constant 0 : index
    %c0_32 = arith.constant 0 : index
    %c16 = arith.constant 16 : index
    %52 = vector.load %arg2[%c0_31, %c0_32, %c16] : memref<1x8x96xbf16, #tpu.memory_space<vmem>>, vector<1x8x8xbf16>
    %53 = vector.shape_cast %52 : vector<1x8x8xbf16> to vector<8x8xbf16>
    %c0_33 = arith.constant 0 : index
    %c0_34 = arith.constant 0 : index
    %c48 = arith.constant 48 : index
    %54 = vector.load %arg3[%c0_33, %c0_34, %c48] : memref<1x8x96xbf16, #tpu.memory_space<vmem>>, vector<1x8x8xbf16>
    %55 = vector.shape_cast %54 : vector<1x8x8xbf16> to vector<8x8xbf16>
    %c0_35 = arith.constant 0 : index
    %c0_36 = arith.constant 0 : index
    %c80 = arith.constant 80 : index
    %56 = vector.load %arg3[%c0_35, %c0_36, %c80] : memref<1x8x96xbf16, #tpu.memory_space<vmem>>, vector<1x8x8xbf16>
    %57 = vector.shape_cast %56 : vector<1x8x8xbf16> to vector<8x8xbf16>
    %cst_37 = arith.constant dense<0.000000e+00> : vector<8x8xf32>
    %58 = tpu.matmul %53, %55, %cst_37 {dimension_numbers = #tpu.dot_dimension_numbers<[1], [1], [0], [0], [0, 0, 1, 0], [], []>} : vector<8x8xbf16>, vector<8x8xbf16>, vector<8x8xf32> -> vector<8x8xf32>
    %cst_38 = arith.constant 0.353553385 : f32
    %59 = vector.broadcast %cst_38 : f32 to vector<8x8xf32>
    %60 = arith.mulf %58, %59 : vector<8x8xf32>
    %61 = vector.broadcast %1 : vector<1x8xf32> to vector<8x8xf32>
    %62 = arith.addf %60, %61 : vector<8x8xf32>
    %cst_39 = arith.constant dense<0xFF800000> : vector<8xf32>
    %63 = vector.multi_reduction <maximumf>, %62, %cst_39 [1] : vector<8x8xf32> to vector<8xf32>
    %64 = vector.shape_cast %63 : vector<8xf32> to vector<8x1xf32>
    %65 = vector.broadcast %64 : vector<8x1xf32> to vector<8x8xf32>
    %66 = arith.subf %62, %65 : vector<8x8xf32>
    %67 = math.exp %66 : vector<8x8xf32>
    %cst_40 = arith.constant dense<0.000000e+00> : vector<8xf32>
    %68 = vector.multi_reduction <add>, %67, %cst_40 [1] : vector<8x8xf32> to vector<8xf32>
    %69 = vector.shape_cast %68 : vector<8xf32> to vector<8x1xf32>
    %70 = vector.broadcast %69 : vector<8x1xf32> to vector<8x8xf32>
    %71 = arith.divf %67, %70 : vector<8x8xf32>
    %72 = arith.truncf %71 : vector<8x8xf32> to vector<8x8xbf16>
    %cst_41 = arith.constant dense<0.000000e+00> : vector<8x8xf32>
    %73 = tpu.matmul %72, %57, %cst_41 {dimension_numbers = #tpu.dot_dimension_numbers<[1], [0], [0], [1], [0, 0, 1, 1], [], []>} : vector<8x8xbf16>, vector<8x8xbf16>, vector<8x8xf32> -> vector<8x8xf32>
    %c0_42 = arith.constant 0 : index
    %c2 = arith.constant 2 : index
    %c0_43 = arith.constant 0 : index
    %c0_44 = arith.constant 0 : index
    %74 = vector.load %arg6[%c0_42, %c2, %c0_43, %c0_44] : memref<1x4x8x8xf32, #tpu.memory_space<vmem>>, vector<1x1x8x8xf32>
    %75 = vector.shape_cast %74 : vector<1x1x8x8xf32> to vector<8x8xf32>
    %76 = vector.shape_cast %71 : vector<8x8xf32> to vector<1x1x8x8xf32>
    tpu.vector_store %arg6[%c0_42, %c2, %c0_43, %c0_44], %76 {strides = array<i32>} : memref<1x4x8x8xf32, #tpu.memory_space<vmem>>, vector<1x1x8x8xf32>,
    %c0_45 = arith.constant 0 : index
    %c0_46 = arith.constant 0 : index
    %c24 = arith.constant 24 : index
    %77 = vector.load %arg2[%c0_45, %c0_46, %c24] : memref<1x8x96xbf16, #tpu.memory_space<vmem>>, vector<1x8x8xbf16>
    %78 = vector.shape_cast %77 : vector<1x8x8xbf16> to vector<8x8xbf16>
    %c0_47 = arith.constant 0 : index
    %c0_48 = arith.constant 0 : index
    %c56 = arith.constant 56 : index
    %79 = vector.load %arg3[%c0_47, %c0_48, %c56] : memref<1x8x96xbf16, #tpu.memory_space<vmem>>, vector<1x8x8xbf16>
    %80 = vector.shape_cast %79 : vector<1x8x8xbf16> to vector<8x8xbf16>
    %c0_49 = arith.constant 0 : index
    %c0_50 = arith.constant 0 : index
    %c88 = arith.constant 88 : index
    %81 = vector.load %arg3[%c0_49, %c0_50, %c88] : memref<1x8x96xbf16, #tpu.memory_space<vmem>>, vector<1x8x8xbf16>
    %82 = vector.shape_cast %81 : vector<1x8x8xbf16> to vector<8x8xbf16>
    %cst_51 = arith.constant dense<0.000000e+00> : vector<8x8xf32>
    %83 = tpu.matmul %78, %80, %cst_51 {dimension_numbers = #tpu.dot_dimension_numbers<[1], [1], [0], [0], [0, 0, 1, 0], [], []>} : vector<8x8xbf16>, vector<8x8xbf16>, vector<8x8xf32> -> vector<8x8xf32>
    %cst_52 = arith.constant 0.353553385 : f32
    %84 = vector.broadcast %cst_52 : f32 to vector<8x8xf32>
    %85 = arith.mulf %83, %84 : vector<8x8xf32>
    %86 = vector.broadcast %1 : vector<1x8xf32> to vector<8x8xf32>
    %87 = arith.addf %85, %86 : vector<8x8xf32>
    %cst_53 = arith.constant dense<0xFF800000> : vector<8xf32>
    %88 = vector.multi_reduction <maximumf>, %87, %cst_53 [1] : vector<8x8xf32> to vector<8xf32>
    %89 = vector.shape_cast %88 : vector<8xf32> to vector<8x1xf32>
    %90 = vector.broadcast %89 : vector<8x1xf32> to vector<8x8xf32>
    %91 = arith.subf %87, %90 : vector<8x8xf32>
    %92 = math.exp %91 : vector<8x8xf32>
    %cst_54 = arith.constant dense<0.000000e+00> : vector<8xf32>
    %93 = vector.multi_reduction <add>, %92, %cst_54 [1] : vector<8x8xf32> to vector<8xf32>
    %94 = vector.shape_cast %93 : vector<8xf32> to vector<8x1xf32>
    %95 = vector.broadcast %94 : vector<8x1xf32> to vector<8x8xf32>
    %96 = arith.divf %92, %95 : vector<8x8xf32>
    %97 = arith.truncf %96 : vector<8x8xf32> to vector<8x8xbf16>
    %cst_55 = arith.constant dense<0.000000e+00> : vector<8x8xf32>
    %98 = tpu.matmul %97, %82, %cst_55 {dimension_numbers = #tpu.dot_dimension_numbers<[1], [0], [0], [1], [0, 0, 1, 1], [], []>} : vector<8x8xbf16>, vector<8x8xbf16>, vector<8x8xf32> -> vector<8x8xf32>
    %c0_56 = arith.constant 0 : index
    %c3 = arith.constant 3 : index
    %c0_57 = arith.constant 0 : index
    %c0_58 = arith.constant 0 : index
    %99 = vector.load %arg6[%c0_56, %c3, %c0_57, %c0_58] : memref<1x4x8x8xf32, #tpu.memory_space<vmem>>, vector<1x1x8x8xf32>
    %100 = vector.shape_cast %99 : vector<1x1x8x8xf32> to vector<8x8xf32>
    %101 = vector.shape_cast %96 : vector<8x8xf32> to vector<1x1x8x8xf32>
    tpu.vector_store %arg6[%c0_56, %c3, %c0_57, %c0_58], %101 {strides = array<i32>} : memref<1x4x8x8xf32, #tpu.memory_space<vmem>>, vector<1x1x8x8xf32>,
    %102 = tpu.concatenate %23, %48, %73, %98 in 1 : vector<8x8xf32>, vector<8x8xf32>, vector<8x8xf32>, vector<8x8xf32> -> vector<8x32xf32>
    %103 = arith.truncf %102 : vector<8x32xf32> to vector<8x32xbf16>
    %c0_59 = arith.constant 0 : index
    %c0_60 = arith.constant 0 : index
    %c0_61 = arith.constant 0 : index
    %104 = vector.load %arg5[%c0_59, %c0_60, %c0_61] : memref<1x8x32xbf16, #tpu.memory_space<vmem>>, vector<1x8x32xbf16>
    %105 = vector.shape_cast %104 : vector<1x8x32xbf16> to vector<8x32xbf16>
    %106 = vector.shape_cast %103 : vector<8x32xbf16> to vector<1x8x32xbf16>
    tpu.vector_store %arg5[%c0_59, %c0_60, %c0_61], %106 {strides = array<i32>} : memref<1x8x32xbf16, #tpu.memory_space<vmem>>, vector<1x8x32xbf16>,
    return
  }
  func.func @transform_0(%arg0: i32, %arg1: i32) -> (i32, i32, i32) {
    %c0_i32 = arith.constant 0 : i32
    %c0_i32_0 = arith.constant 0 : i32
    return %arg0, %arg1, %c0_i32 : i32, i32, i32
  }
  func.func @transform_1(%arg0: i32, %arg1: i32) -> (i32, i32, i32) {
    %c0_i32 = arith.constant 0 : i32
    %c0_i32_0 = arith.constant 0 : i32
    %c0_i32_1 = arith.constant 0 : i32
    return %arg0, %c0_i32, %c0_i32_0 : i32, i32, i32
  }
  func.func @transform_2(%arg0: i32, %arg1: i32) -> (i32, i32, i32) {
    %c0_i32 = arith.constant 0 : i32
    %c0_i32_0 = arith.constant 0 : i32
    %c0_i32_1 = arith.constant 0 : i32
    return %arg0, %c0_i32, %c0_i32_0 : i32, i32, i32
  }
  func.func @transform_3(%arg0: i32, %arg1: i32) -> (i32, i32, i32) {
    %c0_i32 = arith.constant 0 : i32
    %c0_i32_0 = arith.constant 0 : i32
    return %arg0, %arg1, %c0_i32 : i32, i32, i32
  }
  func.func @transform_4(%arg0: i32, %arg1: i32) -> (i32, i32, i32, i32) {
    %c0_i32 = arith.constant 0 : i32
    %c0_i32_0 = arith.constant 0 : i32
    %c0_i32_1 = arith.constant 0 : i32
    return %arg0, %c0_i32, %arg1, %c0_i32_0 : i32, i32, i32, i32
  }
}

</mosaic_0001>

<llo_original>
// kernel: model_forward.13
$region0: #{model_forward.13}
  #allocation0 [shape = 'u32[]', space=smem, size = 0x4, offset = 0x4, fixed_abs, tag = 'smem constant byte address 0x4 - core index']
  #allocation1 [shape = 'u32[144,128]{1,0:T(1,128)}', space=vmem, size = 0x12000, scoped, tag = 'internal scratch']
  #allocation2 [shape = 'f32[16,64]{1,0:T(8,128)}', space=vmem, size = 0x2000, scoped, tag = 'scratch operand']
  %s0 = inlined_call_operand.vmem [shape: bf16[16,32], index: 0, kind: input, shape index: {}]
  %s1 = inlined_call_operand.vmem [shape: bf16[32,64], index: 1, kind: input, shape index: {}]
  %s2 = inlined_call_operand.vmem [shape: f32[1,64], index: 2, kind: input, shape index: {}]
  %s3 = inlined_call_operand.vmem [shape: bf16[16,64], index: 3, kind: output, shape index: {}]
  %s4 = sld [smem:[#allocation0]]
  $region30: #{model_forward.13} parent=0
    _
  %s6 = ssub.s32 1, %s4
  %s7 = scalar_select 0, %s6, %s4
  // Predicated region
  $region2: #{model_forward.13} parent=0 // pred_check
    _
  $region3: #{model_forward.13} parent=0 // pred_check_branch
    %9 = sbr.rel (0) target = $region5
  $region4: #{model_forward.13} parent=0 // pred_region
    _
  $region5: #{model_forward.13} parent=0 // pred_fallthru
    _
  // Predicated region
  $region6: #{model_forward.13} parent=0 // pred_check
    _
  $region7: #{model_forward.13} parent=0 // pred_check_branch
    %11 = sbr.rel (0) target = $region9
  $region8: #{model_forward.13} parent=0 // pred_region
    _
  $region9: #{model_forward.13} parent=0 // pred_fallthru
    _
  // Predicated region
  $region10: #{model_forward.13} parent=0 // pred_check
    _
  $region11: #{model_forward.13} parent=0 // pred_check_branch
    %13 = sbr.rel (0) target = $region13
  $region12: #{model_forward.13} parent=0 // pred_region
    _
  $region13: #{model_forward.13} parent=0 // pred_fallthru
    _
  %p15 = scmp.eq.s32.totalorder 0, 0
  // Predicated region
  $region14: #{model_forward.13} parent=0 // pred_check
    %p16 = pneg %p15
  $region15: #{model_forward.13} parent=0 // pred_check_branch
    %18 = sbr.rel (%p16) target = $region17
  $region16: #{model_forward.13} parent=0 // pred_region
    %vm19 = vcmask 523264
    %20 = vst.msk [vmem:[#allocation2] sm:$0xff] %vm19, 0.0
    %21 = vst.msk [vmem:[#allocation2 + $0x8] sm:$0xff] %vm19, 0.0
  $region17: #{model_forward.13} parent=0 // pred_fallthru
    _
  %v22 = vld [vmem:[#allocation2] sm:$0xff]
  %v23 = vld [vmem:[#allocation2 + $0x8] sm:$0xff]
  %v24 = vld [vmem:[%s0] sm:$0xf]
  %v25 = vld [vmem:[%s0 + $0x4] sm:$0xf]
  %v26 = vld [vmem:[%s1] sm:$0xf]
  %v27 = vld [vmem:[%s1 + $0x4] sm:$0xf]
  %v28 = vld [vmem:[%s1 + $0x8] sm:$0xf]
  %v29 = vld [vmem:[%s1 + $0xc] sm:$0xf]
  %v32 = vunpack.c.l.b16 %v24
  %v33 = vunpack.c.l.b16 %v25
  %v34 = vpack.c.b16 %v33, %v32
  %v39 = vunpack.c.l.b16 %v26
  %v40 = vunpack.c.l.b16 %v27
  %v41 = vunpack.c.l.b16 %v28
  %v42 = vunpack.c.l.b16 %v29
  %v43 = vpack.c.b16 %v40, %v39
  %v44 = vpack.c.b16 %v42, %v41
  %vm47 = vcmask 261120
  %v49 = vsel %vm47, %v34, 0
  %51 = vmatprep.subr.bf16.mxu0 0
  %52 = vmatpush1.bf16.msra.mxu0 %v43
  %53 = vmatprep.subr.bf16.mxu0 0
  %54 = vmatpush1.bf16.msra.mxu0 %v44
  %55 = vmatprep.subr.bf16.mxu0 0
  %56 = vmatpush1.bf16.msra.mxu0 0
  %57 = vmatprep.subr.bf16.mxu0 0
  %58 = vmatpush1.bf16.msra.mxu0 0
  %59 = vmatprep.subr.bf16.mxu0 0
  %60 = vmatpush1.bf16.msra.mxu0 0
  %61 = vmatprep.subr.bf16.mxu0 0
  %62 = vmatpush1.bf16.msra.mxu0 0
  %63 = vmatprep.subr.bf16.mxu0 0
  %64 = vmatpush1.bf16.msra.mxu0 0
  %65 = vmatprep.subr.bf16.mxu0 0
  %66 = vmatpush1.bf16.msra.mxu0 0
  %67 = vmatprep.subr.bf16.mxu0 0
  %68 = vmatpush1.bf16.msra.mxu0 0
  %69 = vmatprep.subr.bf16.mxu0 0
  %70 = vmatpush1.bf16.msra.mxu0 0
  %71 = vmatprep.subr.bf16.mxu0 0
  %72 = vmatpush1.bf16.msra.mxu0 0
  %73 = vmatprep.subr.bf16.mxu0 0
  %74 = vmatpush1.bf16.msra.mxu0 0
  %75 = vmatprep.subr.bf16.mxu0 0
  %76 = vmatpush1.bf16.msra.mxu0 0
  %77 = vmatprep.subr.bf16.mxu0 0
  %78 = vmatpush1.bf16.msra.mxu0 0
  %79 = vmatprep.subr.bf16.mxu0 0
  %80 = vmatpush1.bf16.msra.mxu0 0
  %81 = vmatprep.subr.bf16.mxu0 0
  %82 = vmatpush1.bf16.msra.mxu0 0
  %83 = vmatprep.mubr.bf16.mxu0 0
  %84 = vmatmul.mubr.bf16.gmra.mrb[0].mxu0 %v49
  %v85 = vpop.f32.mrb[0].mxu0
  %v86 = vadd.f32 0.0, %v85
  %v87 = vpop.f32.mrb[0].mxu0
  %v88 = vpop.f32.mrb[0].mxu0
  %v89 = vadd.f32 0.0, %v88
  %v90 = vpop.f32.mrb[0].mxu0
  %91 = vdwg.mxu0
  %v92 = vadd.f32 %v22, %v86
  %v93 = vadd.f32 %v23, %v89
  %vm94 = vcmask 523264
  %95 = vst.msk [vmem:[#allocation2] sm:$0xff] %vm94, %v92
  %96 = vst.msk [vmem:[#allocation2 + $0x8] sm:$0xff] %vm94, %v93
  // Predicated region
  $region18: #{model_forward.13} parent=0 // pred_check
    %p97 = pneg %p15
  $region19: #{model_forward.13} parent=0 // pred_check_branch
    %99 = sbr.rel (%p97) target = $region21
  $region20: #{model_forward.13} parent=0 // pred_region
    %v100 = vld [vmem:[#allocation2] sm:$0xff]
    %v101 = vld [vmem:[#allocation2 + $0x8] sm:$0xff]
    %v102 = vld [vmem:[%s2] sm:$0x1]
    %v104 = vlaneseq
    %v105 = vshrl.u32 %v104, 7
    %v106 = vsub.s32 0, %v105
    %v107 = vrot.slane %v102, %v106
    %v109 = vadd.f32 %v100, %v107
    %v110 = vadd.f32 %v101, %v107
    %v111 = vmul.f32 %v109, 0.5
    %v112 = vmul.f32 %v110, 0.5
    %v113 = vmul.f32 %v109, 0.044715
    %v114 = vmul.f32 %v110, 0.044715
    %v115 = vmul.f32 %v113, %v109
    %v116 = vmul.f32 %v114, %v110
    %v117 = vmul.f32 %v115, %v109
    %v118 = vmul.f32 %v116, %v110
    %v119 = vadd.f32 %v109, %v117
    %v120 = vadd.f32 %v110, %v118
    %v121 = vmul.f32 %v119, 0.7978846
    %v122 = vmul.f32 %v120, 0.7978846
    %v123 = vtanh.pop %v121
    %v124 = vtanh.pop %v122
    %v125 = vadd.f32 %v123, 1.0
    %v126 = vadd.f32 %v124, 1.0
    %v127 = vmul.f32 %v111, %v125
    %v128 = vmul.f32 %v112, %v126
    %v129 = vpack.c.bf16 %v128, %v127
    %v131 = vunpack.c.l.b16 %v129
    %v132 = vunpack.c.h.b16 %v129
    %v133 = vpack.c.b16 %v131, %v131
    %v134 = vpack.c.b16 %v132, %v132
    %vm137 = vcmask 519168
    %138 = vst.msk [vmem:[%s3] sm:$0xf] %vm137, %v133
    %139 = vst.msk [vmem:[%s3 + $0x4] sm:$0xf] %vm137, %v134
  $region21: #{model_forward.13} parent=0 // pred_fallthru
    _
  // Predicated region
  $region22: #{model_forward.13} parent=0 // pred_check
    _
  $region23: #{model_forward.13} parent=0 // pred_check_branch
    %141 = sbr.rel (0) target = $region25
  $region24: #{model_forward.13} parent=0 // pred_region
    _
  $region25: #{model_forward.13} parent=0 // pred_fallthru
    _
  // Predicated region
  $region26: #{model_forward.13} parent=0 // pred_check
    _
  $region27: #{model_forward.13} parent=0 // pred_check_branch
    %143 = sbr.rel (0) target = $region29
  $region28: #{model_forward.13} parent=0 // pred_region
    _
  $region29: #{model_forward.13} parent=0 // pred_fallthru
    _

// kernel: model_forward.10
$region0: #{model_forward.10}
  #allocation0 [shape = 'u32[]', space=smem, size = 0x4, offset = 0x4, fixed_abs, tag = 'smem constant byte address 0x4 - core index']
  #allocation1 [shape = 'u32[144,128]{1,0:T(1,128)}', space=vmem, size = 0x12000, scoped, tag = 'internal scratch']
  #allocation2 [shape = 'f32[16,96]{1,0:T(8,128)}', space=vmem, size = 0x2000, scoped, tag = 'scratch operand']
  %s0 = inlined_call_operand.vmem [shape: bf16[16,32], index: 0, kind: input, shape index: {}]
  %s1 = inlined_call_operand.vmem [shape: bf16[32,96], index: 1, kind: input, shape index: {}]
  %s2 = inlined_call_operand.vmem [shape: f32[1,96], index: 2, kind: input, shape index: {}]
  %s3 = inlined_call_operand.vmem [shape: bf16[16,96], index: 3, kind: output, shape index: {}]
  %s4 = sld [smem:[#allocation0]]
  $region30: #{model_forward.10} parent=0
    _
  %s6 = ssub.s32 1, %s4
  %s7 = scalar_select 0, %s6, %s4
  // Predicated region
  $region2: #{model_forward.10} parent=0 // pred_check
    _
  $region3: #{model_forward.10} parent=0 // pred_check_branch
    %9 = sbr.rel (0) target = $region5
  $region4: #{model_forward.10} parent=0 // pred_region
    _
  $region5: #{model_forward.10} parent=0 // pred_fallthru
    _
  // Predicated region
  $region6: #{model_forward.10} parent=0 // pred_check
    _
  $region7: #{model_forward.10} parent=0 // pred_check_branch
    %11 = sbr.rel (0) target = $region9
  $region8: #{model_forward.10} parent=0 // pred_region
    _
  $region9: #{model_forward.10} parent=0 // pred_fallthru
    _
  // Predicated region
  $region10: #{model_forward.10} parent=0 // pred_check
    _
  $region11: #{model_forward.10} parent=0 // pred_check_branch
    %13 = sbr.rel (0) target = $region13
  $region12: #{model_forward.10} parent=0 // pred_region
    _
  $region13: #{model_forward.10} parent=0 // pred_fallthru
    _
  %p15 = scmp.eq.s32.totalorder 0, 0
  // Predicated region
  $region14: #{model_forward.10} parent=0 // pred_check
    %p16 = pneg %p15
  $region15: #{model_forward.10} parent=0 // pred_check_branch
    %18 = sbr.rel (%p16) target = $region17
  $region16: #{model_forward.10} parent=0 // pred_region
    %vm19 = vcmask 785408
    %20 = vst.msk [vmem:[#allocation2] sm:$0xff] %vm19, 0.0
    %21 = vst.msk [vmem:[#allocation2 + $0x8] sm:$0xff] %vm19, 0.0
  $region17: #{model_forward.10} parent=0 // pred_fallthru
    _
  %v22 = vld [vmem:[#allocation2] sm:$0xff]
  %v23 = vld [vmem:[#allocation2 + $0x8] sm:$0xff]
  %v24 = vld [vmem:[%s0] sm:$0xf]
  %v25 = vld [vmem:[%s0 + $0x4] sm:$0xf]
  %v26 = vld [vmem:[%s1] sm:$0xf]
  %v27 = vld [vmem:[%s1 + $0x4] sm:$0xf]
  %v28 = vld [vmem:[%s1 + $0x8] sm:$0xf]
  %v29 = vld [vmem:[%s1 + $0xc] sm:$0xf]
  %v32 = vunpack.c.l.b16 %v24
  %v33 = vunpack.c.l.b16 %v25
  %v34 = vpack.c.b16 %v33, %v32
  %v39 = vunpack.c.l.b16 %v26
  %v40 = vunpack.c.l.b16 %v27
  %v41 = vunpack.c.l.b16 %v28
  %v42 = vunpack.c.l.b16 %v29
  %v43 = vpack.c.b16 %v40, %v39
  %v44 = vpack.c.b16 %v42, %v41
  %vm47 = vcmask 261120
  %v49 = vsel %vm47, %v34, 0
  %51 = vmatprep.subr.bf16.mxu0 0
  %52 = vmatpush1.bf16.msra.mxu0 %v43
  %53 = vmatprep.subr.bf16.mxu0 0
  %54 = vmatpush1.bf16.msra.mxu0 %v44
  %55 = vmatprep.subr.bf16.mxu0 0
  %56 = vmatpush1.bf16.msra.mxu0 0
  %57 = vmatprep.subr.bf16.mxu0 0
  %58 = vmatpush1.bf16.msra.mxu0 0
  %59 = vmatprep.subr.bf16.mxu0 0
  %60 = vmatpush1.bf16.msra.mxu0 0
  %61 = vmatprep.subr.bf16.mxu0 0
  %62 = vmatpush1.bf16.msra.mxu0 0
  %63 = vmatprep.subr.bf16.mxu0 0
  %64 = vmatpush1.bf16.msra.mxu0 0
  %65 = vmatprep.subr.bf16.mxu0 0
  %66 = vmatpush1.bf16.msra.mxu0 0
  %67 = vmatprep.subr.bf16.mxu0 0
  %68 = vmatpush1.bf16.msra.mxu0 0
  %69 = vmatprep.subr.bf16.mxu0 0
  %70 = vmatpush1.bf16.msra.mxu0 0
  %71 = vmatprep.subr.bf16.mxu0 0
  %72 = vmatpush1.bf16.msra.mxu0 0
  %73 = vmatprep.subr.bf16.mxu0 0
  %74 = vmatpush1.bf16.msra.mxu0 0
  %75 = vmatprep.subr.bf16.mxu0 0
  %76 = vmatpush1.bf16.msra.mxu0 0
  %77 = vmatprep.subr.bf16.mxu0 0
  %78 = vmatpush1.bf16.msra.mxu0 0
  %79 = vmatprep.subr.bf16.mxu0 0
  %80 = vmatpush1.bf16.msra.mxu0 0
  %81 = vmatprep.subr.bf16.mxu0 0
  %82 = vmatpush1.bf16.msra.mxu0 0
  %83 = vmatprep.mubr.bf16.mxu0 0
  %84 = vmatmul.mubr.bf16.gmra.mrb[0].mxu0 %v49
  %v85 = vpop.f32.mrb[0].mxu0
  %v86 = vadd.f32 0.0, %v85
  %v87 = vpop.f32.mrb[0].mxu0
  %v88 = vpop.f32.mrb[0].mxu0
  %v89 = vadd.f32 0.0, %v88
  %v90 = vpop.f32.mrb[0].mxu0
  %91 = vdwg.mxu0
  %v92 = vadd.f32 %v22, %v86
  %v93 = vadd.f32 %v23, %v89
  %vm94 = vcmask 785408
  %95 = vst.msk [vmem:[#allocation2] sm:$0xff] %vm94, %v92
  %96 = vst.msk [vmem:[#allocation2 + $0x8] sm:$0xff] %vm94, %v93
  // Predicated region
  $region18: #{model_forward.10} parent=0 // pred_check
    %p97 = pneg %p15
  $region19: #{model_forward.10} parent=0 // pred_check_branch
    %99 = sbr.rel (%p97) target = $region21
  $region20: #{model_forward.10} parent=0 // pred_region
    %v100 = vld [vmem:[#allocation2] sm:$0xff]
    %v101 = vld [vmem:[#allocation2 + $0x8] sm:$0xff]
    %v102 = vld [vmem:[%s2] sm:$0x1]
    %v104 = vlaneseq
    %v105 = vshrl.u32 %v104, 7
    %v106 = vsub.s32 0, %v105
    %v107 = vrot.slane %v102, %v106
    %v109 = vadd.f32 %v100, %v107
    %v110 = vadd.f32 %v101, %v107
    %v111 = vpack.c.bf16 %v110, %v109
    %v113 = vunpack.c.l.b16 %v111
    %v114 = vunpack.c.h.b16 %v111
    %v115 = vpack.c.b16 %v113, %v113
    %v116 = vpack.c.b16 %v114, %v114
    %vm119 = vcmask 781312
    %120 = vst.msk [vmem:[%s3] sm:$0xf] %vm119, %v115
    %121 = vst.msk [vmem:[%s3 + $0x4] sm:$0xf] %vm119, %v116
  $region21: #{model_forward.10} parent=0 // pred_fallthru
    _
  // Predicated region
  $region22: #{model_forward.10} parent=0 // pred_check
    _
  $region23: #{model_forward.10} parent=0 // pred_check_branch
    %123 = sbr.rel (0) target = $region25
  $region24: #{model_forward.10} parent=0 // pred_region
    _
  $region25: #{model_forward.10} parent=0 // pred_fallthru
    _
  // Predicated region
  $region26: #{model_forward.10} parent=0 // pred_check
    _
  $region27: #{model_forward.10} parent=0 // pred_check_branch
    %125 = sbr.rel (0) target = $region29
  $region28: #{model_forward.10} parent=0 // pred_region
    _
  $region29: #{model_forward.10} parent=0 // pred_fallthru
    _

// kernel: model_forward.12
$region0: #{model_forward.12}
  #allocation0 [shape = 'u32[]', space=smem, size = 0x4, offset = 0x4, fixed_abs, tag = 'smem constant byte address 0x4 - core index']
  #allocation1 [shape = 'u32[144,128]{1,0:T(1,128)}', space=vmem, size = 0x12000, scoped, tag = 'internal scratch']
  #allocation2 [shape = 'f32[16,32]{1,0:T(8,128)}', space=vmem, size = 0x2000, scoped, tag = 'scratch operand']
  %s0 = inlined_call_operand.vmem [shape: bf16[16,32], index: 0, kind: input, shape index: {}]
  %s1 = inlined_call_operand.vmem [shape: bf16[32,32], index: 1, kind: input, shape index: {}]
  %s2 = inlined_call_operand.vmem [shape: f32[1,32], index: 2, kind: input, shape index: {}]
  %s3 = inlined_call_operand.vmem [shape: bf16[16,32], index: 3, kind: input, shape index: {}]
  %s4 = inlined_call_operand.vmem [shape: f32[1,32], index: 4, kind: input, shape index: {}]
  %s5 = inlined_call_operand.vmem [shape: f32[1,32], index: 5, kind: input, shape index: {}]
  %s6 = inlined_call_operand.vmem [shape: bf16[16,32], index: 6, kind: output, shape index: {}]
  %s7 = sld [smem:[#allocation0]]
  $region42: #{model_forward.12} parent=0
    _
  %s9 = ssub.s32 1, %s7
  %s10 = scalar_select 0, %s9, %s7
  // Predicated region
  $region2: #{model_forward.12} parent=0 // pred_check
    _
  $region3: #{model_forward.12} parent=0 // pred_check_branch
    %12 = sbr.rel (0) target = $region5
  $region4: #{model_forward.12} parent=0 // pred_region
    _
  $region5: #{model_forward.12} parent=0 // pred_fallthru
    _
  // Predicated region
  $region6: #{model_forward.12} parent=0 // pred_check
    _
  $region7: #{model_forward.12} parent=0 // pred_check_branch
    %14 = sbr.rel (0) target = $region9
  $region8: #{model_forward.12} parent=0 // pred_region
    _
  $region9: #{model_forward.12} parent=0 // pred_fallthru
    _
  // Predicated region
  $region10: #{model_forward.12} parent=0 // pred_check
    _
  $region11: #{model_forward.12} parent=0 // pred_check_branch
    %16 = sbr.rel (0) target = $region13
  $region12: #{model_forward.12} parent=0 // pred_region
    _
  $region13: #{model_forward.12} parent=0 // pred_fallthru
    _
  // Predicated region
  $region14: #{model_forward.12} parent=0 // pred_check
    _
  $region15: #{model_forward.12} parent=0 // pred_check_branch
    %18 = sbr.rel (0) target = $region17
  $region16: #{model_forward.12} parent=0 // pred_region
    _
  $region17: #{model_forward.12} parent=0 // pred_fallthru
    _
  // Predicated region
  $region18: #{model_forward.12} parent=0 // pred_check
    _
  $region19: #{model_forward.12} parent=0 // pred_check_branch
    %20 = sbr.rel (0) target = $region21
  $region20: #{model_forward.12} parent=0 // pred_region
    _
  $region21: #{model_forward.12} parent=0 // pred_fallthru
    _
  // Predicated region
  $region22: #{model_forward.12} parent=0 // pred_check
    _
  $region23: #{model_forward.12} parent=0 // pred_check_branch
    %22 = sbr.rel (0) target = $region25
  $region24: #{model_forward.12} parent=0 // pred_region
    _
  $region25: #{model_forward.12} parent=0 // pred_fallthru
    _
  %p24 = scmp.eq.s32.totalorder 0, 0
  // Predicated region
  $region26: #{model_forward.12} parent=0 // pred_check
    %p25 = pneg %p24
  $region27: #{model_forward.12} parent=0 // pred_check_branch
    %27 = sbr.rel (%p25) target = $region29
  $region28: #{model_forward.12} parent=0 // pred_region
    %vm28 = vcmask 261120
    %29 = vst.msk [vmem:[#allocation2] sm:$0xff] %vm28, 0.0
    %30 = vst.msk [vmem:[#allocation2 + $0x8] sm:$0xff] %vm28, 0.0
  $region29: #{model_forward.12} parent=0 // pred_fallthru
    _
  %v31 = vld [vmem:[#allocation2] sm:$0xff]
  %v32 = vld [vmem:[#allocation2 + $0x8] sm:$0xff]
  %v33 = vld [vmem:[%s0] sm:$0xf]
  %v34 = vld [vmem:[%s0 + $0x4] sm:$0xf]
  %v35 = vld [vmem:[%s1] sm:$0xf]
  %v36 = vld [vmem:[%s1 + $0x4] sm:$0xf]
  %v37 = vld [vmem:[%s1 + $0x8] sm:$0xf]
  %v38 = vld [vmem:[%s1 + $0xc] sm:$0xf]
  %v41 = vunpack.c.l.b16 %v33
  %v42 = vunpack.c.l.b16 %v34
  %v43 = vpack.c.b16 %v42, %v41
  %v48 = vunpack.c.l.b16 %v35
  %v49 = vunpack.c.l.b16 %v36
  %v50 = vunpack.c.l.b16 %v37
  %v51 = vunpack.c.l.b16 %v38
  %v52 = vpack.c.b16 %v49, %v48
  %v53 = vpack.c.b16 %v51, %v50
  %vm56 = vcmask 261120
  %v58 = vsel %vm56, %v43, 0
  %60 = vmatprep.subr.bf16.mxu0 0
  %61 = vmatpush1.bf16.msra.mxu0 %v52
  %62 = vmatprep.subr.bf16.mxu0 0
  %63 = vmatpush1.bf16.msra.mxu0 %v53
  %64 = vmatprep.subr.bf16.mxu0 0
  %65 = vmatpush1.bf16.msra.mxu0 0
  %66 = vmatprep.subr.bf16.mxu0 0
  %67 = vmatpush1.bf16.msra.mxu0 0
  %68 = vmatprep.subr.bf16.mxu0 0
  %69 = vmatpush1.bf16.msra.mxu0 0
  %70 = vmatprep.subr.bf16.mxu0 0
  %71 = vmatpush1.bf16.msra.mxu0 0
  %72 = vmatprep.subr.bf16.mxu0 0
  %73 = vmatpush1.bf16.msra.mxu0 0
  %74 = vmatprep.subr.bf16.mxu0 0
  %75 = vmatpush1.bf16.msra.mxu0 0
  %76 = vmatprep.subr.bf16.mxu0 0
  %77 = vmatpush1.bf16.msra.mxu0 0
  %78 = vmatprep.subr.bf16.mxu0 0
  %79 = vmatpush1.bf16.msra.mxu0 0
  %80 = vmatprep.subr.bf16.mxu0 0
  %81 = vmatpush1.bf16.msra.mxu0 0
  %82 = vmatprep.subr.bf16.mxu0 0
  %83 = vmatpush1.bf16.msra.mxu0 0
  %84 = vmatprep.subr.bf16.mxu0 0
  %85 = vmatpush1.bf16.msra.mxu0 0
  %86 = vmatprep.subr.bf16.mxu0 0
  %87 = vmatpush1.bf16.msra.mxu0 0
  %88 = vmatprep.subr.bf16.mxu0 0
  %89 = vmatpush1.bf16.msra.mxu0 0
  %90 = vmatprep.subr.bf16.mxu0 0
  %91 = vmatpush1.bf16.msra.mxu0 0
  %92 = vmatprep.mubr.bf16.mxu0 0
  %93 = vmatmul.mubr.bf16.gmra.mrb[0].mxu0 %v58
  %v94 = vpop.f32.mrb[0].mxu0
  %v95 = vadd.f32 0.0, %v94
  %v96 = vpop.f32.mrb[0].mxu0
  %v97 = vpop.f32.mrb[0].mxu0
  %v98 = vadd.f32 0.0, %v97
  %v99 = vpop.f32.mrb[0].mxu0
  %100 = vdwg.mxu0
  %v101 = vadd.f32 %v31, %v95
  %v102 = vadd.f32 %v32, %v98
  %103 = vst.msk [vmem:[#allocation2] sm:$0xff] %vm56, %v101
  %104 = vst.msk [vmem:[#allocation2 + $0x8] sm:$0xff] %vm56, %v102
  // Predicated region
  $region30: #{model_forward.12} parent=0 // pred_check
    %p105 = pneg %p24
  $region31: #{model_forward.12} parent=0 // pred_check_branch
    %107 = sbr.rel (%p105) target = $region33
  $region32: #{model_forward.12} parent=0 // pred_region
    %v108 = vld [vmem:[#allocation2] sm:$0xff]
    %v109 = vld [vmem:[#allocation2 + $0x8] sm:$0xff]
    %v110 = vld [vmem:[%s2] sm:$0x1]
    %v112 = vlaneseq
    %v113 = vshrl.u32 %v112, 7
    %v114 = vsub.s32 0, %v113
    %v115 = vrot.slane %v110, %v114
    %v117 = vadd.f32 %v108, %v115
    %v118 = vadd.f32 %v109, %v115
    %v119 = vld [vmem:[%s3] sm:$0xf]
    %v120 = vld [vmem:[%s3 + $0x4] sm:$0xf]
    %v121 = vunpack.c.l.bf16 %v119
    %v122 = vunpack.c.l.bf16 %v120
    %v123 = vadd.f32 %v117, %v121
    %v124 = vadd.f32 %v118, %v122
    %v125 = vsel %vm56, %v123, 0.0
    %126 = vadd.xlane.f32.xlu0 %v125
    %v127 = vpop.xlane.xlu0 %126
    %v128 = vsel %vm56, %v124, 0.0
    %129 = vadd.xlane.f32.xlu0 %v128
    %v130 = vpop.xlane.xlu0 %129
    %v131 = vrcp.pop 32.0
    %v132 = vmul.f32 %v127, %v131
    %v133 = vmul.f32 %v130, %v131
    %v134 = vsub.f32 %v123, %v132
    %v135 = vsub.f32 %v124, %v133
    %v136 = vmul.f32 %v134, %v134
    %v137 = vmul.f32 %v135, %v135
    %v138 = vsel %vm56, %v136, 0.0
    %139 = vadd.xlane.f32.xlu0 %v138
    %v140 = vpop.xlane.xlu0 %139
    %v141 = vsel %vm56, %v137, 0.0
    %142 = vadd.xlane.f32.xlu0 %v141
    %v143 = vpop.xlane.xlu0 %142
    %v144 = vmul.f32 %v140, %v131
    %v145 = vmul.f32 %v143, %v131
    %v146 = vadd.f32 %v144, 1e-12
    %v147 = vadd.f32 %v145, 1e-12
    %v148 = vrsqrt.pop %v146
    %v149 = vrsqrt.pop %v147
    %v150 = vmul.f32 %v134, %v148
    %v151 = vmul.f32 %v135, %v149
    %v152 = vld [vmem:[%s4] sm:$0x1]
    %v154 = vlaneseq
    %v155 = vshrl.u32 %v154, 7
    %v156 = vsub.s32 0, %v155
    %v157 = vrot.slane %v152, %v156
    %v159 = vmul.f32 %v150, %v157
    %v160 = vmul.f32 %v151, %v157
    %v161 = vld [vmem:[%s5] sm:$0x1]
    %v163 = vlaneseq
    %v164 = vshrl.u32 %v163, 7
    %v165 = vsub.s32 0, %v164
    %v166 = vrot.slane %v161, %v165
    %v168 = vadd.f32 %v159, %v166
    %v169 = vadd.f32 %v160, %v166
    %v170 = vpack.c.bf16 %v169, %v168
    %v172 = vunpack.c.l.b16 %v170
    %v173 = vunpack.c.h.b16 %v170
    %v174 = vpack.c.b16 %v172, %v172
    %v175 = vpack.c.b16 %v173, %v173
    %vm178 = vcmask 257024
    %179 = vst.msk [vmem:[%s6] sm:$0xf] %vm178, %v174
    %180 = vst.msk [vmem:[%s6 + $0x4] sm:$0xf] %vm178, %v175
  $region33: #{model_forward.12} parent=0 // pred_fallthru
    _
  // Predicated region
  $region34: #{model_forward.12} parent=0 // pred_check
    _
  $region35: #{model_forward.12} parent=0 // pred_check_branch
    %182 = sbr.rel (0) target = $region37
  $region36: #{model_forward.12} parent=0 // pred_region
    _
  $region37: #{model_forward.12} parent=0 // pred_fallthru
    _
  // Predicated region
  $region38: #{model_forward.12} parent=0 // pred_check
    _
  $region39: #{model_forward.12} parent=0 // pred_check_branch
    %184 = sbr.rel (0) target = $region41
  $region40: #{model_forward.12} parent=0 // pred_region
    _
  $region41: #{model_forward.12} parent=0 // pred_fallthru
    _

// kernel: model_forward.11
$region0: #{model_forward.11}
  #allocation0 [shape = 'u32[]', space=smem, size = 0x4, offset = 0x4, fixed_abs, tag = 'smem constant byte address 0x4 - core index']
  #allocation1 [shape = 'u32[144,128]{1,0:T(1,128)}', space=vmem, size = 0x12000, scoped, tag = 'internal scratch']
  %s0 = inlined_call_operand.vmem [shape: bf16[2,8,96], index: 0, kind: input, shape index: {}, may-alias: {0,1}]
  %s1 = inlined_call_operand.vmem [shape: bf16[2,8,96], index: 1, kind: input, shape index: {}, may-alias: {0,1}]
  %s2 = inlined_call_operand.vmem [shape: f32[2,1,8], index: 2, kind: input, shape index: {}]
  %s3 = inlined_call_operand.vmem [shape: bf16[2,8,32], index: 3, kind: output, shape index: {}]
  %s4 = sld [smem:[#allocation0]]
  $region45: #{model_forward.11} parent=0
    _
  %s6 = ssub.s32 1, %s4
  %s7 = scalar_select 0, %s6, %s4
  loop: start=0, step=1, limit=4
  $region2: #{model_forward.11} parent=0 // loop_pre_header
    _
  $region3: #{model_forward.11} parent=0 // loop_header
    %s9 = sphi 0, %s13
    %p10 = scmp.ge.s32.totalorder %s9, 4
    %s16 = sphi 0, %s28
    %s17 = sphi 0, %s24
    %s18 = sphi 0, %s16
    %s19 = sphi 0, %s17
    %s20 = sphi 0, %s18
    %s21 = sphi 0, %s19
    %s33 = sphi 0, %s35
    %s36 = sphi 0, %s33
    %s37 = sphi 0, %s36
    %s53 = sphi 0, %s37
    %s59 = sphi 0, %s61
    %s62 = sphi 0, %s59
    %s63 = sphi 0, %s62
    %s79 = sphi 0, %s63
    %s85 = sphi 0, %s87
    %s88 = sphi 0, %s85
    %s89 = sphi 0, %s88
    %s105 = sphi 0, %s89
    %s113 = sphi 0, %s115
    %s116 = sphi 0, %s113
    %s117 = sphi 0, %s116
    %s133 = sphi 0, %s117
  $region4: #{model_forward.11} parent=0 // loop_header_branch
    %12 = sbr.rel (%p10) target = $region8
  $region5: #{model_forward.11} parent=0 // loop_body
    %s14 = ssub.s32 %s9, 1
    %s15 = ssub.s32 %s9, 2
    %s22 = sadd.s32 1, %s17
    %p23 = scmp.ge.s32.totalorder %s22, 1
    %s24 = scalar_select %p23, 0, %s22
    %s25 = sadd.s32 1, %s16
    %s26 = scalar_select %p23, %s25, %s16
    %p27 = scmp.ge.s32.totalorder %s26, 2
    %s28 = scalar_select %p27, 0, %s26
    %s29 = ssub.s32 %s16, %s28
    %s30 = ssub.s32 %s17, %s24
    %s31 = sor.u32 %s29, %s30
    %p32 = scmp.eq.s32.totalorder %s31, 0
    %s34 = sadd.s32 %s33, 1
    %s35 = scalar_select %p32, %s33, %s34
    %p38 = pneg %p32
    %p39 = scmp.eq.s32.totalorder %s9, 1
    %p40 = por %p38, %p39
    %p41 = scmp.ne.s32.totalorder %s33, %s36
    %p42 = scmp.eq.s32.totalorder %s9, 0
    %p43 = por %p41, %p42
    %p44 = scmp.ne.s32.totalorder %s33, %s36
    %p45 = scmp.eq.s32.totalorder %s14, 1
    %p46 = por %p44, %p45
    %p47 = scmp.ne.s32.totalorder %s36, %s37
    %p48 = scmp.eq.s32.totalorder %s14, 0
    %p49 = por %p47, %p48
    %p50 = scmp.ne.s32.totalorder %s36, %s37
    %p51 = scmp.eq.s32.totalorder %s15, 1
    %p52 = por %p50, %p51
    %p54 = scmp.ne.s32.totalorder %s37, %s53
    %p55 = scmp.eq.s32.totalorder %s15, 0
    %p56 = por %p54, %p55
    %s57 = ssub.s32 %s16, %s28
    %p58 = scmp.eq.s32.totalorder %s57, 0
    %s60 = sadd.s32 %s59, 1
    %s61 = scalar_select %p58, %s59, %s60
    %p64 = pneg %p58
    %p65 = scmp.eq.s32.totalorder %s9, 1
    %p66 = por %p64, %p65
    %p67 = scmp.ne.s32.totalorder %s59, %s62
    %p68 = scmp.eq.s32.totalorder %s9, 0
    %p69 = por %p67, %p68
    %p70 = scmp.ne.s32.totalorder %s59, %s62
    %p71 = scmp.eq.s32.totalorder %s14, 1
    %p72 = por %p70, %p71
    %p73 = scmp.ne.s32.totalorder %s62, %s63
    %p74 = scmp.eq.s32.totalorder %s14, 0
    %p75 = por %p73, %p74
    %p76 = scmp.ne.s32.totalorder %s62, %s63
    %p77 = scmp.eq.s32.totalorder %s15, 1
    %p78 = por %p76, %p77
    %p80 = scmp.ne.s32.totalorder %s63, %s79
    %p81 = scmp.eq.s32.totalorder %s15, 0
    %p82 = por %p80, %p81
    %s83 = ssub.s32 %s16, %s28
    %p84 = scmp.eq.s32.totalorder %s83, 0
    %s86 = sadd.s32 %s85, 1
    %s87 = scalar_select %p84, %s85, %s86
    %p90 = pneg %p84
    %p91 = scmp.eq.s32.totalorder %s9, 1
    %p92 = por %p90, %p91
    %p93 = scmp.ne.s32.totalorder %s85, %s88
    %p94 = scmp.eq.s32.totalorder %s9, 0
    %p95 = por %p93, %p94
    %p96 = scmp.ne.s32.totalorder %s85, %s88
    %p97 = scmp.eq.s32.totalorder %s14, 1
    %p98 = por %p96, %p97
    %p99 = scmp.ne.s32.totalorder %s88, %s89
    %p100 = scmp.eq.s32.totalorder %s14, 0
    %p101 = por %p99, %p100
    %p102 = scmp.ne.s32.totalorder %s88, %s89
    %p103 = scmp.eq.s32.totalorder %s15, 1
    %p104 = por %p102, %p103
    %p106 = scmp.ne.s32.totalorder %s89, %s105
    %p107 = scmp.eq.s32.totalorder %s15, 0
    %p108 = por %p106, %p107
    %s109 = ssub.s32 %s16, %s28
    %s110 = ssub.s32 %s17, %s24
    %s111 = sor.u32 %s109, %s110
    %p112 = scmp.eq.s32.totalorder %s111, 0
    %s114 = sadd.s32 %s113, 1
    %s115 = scalar_select %p112, %s113, %s114
    %p118 = pneg %p112
    %p119 = scmp.eq.s32.totalorder %s9, 1
    %p120 = por %p118, %p119
    %p121 = scmp.ne.s32.totalorder %s113, %s116
    %p122 = scmp.eq.s32.totalorder %s9, 0
    %p123 = por %p121, %p122
    %p124 = scmp.ne.s32.totalorder %s113, %s116
    %p125 = scmp.eq.s32.totalorder %s14, 1
    %p126 = por %p124, %p125
    %p127 = scmp.ne.s32.totalorder %s116, %s117
    %p128 = scmp.eq.s32.totalorder %s14, 0
    %p129 = por %p127, %p128
    %p130 = scmp.ne.s32.totalorder %s116, %s117
    %p131 = scmp.eq.s32.totalorder %s15, 1
    %p132 = por %p130, %p131
    %p134 = scmp.ne.s32.totalorder %s117, %s133
    %p135 = scmp.eq.s32.totalorder %s15, 0
    %p136 = por %p134, %p135
    %p137 = scmp.le.s32.totalorder 1, %s9
    %p138 = scmp.lt.s32.totalorder %s9, 3
    %p139 = pnand %p137, %p138
    %p140 = pneg %p139
    // Predicated region
    $region9: #{model_forward.11} parent=5 // pred_check
      _
    $region10: #{model_forward.11} parent=5 // pred_check_branch
      %142 = sbr.rel (%p139) target = $region12
    $region11: #{model_forward.11} parent=5 // pred_region
      %s143 = ssub.s32 %s9, 1
    $region12: #{model_forward.11} parent=5 // pred_fallthru
      _
    %p144 = scmp.lt.s32.totalorder %s9, 2
    // Predicated region
    $region13: #{model_forward.11} parent=5 // pred_check
      %p145 = pneg %p144
    $region14: #{model_forward.11} parent=5 // pred_check_branch
      %147 = sbr.rel (%p145) target = $region16
    $region15: #{model_forward.11} parent=5 // pred_region
      // Predicated region
      $region17: #{model_forward.11} parent=15 // pred_check
        %p148 = pneg %p43
      $region18: #{model_forward.11} parent=15 // pred_check_branch
        %150 = sbr.rel (%p148) target = $region20
      $region19: #{model_forward.11} parent=15 // pred_region
        %p151 = scmp.lt.s32.totalorder %s16, 1
        %s152 = scalar_select %p151, %s16, 1
        %p153 = scmp.lt.s32.totalorder %s17, 0
        %s154 = scalar_select %p153, %s17, 0
        %s155 = sadd.s32 %s154, %s152
        %s156 = smul.addr %s155, 4
        %s157 = scalar_lea.vmem %s0, %s156
      $region20: #{model_forward.11} parent=15 // pred_fallthru
        _
      // Predicated region
      $region21: #{model_forward.11} parent=15 // pred_check
        %p158 = pneg %p69
      $region22: #{model_forward.11} parent=15 // pred_check_branch
        %160 = sbr.rel (%p158) target = $region24
      $region23: #{model_forward.11} parent=15 // pred_region
        %p161 = scmp.lt.s32.totalorder %s16, 1
        %s162 = scalar_select %p161, %s16, 1
        %s163 = smul.addr %s162, 4
        %s164 = scalar_lea.vmem %s1, %s163
      $region24: #{model_forward.11} parent=15 // pred_fallthru
        _
      // Predicated region
      $region25: #{model_forward.11} parent=15 // pred_check
        %p165 = pneg %p95
      $region26: #{model_forward.11} parent=15 // pred_check_branch
        %167 = sbr.rel (%p165) target = $region28
      $region27: #{model_forward.11} parent=15 // pred_region
        %p168 = scmp.lt.s32.totalorder %s16, 1
        %s169 = scalar_select %p168, %s16, 1
        %s170 = scalar_lea.vmem %s2, %s169
      $region28: #{model_forward.11} parent=15 // pred_fallthru
        _
    $region16: #{model_forward.11} parent=5 // pred_fallthru
      _
    %p171 = scmp.le.s32.totalorder 1, %s9
    %p172 = scmp.lt.s32.totalorder %s9, 3
    %p173 = pnand %p171, %p172
    %p174 = pneg %p173
    // Predicated region
    $region29: #{model_forward.11} parent=5 // pred_check
      _
    $region30: #{model_forward.11} parent=5 // pred_check_branch
      %176 = sbr.rel (%p173) target = $region32
    $region31: #{model_forward.11} parent=5 // pred_region
      %s177 = ssub.s32 %s9, 1
      %p178 = scmp.lt.s32.totalorder %s18, 1
      %s179 = scalar_select %p178, %s18, 1
      %p180 = scmp.lt.s32.totalorder %s19, 0
      %s181 = scalar_select %p180, %s19, 0
      %s182 = sadd.s32 %s181, %s179
      %s183 = smul.addr %s182, 4
      %s184 = scalar_lea.vmem %s0, %s183
      %p185 = pneg %p49
      %p186 = pneg %p46
      %p187 = scmp.lt.s32.totalorder %s18, 1
      %s188 = scalar_select %p187, %s18, 1
      %s189 = smul.addr %s188, 4
      %s190 = scalar_lea.vmem %s1, %s189
      %p191 = pneg %p75
      %p192 = pneg %p72
      %p193 = scmp.lt.s32.totalorder %s18, 1
      %s194 = scalar_select %p193, %s18, 1
      %s195 = scalar_lea.vmem %s2, %s194
      %p196 = pneg %p101
      %p197 = pneg %p98
      %p198 = pneg %p129
      %p199 = pneg %p126
      %p200 = scmp.lt.s32.totalorder %s18, 1
      %s201 = scalar_select %p200, %s18, 1
      %p202 = scmp.lt.s32.totalorder %s19, 0
      %s203 = scalar_select %p202, %s19, 0
      %s204 = sadd.s32 %s203, %s201
      %s205 = smul.addr %s204, 4
      %s206 = scalar_lea.vmem %s3, %s205
      %p207 = scmp.lt.s32.totalorder %s18, 1
      %s208 = scalar_select %p207, %s18, 1
      %p209 = scmp.lt.s32.totalorder %s19, 0
      %s210 = scalar_select %p209, %s19, 0
      %s211 = sadd.s32 %s210, %s208
      %s212 = smul.addr %s211, 4
      %s213 = scalar_lea.vmem %s0, %s212
      %p214 = scmp.lt.s32.totalorder %s18, 1
      %s215 = scalar_select %p214, %s18, 1
      %s216 = smul.addr %s215, 4
      %s217 = scalar_lea.vmem %s1, %s216
      %p218 = scmp.lt.s32.totalorder %s18, 1
      %s219 = scalar_select %p218, %s18, 1
      %s220 = scalar_lea.vmem %s2, %s219
      %p221 = scmp.lt.s32.totalorder %s18, 1
      %s222 = scalar_select %p221, %s18, 1
      %p223 = scmp.lt.s32.totalorder %s19, 0
      %s224 = scalar_select %p223, %s19, 0
      %s225 = sadd.s32 %s224, %s222
      %s226 = smul.addr %s225, 4
      %s227 = scalar_lea.vmem %s3, %s226
      %v229 = vld [vmem:[%s220] sm:$0x1]
      %v230 = vld [vmem:[%s213] sm:$0xf]
      %v231 = vld [vmem:[%s217] sm:$0xf]
      %v233 = vunpack.c.l.b16 %v231
      %v234 = vpack.c.b16 %v233, %v233
      %235 = vrot.lane.b32.xlu0 %v234, 96
      %v236 = vpop.permute.xlu0 %235
      %vm237 = vcmask 64512
      %v239 = vsel %vm237, %v230, 0
      %v242 = vsel %vm237, %v236, 0
      %244 = vmatprep.subr.bf16.mxu0 0
      %245 = vmatpush1.bf16.xpose.msra.mxu0 %v242
      %246 = vmatprep.subr.bf16.mxu0 0
      %247 = vmatpush1.bf16.xpose.msra.mxu0 0
      %248 = vmatprep.subr.bf16.mxu0 0
      %249 = vmatpush1.bf16.xpose.msra.mxu0 0
      %250 = vmatprep.subr.bf16.mxu0 0
      %251 = vmatpush1.bf16.xpose.msra.mxu0 0
      %252 = vmatprep.subr.bf16.mxu0 0
      %253 = vmatpush1.bf16.xpose.msra.mxu0 0
      %254 = vmatprep.subr.bf16.mxu0 0
      %255 = vmatpush1.bf16.xpose.msra.mxu0 0
      %256 = vmatprep.subr.bf16.mxu0 0
      %257 = vmatpush1.bf16.xpose.msra.mxu0 0
      %258 = vmatprep.subr.bf16.mxu0 0
      %259 = vmatpush1.bf16.xpose.msra.mxu0 0
      %260 = vmatprep.subr.bf16.mxu0 0
      %261 = vmatpush1.bf16.xpose.msra.mxu0 0
      %262 = vmatprep.subr.bf16.mxu0 0
      %263 = vmatpush1.bf16.xpose.msra.mxu0 0
      %264 = vmatprep.subr.bf16.mxu0 0
      %265 = vmatpush1.bf16.xpose.msra.mxu0 0
      %266 = vmatprep.subr.bf16.mxu0 0
      %267 = vmatpush1.bf16.xpose.msra.mxu0 0
      %268 = vmatprep.subr.bf16.mxu0 0
      %269 = vmatpush1.bf16.xpose.msra.mxu0 0
      %270 = vmatprep.subr.bf16.mxu0 0
      %271 = vmatpush1.bf16.xpose.msra.mxu0 0
      %272 = vmatprep.subr.bf16.mxu0 0
      %273 = vmatpush1.bf16.xpose.msra.mxu0 0
      %274 = vmatprep.subr.bf16.mxu0 0
      %275 = vmatpush1.bf16.xpose.msra.mxu0 0
      %276 = vmatprep.mubr.bf16.mxu0 0
      %277 = vmatmul.mubr.bf16.gmra.mrb[0].mxu0 %v239
      %v278 = vpop.f32.mrb[0].mxu0
      %v279 = vadd.f32 0.0, %v278
      %v280 = vpop.f32.mrb[0].mxu0
      %v281 = vpop.f32.mrb[0].mxu0
      %v282 = vpop.f32.mrb[0].mxu0
      %283 = vdwg.mxu0
      %v284 = vmul.f32 %v279, 0.35355338
      %v286 = vlaneseq
      %v287 = vshrl.u32 %v286, 7
      %v288 = vsub.s32 0, %v287
      %v289 = vrot.slane %v229, %v288
      %v291 = vadd.f32 %v284, %v289
      %v292 = vsel %vm237, %v291, -inf
      %293 = vmax.xlane.f32.xlu0 %v292
      %v294 = vpop.xlane.xlu0 %293
      %v295 = vsub.f32 %v291, %v294
      %v296 = vmul.f32 %v295, 1.442695
      %v297 = vpow.pop %v296
      %v298 = vsel %vm237, %v297, 0.0
      %299 = vadd.xlane.f32.xlu0 %v298
      %v300 = vpop.xlane.xlu0 %299
      %v301 = vrcp.pop %v300
      %v302 = vmul.f32 %v297, %v301
      %v303 = vpack.c.bf16 %v302, %v302
      %304 = vrot.lane.b32.xlu0 %v234, 64
      %v305 = vpop.permute.xlu0 %304
      %v307 = vsel %vm237, %v303, 0
      %vm309 = vcmask 1043456
      %v311 = vsel %vm309, %v305, 0
      %313 = vmatprep.subr.bf16.mxu0 0
      %314 = vmatpush1.bf16.msra.mxu0 %v311
      %315 = vmatprep.subr.bf16.mxu0 0
      %316 = vmatpush1.bf16.msra.mxu0 0
      %317 = vmatprep.subr.bf16.mxu0 0
      %318 = vmatpush1.bf16.msra.mxu0 0
      %319 = vmatprep.subr.bf16.mxu0 0
      %320 = vmatpush1.bf16.msra.mxu0 0
      %321 = vmatprep.subr.bf16.mxu0 0
      %322 = vmatpush1.bf16.msra.mxu0 0
      %323 = vmatprep.subr.bf16.mxu0 0
      %324 = vmatpush1.bf16.msra.mxu0 0
      %325 = vmatprep.subr.bf16.mxu0 0
      %326 = vmatpush1.bf16.msra.mxu0 0
      %327 = vmatprep.subr.bf16.mxu0 0
      %328 = vmatpush1.bf16.msra.mxu0 0
      %329 = vmatprep.subr.bf16.mxu0 0
      %330 = vmatpush1.bf16.msra.mxu0 0
      %331 = vmatprep.subr.bf16.mxu0 0
      %332 = vmatpush1.bf16.msra.mxu0 0
      %333 = vmatprep.subr.bf16.mxu0 0
      %334 = vmatpush1.bf16.msra.mxu0 0
      %335 = vmatprep.subr.bf16.mxu0 0
      %336 = vmatpush1.bf16.msra.mxu0 0
      %337 = vmatprep.subr.bf16.mxu0 0
      %338 = vmatpush1.bf16.msra.mxu0 0
      %339 = vmatprep.subr.bf16.mxu0 0
      %340 = vmatpush1.bf16.msra.mxu0 0
      %341 = vmatprep.subr.bf16.mxu0 0
      %342 = vmatpush1.bf16.msra.mxu0 0
      %343 = vmatprep.subr.bf16.mxu0 0
      %344 = vmatpush1.bf16.msra.mxu0 0
      %345 = vmatprep.mubr.bf16.mxu0 0
      %346 = vmatmul.mubr.bf16.gmra.mrb[0].mxu0 %v307
      %v347 = vpop.f32.mrb[0].mxu0
      %v348 = vadd.f32 0.0, %v347
      %v349 = vpop.f32.mrb[0].mxu0
      %v350 = vpop.f32.mrb[0].mxu0
      %v351 = vpop.f32.mrb[0].mxu0
      %352 = vdwg.mxu0
      %v354 = vunpack.c.l.b16 %v230
      %v355 = vpack.c.b16 %v354, %v354
      %356 = vrot.lane.b32.xlu0 %v355, 120
      %v357 = vpop.permute.xlu0 %356
      %358 = vrot.lane.b32.xlu0 %v234, 88
      %v359 = vpop.permute.xlu0 %358
      %v361 = vsel %vm237, %v357, 0
      %v364 = vsel %vm237, %v359, 0
      %366 = vmatprep.subr.bf16.mxu0 0
      %367 = vmatpush1.bf16.xpose.msra.mxu0 %v364
      %368 = vmatprep.subr.bf16.mxu0 0
      %369 = vmatpush1.bf16.xpose.msra.mxu0 0
      %370 = vmatprep.subr.bf16.mxu0 0
      %371 = vmatpush1.bf16.xpose.msra.mxu0 0
      %372 = vmatprep.subr.bf16.mxu0 0
      %373 = vmatpush1.bf16.xpose.msra.mxu0 0
      %374 = vmatprep.subr.bf16.mxu0 0
      %375 = vmatpush1.bf16.xpose.msra.mxu0 0
      %376 = vmatprep.subr.bf16.mxu0 0
      %377 = vmatpush1.bf16.xpose.msra.mxu0 0
      %378 = vmatprep.subr.bf16.mxu0 0
      %379 = vmatpush1.bf16.xpose.msra.mxu0 0
      %380 = vmatprep.subr.bf16.mxu0 0
      %381 = vmatpush1.bf16.xpose.msra.mxu0 0
      %382 = vmatprep.subr.bf16.mxu0 0
      %383 = vmatpush1.bf16.xpose.msra.mxu0 0
      %384 = vmatprep.subr.bf16.mxu0 0
      %385 = vmatpush1.bf16.xpose.msra.mxu0 0
      %386 = vmatprep.subr.bf16.mxu0 0
      %387 = vmatpush1.bf16.xpose.msra.mxu0 0
      %388 = vmatprep.subr.bf16.mxu0 0
      %389 = vmatpush1.bf16.xpose.msra.mxu0 0
      %390 = vmatprep.subr.bf16.mxu0 0
      %391 = vmatpush1.bf16.xpose.msra.mxu0 0
      %392 = vmatprep.subr.bf16.mxu0 0
      %393 = vmatpush1.bf16.xpose.msra.mxu0 0
      %394 = vmatprep.subr.bf16.mxu0 0
      %395 = vmatpush1.bf16.xpose.msra.mxu0 0
      %396 = vmatprep.subr.bf16.mxu0 0
      %397 = vmatpush1.bf16.xpose.msra.mxu0 0
      %398 = vmatprep.mubr.bf16.mxu0 0
      %399 = vmatmul.mubr.bf16.gmra.mrb[0].mxu0 %v361
      %v400 = vpop.f32.mrb[0].mxu0
      %v401 = vadd.f32 0.0, %v400
      %v402 = vpop.f32.mrb[0].mxu0
      %v403 = vpop.f32.mrb[0].mxu0
      %v404 = vpop.f32.mrb[0].mxu0
      %405 = vdwg.mxu0
      %v406 = vmul.f32 %v401, 0.35355338
      %v407 = vadd.f32 %v406, %v289
      %v408 = vsel %vm237, %v407, -inf
      %409 = vmax.xlane.f32.xlu0 %v408
      %v410 = vpop.xlane.xlu0 %409
      %v411 = vsub.f32 %v407, %v410
      %v412 = vmul.f32 %v411, 1.442695
      %v413 = vpow.pop %v412
      %v414 = vsel %vm237, %v413, 0.0
      %415 = vadd.xlane.f32.xlu0 %v414
      %v416 = vpop.xlane.xlu0 %415
      %v417 = vrcp.pop %v416
      %v418 = vmul.f32 %v413, %v417
      %v419 = vpack.c.bf16 %v418, %v418
      %420 = vrot.lane.b32.xlu0 %v234, 56
      %v421 = vpop.permute.xlu0 %420
      %v423 = vsel %vm237, %v419, 0
      %v426 = vsel %vm309, %v421, 0
      %428 = vmatprep.subr.bf16.mxu0 0
      %429 = vmatpush1.bf16.msra.mxu0 %v426
      %430 = vmatprep.subr.bf16.mxu0 0
      %431 = vmatpush1.bf16.msra.mxu0 0
      %432 = vmatprep.subr.bf16.mxu0 0
      %433 = vmatpush1.bf16.msra.mxu0 0
      %434 = vmatprep.subr.bf16.mxu0 0
      %435 = vmatpush1.bf16.msra.mxu0 0
      %436 = vmatprep.subr.bf16.mxu0 0
      %437 = vmatpush1.bf16.msra.mxu0 0
      %438 = vmatprep.subr.bf16.mxu0 0
      %439 = vmatpush1.bf16.msra.mxu0 0
      %440 = vmatprep.subr.bf16.mxu0 0
      %441 = vmatpush1.bf16.msra.mxu0 0
      %442 = vmatprep.subr.bf16.mxu0 0
      %443 = vmatpush1.bf16.msra.mxu0 0
      %444 = vmatprep.subr.bf16.mxu0 0
      %445 = vmatpush1.bf16.msra.mxu0 0
      %446 = vmatprep.subr.bf16.mxu0 0
      %447 = vmatpush1.bf16.msra.mxu0 0
      %448 = vmatprep.subr.bf16.mxu0 0
      %449 = vmatpush1.bf16.msra.mxu0 0
      %450 = vmatprep.subr.bf16.mxu0 0
      %451 = vmatpush1.bf16.msra.mxu0 0
      %452 = vmatprep.subr.bf16.mxu0 0
      %453 = vmatpush1.bf16.msra.mxu0 0
      %454 = vmatprep.subr.bf16.mxu0 0
      %455 = vmatpush1.bf16.msra.mxu0 0
      %456 = vmatprep.subr.bf16.mxu0 0
      %457 = vmatpush1.bf16.msra.mxu0 0
      %458 = vmatprep.subr.bf16.mxu0 0
      %459 = vmatpush1.bf16.msra.mxu0 0
      %460 = vmatprep.mubr.bf16.mxu0 0
      %461 = vmatmul.mubr.bf16.gmra.mrb[0].mxu0 %v423
      %v462 = vpop.f32.mrb[0].mxu0
      %v463 = vadd.f32 0.0, %v462
      %v464 = vpop.f32.mrb[0].mxu0
      %v465 = vpop.f32.mrb[0].mxu0
      %v466 = vpop.f32.mrb[0].mxu0
      %467 = vdwg.mxu0
      %468 = vrot.lane.b32.xlu0 %v355, 112
      %v469 = vpop.permute.xlu0 %468
      %470 = vrot.lane.b32.xlu0 %v234, 80
      %v471 = vpop.permute.xlu0 %470
      %v473 = vsel %vm237, %v469, 0
      %v476 = vsel %vm237, %v471, 0
      %478 = vmatprep.subr.bf16.mxu0 0
      %479 = vmatpush1.bf16.xpose.msra.mxu0 %v476
      %480 = vmatprep.subr.bf16.mxu0 0
      %481 = vmatpush1.bf16.xpose.msra.mxu0 0
      %482 = vmatprep.subr.bf16.mxu0 0
      %483 = vmatpush1.bf16.xpose.msra.mxu0 0
      %484 = vmatprep.subr.bf16.mxu0 0
      %485 = vmatpush1.bf16.xpose.msra.mxu0 0
      %486 = vmatprep.subr.bf16.mxu0 0
      %487 = vmatpush1.bf16.xpose.msra.mxu0 0
      %488 = vmatprep.subr.bf16.mxu0 0
      %489 = vmatpush1.bf16.xpose.msra.mxu0 0
      %490 = vmatprep.subr.bf16.mxu0 0
      %491 = vmatpush1.bf16.xpose.msra.mxu0 0
      %492 = vmatprep.subr.bf16.mxu0 0
      %493 = vmatpush1.bf16.xpose.msra.mxu0 0
      %494 = vmatprep.subr.bf16.mxu0 0
      %495 = vmatpush1.bf16.xpose.msra.mxu0 0
      %496 = vmatprep.subr.bf16.mxu0 0
      %497 = vmatpush1.bf16.xpose.msra.mxu0 0
      %498 = vmatprep.subr.bf16.mxu0 0
      %499 = vmatpush1.bf16.xpose.msra.mxu0 0
      %500 = vmatprep.subr.bf16.mxu0 0
      %501 = vmatpush1.bf16.xpose.msra.mxu0 0
      %502 = vmatprep.subr.bf16.mxu0 0
      %503 = vmatpush1.bf16.xpose.msra.mxu0 0
      %504 = vmatprep.subr.bf16.mxu0 0
      %505 = vmatpush1.bf16.xpose.msra.mxu0 0
      %506 = vmatprep.subr.bf16.mxu0 0
      %507 = vmatpush1.bf16.xpose.msra.mxu0 0
      %508 = vmatprep.subr.bf16.mxu0 0
      %509 = vmatpush1.bf16.xpose.msra.mxu0 0
      %510 = vmatprep.mubr.bf16.mxu0 0
      %511 = vmatmul.mubr.bf16.gmra.mrb[0].mxu0 %v473
      %v512 = vpop.f32.mrb[0].mxu0
      %v513 = vadd.f32 0.0, %v512
      %v514 = vpop.f32.mrb[0].mxu0
      %v515 = vpop.f32.mrb[0].mxu0
      %v516 = vpop.f32.mrb[0].mxu0
      %517 = vdwg.mxu0
      %v518 = vmul.f32 %v513, 0.35355338
      %v519 = vadd.f32 %v518, %v289
      %v520 = vsel %vm237, %v519, -inf
      %521 = vmax.xlane.f32.xlu0 %v520
      %v522 = vpop.xlane.xlu0 %521
      %v523 = vsub.f32 %v519, %v522
      %v524 = vmul.f32 %v523, 1.442695
      %v525 = vpow.pop %v524
      %v526 = vsel %vm237, %v525, 0.0
      %527 = vadd.xlane.f32.xlu0 %v526
      %v528 = vpop.xlane.xlu0 %527
      %v529 = vrcp.pop %v528
      %v530 = vmul.f32 %v525, %v529
      %v531 = vpack.c.bf16 %v530, %v530
      %532 = vrot.lane.b32.xlu0 %v234, 48
      %v533 = vpop.permute.xlu0 %532
      %v535 = vsel %vm237, %v531, 0
      %v538 = vsel %vm309, %v533, 0
      %540 = vmatprep.subr.bf16.mxu0 0
      %541 = vmatpush1.bf16.msra.mxu0 %v538
      %542 = vmatprep.subr.bf16.mxu0 0
      %543 = vmatpush1.bf16.msra.mxu0 0
      %544 = vmatprep.subr.bf16.mxu0 0
      %545 = vmatpush1.bf16.msra.mxu0 0
      %546 = vmatprep.subr.bf16.mxu0 0
      %547 = vmatpush1.bf16.msra.mxu0 0
      %548 = vmatprep.subr.bf16.mxu0 0
      %549 = vmatpush1.bf16.msra.mxu0 0
      %550 = vmatprep.subr.bf16.mxu0 0
      %551 = vmatpush1.bf16.msra.mxu0 0
      %552 = vmatprep.subr.bf16.mxu0 0
      %553 = vmatpush1.bf16.msra.mxu0 0
      %554 = vmatprep.subr.bf16.mxu0 0
      %555 = vmatpush1.bf16.msra.mxu0 0
      %556 = vmatprep.subr.bf16.mxu0 0
      %557 = vmatpush1.bf16.msra.mxu0 0
      %558 = vmatprep.subr.bf16.mxu0 0
      %559 = vmatpush1.bf16.msra.mxu0 0
      %560 = vmatprep.subr.bf16.mxu0 0
      %561 = vmatpush1.bf16.msra.mxu0 0
      %562 = vmatprep.subr.bf16.mxu0 0
      %563 = vmatpush1.bf16.msra.mxu0 0
      %564 = vmatprep.subr.bf16.mxu0 0
      %565 = vmatpush1.bf16.msra.mxu0 0
      %566 = vmatprep.subr.bf16.mxu0 0
      %567 = vmatpush1.bf16.msra.mxu0 0
      %568 = vmatprep.subr.bf16.mxu0 0
      %569 = vmatpush1.bf16.msra.mxu0 0
      %570 = vmatprep.subr.bf16.mxu0 0
      %571 = vmatpush1.bf16.msra.mxu0 0
      %572 = vmatprep.mubr.bf16.mxu0 0
      %573 = vmatmul.mubr.bf16.gmra.mrb[0].mxu0 %v535
      %v574 = vpop.f32.mrb[0].mxu0
      %v575 = vadd.f32 0.0, %v574
      %v576 = vpop.f32.mrb[0].mxu0
      %v577 = vpop.f32.mrb[0].mxu0
      %v578 = vpop.f32.mrb[0].mxu0
      %579 = vdwg.mxu0
      %580 = vrot.lane.b32.xlu0 %v355, 104
      %v581 = vpop.permute.xlu0 %580
      %582 = vrot.lane.b32.xlu0 %v234, 72
      %v583 = vpop.permute.xlu0 %582
      %v585 = vsel %vm237, %v581, 0
      %v588 = vsel %vm237, %v583, 0
      %590 = vmatprep.subr.bf16.mxu0 0
      %591 = vmatpush1.bf16.xpose.msra.mxu0 %v588
      %592 = vmatprep.subr.bf16.mxu0 0
      %593 = vmatpush1.bf16.xpose.msra.mxu0 0
      %594 = vmatprep.subr.bf16.mxu0 0
      %595 = vmatpush1.bf16.xpose.msra.mxu0 0
      %596 = vmatprep.subr.bf16.mxu0 0
      %597 = vmatpush1.bf16.xpose.msra.mxu0 0
      %598 = vmatprep.subr.bf16.mxu0 0
      %599 = vmatpush1.bf16.xpose.msra.mxu0 0
      %600 = vmatprep.subr.bf16.mxu0 0
      %601 = vmatpush1.bf16.xpose.msra.mxu0 0
      %602 = vmatprep.subr.bf16.mxu0 0
      %603 = vmatpush1.bf16.xpose.msra.mxu0 0
      %604 = vmatprep.subr.bf16.mxu0 0
      %605 = vmatpush1.bf16.xpose.msra.mxu0 0
      %606 = vmatprep.subr.bf16.mxu0 0
      %607 = vmatpush1.bf16.xpose.msra.mxu0 0
      %608 = vmatprep.subr.bf16.mxu0 0
      %609 = vmatpush1.bf16.xpose.msra.mxu0 0
      %610 = vmatprep.subr.bf16.mxu0 0
      %611 = vmatpush1.bf16.xpose.msra.mxu0 0
      %612 = vmatprep.subr.bf16.mxu0 0
      %613 = vmatpush1.bf16.xpose.msra.mxu0 0
      %614 = vmatprep.subr.bf16.mxu0 0
      %615 = vmatpush1.bf16.xpose.msra.mxu0 0
      %616 = vmatprep.subr.bf16.mxu0 0
      %617 = vmatpush1.bf16.xpose.msra.mxu0 0
      %618 = vmatprep.subr.bf16.mxu0 0
      %619 = vmatpush1.bf16.xpose.msra.mxu0 0
      %620 = vmatprep.subr.bf16.mxu0 0
      %621 = vmatpush1.bf16.xpose.msra.mxu0 0
      %622 = vmatprep.mubr.bf16.mxu0 0
      %623 = vmatmul.mubr.bf16.gmra.mrb[0].mxu0 %v585
      %v624 = vpop.f32.mrb[0].mxu0
      %v625 = vadd.f32 0.0, %v624
      %v626 = vpop.f32.mrb[0].mxu0
      %v627 = vpop.f32.mrb[0].mxu0
      %v628 = vpop.f32.mrb[0].mxu0
      %629 = vdwg.mxu0
      %v630 = vmul.f32 %v625, 0.35355338
      %v631 = vadd.f32 %v630, %v289
      %v632 = vsel %vm237, %v631, -inf
      %633 = vmax.xlane.f32.xlu0 %v632
      %v634 = vpop.xlane.xlu0 %633
      %v635 = vsub.f32 %v631, %v634
      %v636 = vmul.f32 %v635, 1.442695
      %v637 = vpow.pop %v636
      %v638 = vsel %vm237, %v637, 0.0
      %639 = vadd.xlane.f32.xlu0 %v638
      %v640 = vpop.xlane.xlu0 %639
      %v641 = vrcp.pop %v640
      %v642 = vmul.f32 %v637, %v641
      %v643 = vpack.c.bf16 %v642, %v642
      %644 = vrot.lane.b32.xlu0 %v234, 40
      %v645 = vpop.permute.xlu0 %644
      %v647 = vsel %vm237, %v643, 0
      %v650 = vsel %vm309, %v645, 0
      %652 = vmatprep.subr.bf16.mxu0 0
      %653 = vmatpush1.bf16.msra.mxu0 %v650
      %654 = vmatprep.subr.bf16.mxu0 0
      %655 = vmatpush1.bf16.msra.mxu0 0
      %656 = vmatprep.subr.bf16.mxu0 0
      %657 = vmatpush1.bf16.msra.mxu0 0
      %658 = vmatprep.subr.bf16.mxu0 0
      %659 = vmatpush1.bf16.msra.mxu0 0
      %660 = vmatprep.subr.bf16.mxu0 0
      %661 = vmatpush1.bf16.msra.mxu0 0
      %662 = vmatprep.subr.bf16.mxu0 0
      %663 = vmatpush1.bf16.msra.mxu0 0
      %664 = vmatprep.subr.bf16.mxu0 0
      %665 = vmatpush1.bf16.msra.mxu0 0
      %666 = vmatprep.subr.bf16.mxu0 0
      %667 = vmatpush1.bf16.msra.mxu0 0
      %668 = vmatprep.subr.bf16.mxu0 0
      %669 = vmatpush1.bf16.msra.mxu0 0
      %670 = vmatprep.subr.bf16.mxu0 0
      %671 = vmatpush1.bf16.msra.mxu0 0
      %672 = vmatprep.subr.bf16.mxu0 0
      %673 = vmatpush1.bf16.msra.mxu0 0
      %674 = vmatprep.subr.bf16.mxu0 0
      %675 = vmatpush1.bf16.msra.mxu0 0
      %676 = vmatprep.subr.bf16.mxu0 0
      %677 = vmatpush1.bf16.msra.mxu0 0
      %678 = vmatprep.subr.bf16.mxu0 0
      %679 = vmatpush1.bf16.msra.mxu0 0
      %680 = vmatprep.subr.bf16.mxu0 0
      %681 = vmatpush1.bf16.msra.mxu0 0
      %682 = vmatprep.subr.bf16.mxu0 0
      %683 = vmatpush1.bf16.msra.mxu0 0
      %684 = vmatprep.mubr.bf16.mxu0 0
      %685 = vmatmul.mubr.bf16.gmra.mrb[0].mxu0 %v647
      %v686 = vpop.f32.mrb[0].mxu0
      %v687 = vadd.f32 0.0, %v686
      %v688 = vpop.f32.mrb[0].mxu0
      %v689 = vpop.f32.mrb[0].mxu0
      %v690 = vpop.f32.mrb[0].mxu0
      %691 = vdwg.mxu0
      %693 = vrot.lane.b32.xlu0 %v463, 8
      %v694 = vpop.permute.xlu0 %693
      %697 = vrot.lane.b32.xlu0 %v575, 16
      %v698 = vpop.permute.xlu0 %697
      %701 = vrot.lane.b32.xlu0 %v687, 24
      %v702 = vpop.permute.xlu0 %701
      %v704 = vsel %vm237, %v348, %v694
      %vm705 = vcmask 130048
      %v706 = vsel %vm705, %v704, %v698
      %vm707 = vcmask 195584
      %v708 = vsel %vm707, %v706, %v702
      %v709 = vpack.c.bf16 %v708, %v708
      %vm710 = vcmask 257024
      %711 = vst.msk [vmem:[%s227] sm:$0xf] %vm710, %v709
      %p712 = scmp.lt.s32.totalorder %s18, 1
      %s713 = scalar_select %p712, %s18, 1
      %p714 = scmp.lt.s32.totalorder %s19, 0
      %s715 = scalar_select %p714, %s19, 0
      %s716 = sadd.s32 %s715, %s713
      %s717 = smul.addr %s716, 4
      %s718 = scalar_lea.vmem %s3, %s717
      // Predicated region
      $region33: #{model_forward.11} parent=31 // pred_check
        %p719 = pneg %p126
      $region34: #{model_forward.11} parent=31 // pred_check_branch
        %721 = sbr.rel (%p719) target = $region36
      $region35: #{model_forward.11} parent=31 // pred_region
        _
      $region36: #{model_forward.11} parent=31 // pred_fallthru
        _
    $region32: #{model_forward.11} parent=5 // pred_fallthru
      _
    %p722 = scmp.le.s32.totalorder 2, %s9
    // Predicated region
    $region37: #{model_forward.11} parent=5 // pred_check
      %p723 = pneg %p722
    $region38: #{model_forward.11} parent=5 // pred_check_branch
      %725 = sbr.rel (%p723) target = $region40
    $region39: #{model_forward.11} parent=5 // pred_region
      %s726 = ssub.s32 %s9, 2
      // Predicated region
      $region41: #{model_forward.11} parent=39 // pred_check
        %p727 = pneg %p132
      $region42: #{model_forward.11} parent=39 // pred_check_branch
        %729 = sbr.rel (%p727) target = $region44
      $region43: #{model_forward.11} parent=39 // pred_region
        %p730 = scmp.lt.s32.totalorder %s20, 1
        %s731 = scalar_select %p730, %s20, 1
        %p732 = scmp.lt.s32.totalorder %s21, 0
        %s733 = scalar_select %p732, %s21, 0
        %s734 = sadd.s32 %s733, %s731
        %s735 = smul.addr %s734, 4
        %s736 = scalar_lea.vmem %s3, %s735
      $region44: #{model_forward.11} parent=39 // pred_fallthru
        _
    $region40: #{model_forward.11} parent=5 // pred_fallthru
      _
  $region6: #{model_forward.11} parent=0 // loop_footer
    %s13 = sadd.s32 1, %s9
  $region7: #{model_forward.11} parent=0 // loop_footer_branch
    %8 = sbr.rel target = $region3
  $region8: #{model_forward.11} parent=0 // loop_exit
    _

// kernel: model_forward.14
$region0: #{model_forward.14}
  #allocation0 [shape = 'u32[]', space=smem, size = 0x4, offset = 0x4, fixed_abs, tag = 'smem constant byte address 0x4 - core index']
  #allocation1 [shape = 'u32[144,128]{1,0:T(1,128)}', space=vmem, size = 0x12000, scoped, tag = 'internal scratch']
  #allocation2 [shape = 'f32[16,32]{1,0:T(8,128)}', space=vmem, size = 0x2000, scoped, tag = 'scratch operand']
  %s0 = inlined_call_operand.vmem [shape: bf16[16,64], index: 0, kind: input, shape index: {}]
  %s1 = inlined_call_operand.vmem [shape: bf16[64,32], index: 1, kind: input, shape index: {}]
  %s2 = inlined_call_operand.vmem [shape: f32[1,32], index: 2, kind: input, shape index: {}]
  %s3 = inlined_call_operand.vmem [shape: bf16[16,32], index: 3, kind: input, shape index: {}]
  %s4 = inlined_call_operand.vmem [shape: f32[1,32], index: 4, kind: input, shape index: {}]
  %s5 = inlined_call_operand.vmem [shape: f32[1,32], index: 5, kind: input, shape index: {}]
  %s6 = inlined_call_operand.vmem [shape: bf16[16,32], index: 6, kind: output, shape index: {}]
  %s7 = sld [smem:[#allocation0]]
  $region42: #{model_forward.14} parent=0
    _
  %s9 = ssub.s32 1, %s7
  %s10 = scalar_select 0, %s9, %s7
  // Predicated region
  $region2: #{model_forward.14} parent=0 // pred_check
    _
  $region3: #{model_forward.14} parent=0 // pred_check_branch
    %12 = sbr.rel (0) target = $region5
  $region4: #{model_forward.14} parent=0 // pred_region
    _
  $region5: #{model_forward.14} parent=0 // pred_fallthru
    _
  // Predicated region
  $region6: #{model_forward.14} parent=0 // pred_check
    _
  $region7: #{model_forward.14} parent=0 // pred_check_branch
    %14 = sbr.rel (0) target = $region9
  $region8: #{model_forward.14} parent=0 // pred_region
    _
  $region9: #{model_forward.14} parent=0 // pred_fallthru
    _
  // Predicated region
  $region10: #{model_forward.14} parent=0 // pred_check
    _
  $region11: #{model_forward.14} parent=0 // pred_check_branch
    %16 = sbr.rel (0) target = $region13
  $region12: #{model_forward.14} parent=0 // pred_region
    _
  $region13: #{model_forward.14} parent=0 // pred_fallthru
    _
  // Predicated region
  $region14: #{model_forward.14} parent=0 // pred_check
    _
  $region15: #{model_forward.14} parent=0 // pred_check_branch
    %18 = sbr.rel (0) target = $region17
  $region16: #{model_forward.14} parent=0 // pred_region
    _
  $region17: #{model_forward.14} parent=0 // pred_fallthru
    _
  // Predicated region
  $region18: #{model_forward.14} parent=0 // pred_check
    _
  $region19: #{model_forward.14} parent=0 // pred_check_branch
    %20 = sbr.rel (0) target = $region21
  $region20: #{model_forward.14} parent=0 // pred_region
    _
  $region21: #{model_forward.14} parent=0 // pred_fallthru
    _
  // Predicated region
  $region22: #{model_forward.14} parent=0 // pred_check
    _
  $region23: #{model_forward.14} parent=0 // pred_check_branch
    %22 = sbr.rel (0) target = $region25
  $region24: #{model_forward.14} parent=0 // pred_region
    _
  $region25: #{model_forward.14} parent=0 // pred_fallthru
    _
  %p24 = scmp.eq.s32.totalorder 0, 0
  // Predicated region
  $region26: #{model_forward.14} parent=0 // pred_check
    %p25 = pneg %p24
  $region27: #{model_forward.14} parent=0 // pred_check_branch
    %27 = sbr.rel (%p25) target = $region29
  $region28: #{model_forward.14} parent=0 // pred_region
    %vm28 = vcmask 261120
    %29 = vst.msk [vmem:[#allocation2] sm:$0xff] %vm28, 0.0
    %30 = vst.msk [vmem:[#allocation2 + $0x8] sm:$0xff] %vm28, 0.0
  $region29: #{model_forward.14} parent=0 // pred_fallthru
    _
  %v31 = vld [vmem:[#allocation2] sm:$0xff]
  %v32 = vld [vmem:[#allocation2 + $0x8] sm:$0xff]
  %v33 = vld [vmem:[%s0] sm:$0xf]
  %v34 = vld [vmem:[%s0 + $0x4] sm:$0xf]
  %v35 = vld [vmem:[%s1] sm:$0xf]
  %v36 = vld [vmem:[%s1 + $0x4] sm:$0xf]
  %v37 = vld [vmem:[%s1 + $0x8] sm:$0xf]
  %v38 = vld [vmem:[%s1 + $0xc] sm:$0xf]
  %v39 = vld [vmem:[%s1 + $0x10] sm:$0xf]
  %v40 = vld [vmem:[%s1 + $0x14] sm:$0xf]
  %v41 = vld [vmem:[%s1 + $0x18] sm:$0xf]
  %v42 = vld [vmem:[%s1 + $0x1c] sm:$0xf]
  %v45 = vunpack.c.l.b16 %v33
  %v46 = vunpack.c.l.b16 %v34
  %v47 = vpack.c.b16 %v46, %v45
  %v56 = vunpack.c.l.b16 %v35
  %v57 = vunpack.c.l.b16 %v36
  %v58 = vunpack.c.l.b16 %v37
  %v59 = vunpack.c.l.b16 %v38
  %v60 = vunpack.c.l.b16 %v39
  %v61 = vunpack.c.l.b16 %v40
  %v62 = vunpack.c.l.b16 %v41
  %v63 = vunpack.c.l.b16 %v42
  %v64 = vpack.c.b16 %v57, %v56
  %v65 = vpack.c.b16 %v59, %v58
  %v66 = vpack.c.b16 %v61, %v60
  %v67 = vpack.c.b16 %v63, %v62
  %vm72 = vcmask 523264
  %v74 = vsel %vm72, %v47, 0
  %76 = vmatprep.subr.bf16.mxu0 0
  %77 = vmatpush1.bf16.msra.mxu0 %v64
  %78 = vmatprep.subr.bf16.mxu0 0
  %79 = vmatpush1.bf16.msra.mxu0 %v65
  %80 = vmatprep.subr.bf16.mxu0 0
  %81 = vmatpush1.bf16.msra.mxu0 %v66
  %82 = vmatprep.subr.bf16.mxu0 0
  %83 = vmatpush1.bf16.msra.mxu0 %v67
  %84 = vmatprep.subr.bf16.mxu0 0
  %85 = vmatpush1.bf16.msra.mxu0 0
  %86 = vmatprep.subr.bf16.mxu0 0
  %87 = vmatpush1.bf16.msra.mxu0 0
  %88 = vmatprep.subr.bf16.mxu0 0
  %89 = vmatpush1.bf16.msra.mxu0 0
  %90 = vmatprep.subr.bf16.mxu0 0
  %91 = vmatpush1.bf16.msra.mxu0 0
  %92 = vmatprep.subr.bf16.mxu0 0
  %93 = vmatpush1.bf16.msra.mxu0 0
  %94 = vmatprep.subr.bf16.mxu0 0
  %95 = vmatpush1.bf16.msra.mxu0 0
  %96 = vmatprep.subr.bf16.mxu0 0
  %97 = vmatpush1.bf16.msra.mxu0 0
  %98 = vmatprep.subr.bf16.mxu0 0
  %99 = vmatpush1.bf16.msra.mxu0 0
  %100 = vmatprep.subr.bf16.mxu0 0
  %101 = vmatpush1.bf16.msra.mxu0 0
  %102 = vmatprep.subr.bf16.mxu0 0
  %103 = vmatpush1.bf16.msra.mxu0 0
  %104 = vmatprep.subr.bf16.mxu0 0
  %105 = vmatpush1.bf16.msra.mxu0 0
  %106 = vmatprep.subr.bf16.mxu0 0
  %107 = vmatpush1.bf16.msra.mxu0 0
  %108 = vmatprep.mubr.bf16.mxu0 0
  %109 = vmatmul.mubr.bf16.gmra.mrb[0].mxu0 %v74
  %v110 = vpop.f32.mrb[0].mxu0
  %v111 = vadd.f32 0.0, %v110
  %v112 = vpop.f32.mrb[0].mxu0
  %v113 = vpop.f32.mrb[0].mxu0
  %v114 = vadd.f32 0.0, %v113
  %v115 = vpop.f32.mrb[0].mxu0
  %116 = vdwg.mxu0
  %v117 = vadd.f32 %v31, %v111
  %v118 = vadd.f32 %v32, %v114
  %vm119 = vcmask 261120
  %120 = vst.msk [vmem:[#allocation2] sm:$0xff] %vm119, %v117
  %121 = vst.msk [vmem:[#allocation2 + $0x8] sm:$0xff] %vm119, %v118
  // Predicated region
  $region30: #{model_forward.14} parent=0 // pred_check
    %p122 = pneg %p24
  $region31: #{model_forward.14} parent=0 // pred_check_branch
    %124 = sbr.rel (%p122) target = $region33
  $region32: #{model_forward.14} parent=0 // pred_region
    %v125 = vld [vmem:[#allocation2] sm:$0xff]
    %v126 = vld [vmem:[#allocation2 + $0x8] sm:$0xff]
    %v127 = vld [vmem:[%s2] sm:$0x1]
    %v129 = vlaneseq
    %v130 = vshrl.u32 %v129, 7
    %v131 = vsub.s32 0, %v130
    %v132 = vrot.slane %v127, %v131
    %v134 = vadd.f32 %v125, %v132
    %v135 = vadd.f32 %v126, %v132
    %v136 = vld [vmem:[%s3] sm:$0xf]
    %v137 = vld [vmem:[%s3 + $0x4] sm:$0xf]
    %v138 = vunpack.c.l.bf16 %v136
    %v139 = vunpack.c.l.bf16 %v137
    %v140 = vadd.f32 %v134, %v138
    %v141 = vadd.f32 %v135, %v139
    %v142 = vsel %vm119, %v140, 0.0
    %143 = vadd.xlane.f32.xlu0 %v142
    %v144 = vpop.xlane.xlu0 %143
    %v145 = vsel %vm119, %v141, 0.0
    %146 = vadd.xlane.f32.xlu0 %v145
    %v147 = vpop.xlane.xlu0 %146
    %v148 = vrcp.pop 32.0
    %v149 = vmul.f32 %v144, %v148
    %v150 = vmul.f32 %v147, %v148
    %v151 = vsub.f32 %v140, %v149
    %v152 = vsub.f32 %v141, %v150
    %v153 = vmul.f32 %v151, %v151
    %v154 = vmul.f32 %v152, %v152
    %v155 = vsel %vm119, %v153, 0.0
    %156 = vadd.xlane.f32.xlu0 %v155
    %v157 = vpop.xlane.xlu0 %156
    %v158 = vsel %vm119, %v154, 0.0
    %159 = vadd.xlane.f32.xlu0 %v158
    %v160 = vpop.xlane.xlu0 %159
    %v161 = vmul.f32 %v157, %v148
    %v162 = vmul.f32 %v160, %v148
    %v163 = vadd.f32 %v161, 1e-12
    %v164 = vadd.f32 %v162, 1e-12
    %v165 = vrsqrt.pop %v163
    %v166 = vrsqrt.pop %v164
    %v167 = vmul.f32 %v151, %v165
    %v168 = vmul.f32 %v152, %v166
    %v169 = vld [vmem:[%s4] sm:$0x1]
    %v171 = vlaneseq
    %v172 = vshrl.u32 %v171, 7
    %v173 = vsub.s32 0, %v172
    %v174 = vrot.slane %v169, %v173
    %v176 = vmul.f32 %v167, %v174
    %v177 = vmul.f32 %v168, %v174
    %v178 = vld [vmem:[%s5] sm:$0x1]
    %v180 = vlaneseq
    %v181 = vshrl.u32 %v180, 7
    %v182 = vsub.s32 0, %v181
    %v183 = vrot.slane %v178, %v182
    %v185 = vadd.f32 %v176, %v183
    %v186 = vadd.f32 %v177, %v183
    %v187 = vpack.c.bf16 %v186, %v185
    %v189 = vunpack.c.l.b16 %v187
    %v190 = vunpack.c.h.b16 %v187
    %v191 = vpack.c.b16 %v189, %v189
    %v192 = vpack.c.b16 %v190, %v190
    %vm195 = vcmask 257024
    %196 = vst.msk [vmem:[%s6] sm:$0xf] %vm195, %v191
    %197 = vst.msk [vmem:[%s6 + $0x4] sm:$0xf] %vm195, %v192
  $region33: #{model_forward.14} parent=0 // pred_fallthru
    _
  // Predicated region
  $region34: #{model_forward.14} parent=0 // pred_check
    _
  $region35: #{model_forward.14} parent=0 // pred_check_branch
    %199 = sbr.rel (0) target = $region37
  $region36: #{model_forward.14} parent=0 // pred_region
    _
  $region37: #{model_forward.14} parent=0 // pred_fallthru
    _
  // Predicated region
  $region38: #{model_forward.14} parent=0 // pred_check
    _
  $region39: #{model_forward.14} parent=0 // pred_check_branch
    %201 = sbr.rel (0) target = $region41
  $region40: #{model_forward.14} parent=0 // pred_region
    _
  $region41: #{model_forward.14} parent=0 // pred_fallthru
    _

// kernel: model_forward.16
$region0: #{model_forward.16}
  #allocation0 [shape = 'u32[]', space=smem, size = 0x4, offset = 0x4, fixed_abs, tag = 'smem constant byte address 0x4 - core index']
  #allocation1 [shape = 'u32[144,128]{1,0:T(1,128)}', space=vmem, size = 0x12000, scoped, tag = 'internal scratch']
  %s0 = inlined_call_operand.vmem [shape: bf16[2,8,96], index: 0, kind: input, shape index: {}, may-alias: {0,1}]
  %s1 = inlined_call_operand.vmem [shape: bf16[2,8,96], index: 1, kind: input, shape index: {}, may-alias: {0,1}]
  %s2 = inlined_call_operand.vmem [shape: f32[2,1,8], index: 2, kind: input, shape index: {}]
  %s3 = inlined_call_operand.vmem [shape: bf16[2,8,32], index: 3, kind: output, shape index: {0}]
  %s4 = inlined_call_operand.hbm [shape: f32[2,4,8,8], index: 4, kind: output, shape index: {1}]
  %5 = xla_tuple %s3, %s4
  %s6 = sld [smem:[#allocation0]]
  $region53: #{model_forward.16} parent=0
    _
  %s8 = ssub.s32 1, %s6
  %s9 = scalar_select 0, %s8, %s6
  $region1: #{model_forward.16} parent=0
    #allocation2 [shape = 'u8[32768]{0}', space=vmem, size = 0x8000, scoped, tag = 'output window, operand 1']
    #allocation3 [shape = 's32[2]{0}', space=sflag, size = 0x8, scoped, tag = 'scoped memory for model_forward.16']
    %10 = vsyncpa [#allocation3], 0
    %s11 = scalar_lea.sflag [#allocation3], 1
    %12 = vsyncpa %s11, 0
    loop: start=0, step=1, limit=4
    $region2: #{model_forward.16} parent=1 // loop_pre_header
      _
    $region3: #{model_forward.16} parent=1 // loop_header
      %s14 = sphi 0, %s18
      %p15 = scmp.ge.s32.totalorder %s14, 4
      %s21 = sphi 0, %s33
      %s22 = sphi 0, %s29
      %s23 = sphi 0, %s21
      %s24 = sphi 0, %s22
      %s25 = sphi 0, %s23
      %s26 = sphi 0, %s24
      %s38 = sphi 0, %s40
      %s41 = sphi 0, %s38
      %s42 = sphi 0, %s41
      %s58 = sphi 0, %s42
      %s64 = sphi 0, %s66
      %s67 = sphi 0, %s64
      %s68 = sphi 0, %s67
      %s84 = sphi 0, %s68
      %s90 = sphi 0, %s92
      %s93 = sphi 0, %s90
      %s94 = sphi 0, %s93
      %s110 = sphi 0, %s94
      %s118 = sphi 0, %s120
      %s121 = sphi 0, %s118
      %s122 = sphi 0, %s121
      %s138 = sphi 0, %s122
      %s146 = sphi 0, %s148
      %s149 = sphi 0, %s146
      %s150 = sphi 0, %s149
      %s166 = sphi 0, %s150
    $region4: #{model_forward.16} parent=1 // loop_header_branch
      %17 = sbr.rel (%p15) target = $region8
    $region5: #{model_forward.16} parent=1 // loop_body
      %s19 = ssub.s32 %s14, 1
      %s20 = ssub.s32 %s14, 2
      %s27 = sadd.s32 1, %s22
      %p28 = scmp.ge.s32.totalorder %s27, 1
      %s29 = scalar_select %p28, 0, %s27
      %s30 = sadd.s32 1, %s21
      %s31 = scalar_select %p28, %s30, %s21
      %p32 = scmp.ge.s32.totalorder %s31, 2
      %s33 = scalar_select %p32, 0, %s31
      %s34 = ssub.s32 %s21, %s33
      %s35 = ssub.s32 %s22, %s29
      %s36 = sor.u32 %s34, %s35
      %p37 = scmp.eq.s32.totalorder %s36, 0
      %s39 = sadd.s32 %s38, 1
      %s40 = scalar_select %p37, %s38, %s39
      %p43 = pneg %p37
      %p44 = scmp.eq.s32.totalorder %s14, 1
      %p45 = por %p43, %p44
      %p46 = scmp.ne.s32.totalorder %s38, %s41
      %p47 = scmp.eq.s32.totalorder %s14, 0
      %p48 = por %p46, %p47
      %p49 = scmp.ne.s32.totalorder %s38, %s41
      %p50 = scmp.eq.s32.totalorder %s19, 1
      %p51 = por %p49, %p50
      %p52 = scmp.ne.s32.totalorder %s41, %s42
      %p53 = scmp.eq.s32.totalorder %s19, 0
      %p54 = por %p52, %p53
      %p55 = scmp.ne.s32.totalorder %s41, %s42
      %p56 = scmp.eq.s32.totalorder %s20, 1
      %p57 = por %p55, %p56
      %p59 = scmp.ne.s32.totalorder %s42, %s58
      %p60 = scmp.eq.s32.totalorder %s20, 0
      %p61 = por %p59, %p60
      %s62 = ssub.s32 %s21, %s33
      %p63 = scmp.eq.s32.totalorder %s62, 0
      %s65 = sadd.s32 %s64, 1
      %s66 = scalar_select %p63, %s64, %s65
      %p69 = pneg %p63
      %p70 = scmp.eq.s32.totalorder %s14, 1
      %p71 = por %p69, %p70
      %p72 = scmp.ne.s32.totalorder %s64, %s67
      %p73 = scmp.eq.s32.totalorder %s14, 0
      %p74 = por %p72, %p73
      %p75 = scmp.ne.s32.totalorder %s64, %s67
      %p76 = scmp.eq.s32.totalorder %s19, 1
      %p77 = por %p75, %p76
      %p78 = scmp.ne.s32.totalorder %s67, %s68
      %p79 = scmp.eq.s32.totalorder %s19, 0
      %p80 = por %p78, %p79
      %p81 = scmp.ne.s32.totalorder %s67, %s68
      %p82 = scmp.eq.s32.totalorder %s20, 1
      %p83 = por %p81, %p82
      %p85 = scmp.ne.s32.totalorder %s68, %s84
      %p86 = scmp.eq.s32.totalorder %s20, 0
      %p87 = por %p85, %p86
      %s88 = ssub.s32 %s21, %s33
      %p89 = scmp.eq.s32.totalorder %s88, 0
      %s91 = sadd.s32 %s90, 1
      %s92 = scalar_select %p89, %s90, %s91
      %p95 = pneg %p89
      %p96 = scmp.eq.s32.totalorder %s14, 1
      %p97 = por %p95, %p96
      %p98 = scmp.ne.s32.totalorder %s90, %s93
      %p99 = scmp.eq.s32.totalorder %s14, 0
      %p100 = por %p98, %p99
      %p101 = scmp.ne.s32.totalorder %s90, %s93
      %p102 = scmp.eq.s32.totalorder %s19, 1
      %p103 = por %p101, %p102
      %p104 = scmp.ne.s32.totalorder %s93, %s94
      %p105 = scmp.eq.s32.totalorder %s19, 0
      %p106 = por %p104, %p105
      %p107 = scmp.ne.s32.totalorder %s93, %s94
      %p108 = scmp.eq.s32.totalorder %s20, 1
      %p109 = por %p107, %p108
      %p111 = scmp.ne.s32.totalorder %s94, %s110
      %p112 = scmp.eq.s32.totalorder %s20, 0
      %p113 = por %p111, %p112
      %s114 = ssub.s32 %s21, %s33
      %s115 = ssub.s32 %s22, %s29
      %s116 = sor.u32 %s114, %s115
      %p117 = scmp.eq.s32.totalorder %s116, 0
      %s119 = sadd.s32 %s118, 1
      %s120 = scalar_select %p117, %s118, %s119
      %p123 = pneg %p117
      %p124 = scmp.eq.s32.totalorder %s14, 1
      %p125 = por %p123, %p124
      %p126 = scmp.ne.s32.totalorder %s118, %s121
      %p127 = scmp.eq.s32.totalorder %s14, 0
      %p128 = por %p126, %p127
      %p129 = scmp.ne.s32.totalorder %s118, %s121
      %p130 = scmp.eq.s32.totalorder %s19, 1
      %p131 = por %p129, %p130
      %p132 = scmp.ne.s32.totalorder %s121, %s122
      %p133 = scmp.eq.s32.totalorder %s19, 0
      %p134 = por %p132, %p133
      %p135 = scmp.ne.s32.totalorder %s121, %s122
      %p136 = scmp.eq.s32.totalorder %s20, 1
      %p137 = por %p135, %p136
      %p139 = scmp.ne.s32.totalorder %s122, %s138
      %p140 = scmp.eq.s32.totalorder %s20, 0
      %p141 = por %p139, %p140
      %s142 = ssub.s32 %s21, %s33
      %s143 = ssub.s32 %s22, %s29
      %s144 = sor.u32 %s142, %s143
      %p145 = scmp.eq.s32.totalorder %s144, 0
      %s147 = sadd.s32 %s146, 1
      %s148 = scalar_select %p145, %s146, %s147
      %p151 = pneg %p145
      %p152 = scmp.eq.s32.totalorder %s14, 1
      %p153 = por %p151, %p152
      %p154 = scmp.ne.s32.totalorder %s146, %s149
      %p155 = scmp.eq.s32.totalorder %s14, 0
      %p156 = por %p154, %p155
      %p157 = scmp.ne.s32.totalorder %s146, %s149
      %p158 = scmp.eq.s32.totalorder %s19, 1
      %p159 = por %p157, %p158
      %p160 = scmp.ne.s32.totalorder %s149, %s150
      %p161 = scmp.eq.s32.totalorder %s19, 0
      %p162 = por %p160, %p161
      %p163 = scmp.ne.s32.totalorder %s149, %s150
      %p164 = scmp.eq.s32.totalorder %s20, 1
      %p165 = por %p163, %p164
      %p167 = scmp.ne.s32.totalorder %s150, %s166
      %p168 = scmp.eq.s32.totalorder %s20, 0
      %p169 = por %p167, %p168
      %p170 = scmp.le.s32.totalorder 1, %s14
      %p171 = scmp.lt.s32.totalorder %s14, 3
      %p172 = pnand %p170, %p171
      %p173 = pneg %p172
      // Predicated region
      $region9: #{model_forward.16} parent=5 // pred_check
        _
      $region10: #{model_forward.16} parent=5 // pred_check_branch
        %175 = sbr.rel (%p172) target = $region12
      $region11: #{model_forward.16} parent=5 // pred_region
        %s176 = ssub.s32 %s14, 1
      $region12: #{model_forward.16} parent=5 // pred_fallthru
        _
      %p177 = scmp.lt.s32.totalorder %s14, 2
      // Predicated region
      $region13: #{model_forward.16} parent=5 // pred_check
        %p178 = pneg %p177
      $region14: #{model_forward.16} parent=5 // pred_check_branch
        %180 = sbr.rel (%p178) target = $region16
      $region15: #{model_forward.16} parent=5 // pred_region
        // Predicated region
        $region17: #{model_forward.16} parent=15 // pred_check
          %p181 = pneg %p48
        $region18: #{model_forward.16} parent=15 // pred_check_branch
          %183 = sbr.rel (%p181) target = $region20
        $region19: #{model_forward.16} parent=15 // pred_region
          %p184 = scmp.lt.s32.totalorder %s21, 1
          %s185 = scalar_select %p184, %s21, 1
          %p186 = scmp.lt.s32.totalorder %s22, 0
          %s187 = scalar_select %p186, %s22, 0
          %s188 = sadd.s32 %s187, %s185
          %s189 = smul.addr %s188, 4
          %s190 = scalar_lea.vmem %s0, %s189
        $region20: #{model_forward.16} parent=15 // pred_fallthru
          _
        // Predicated region
        $region21: #{model_forward.16} parent=15 // pred_check
          %p191 = pneg %p74
        $region22: #{model_forward.16} parent=15 // pred_check_branch
          %193 = sbr.rel (%p191) target = $region24
        $region23: #{model_forward.16} parent=15 // pred_region
          %p194 = scmp.lt.s32.totalorder %s21, 1
          %s195 = scalar_select %p194, %s21, 1
          %s196 = smul.addr %s195, 4
          %s197 = scalar_lea.vmem %s1, %s196
        $region24: #{model_forward.16} parent=15 // pred_fallthru
          _
        // Predicated region
        $region25: #{model_forward.16} parent=15 // pred_check
          %p198 = pneg %p100
        $region26: #{model_forward.16} parent=15 // pred_check_branch
          %200 = sbr.rel (%p198) target = $region28
        $region27: #{model_forward.16} parent=15 // pred_region
          %p201 = scmp.lt.s32.totalorder %s21, 1
          %s202 = scalar_select %p201, %s21, 1
          %s203 = scalar_lea.vmem %s2, %s202
        $region28: #{model_forward.16} parent=15 // pred_fallthru
          _
      $region16: #{model_forward.16} parent=5 // pred_fallthru
        _
      %p204 = scmp.le.s32.totalorder 1, %s14
      %p205 = scmp.lt.s32.totalorder %s14, 3
      %p206 = pnand %p204, %p205
      %p207 = pneg %p206
      // Predicated region
      $region29: #{model_forward.16} parent=5 // pred_check
        _
      $region30: #{model_forward.16} parent=5 // pred_check_branch
        %209 = sbr.rel (%p206) target = $region32
      $region31: #{model_forward.16} parent=5 // pred_region
        %s210 = ssub.s32 %s14, 1
        %p211 = scmp.lt.s32.totalorder %s23, 1
        %s212 = scalar_select %p211, %s23, 1
        %p213 = scmp.lt.s32.totalorder %s24, 0
        %s214 = scalar_select %p213, %s24, 0
        %s215 = sadd.s32 %s214, %s212
        %s216 = smul.addr %s215, 4
        %s217 = scalar_lea.vmem %s0, %s216
        %p218 = pneg %p54
        %p219 = pneg %p51
        %p220 = scmp.lt.s32.totalorder %s23, 1
        %s221 = scalar_select %p220, %s23, 1
        %s222 = smul.addr %s221, 4
        %s223 = scalar_lea.vmem %s1, %s222
        %p224 = pneg %p80
        %p225 = pneg %p77
        %p226 = scmp.lt.s32.totalorder %s23, 1
        %s227 = scalar_select %p226, %s23, 1
        %s228 = scalar_lea.vmem %s2, %s227
        %p229 = pneg %p106
        %p230 = pneg %p103
        %p231 = pneg %p134
        %p232 = pneg %p131
        %p233 = scmp.lt.s32.totalorder %s23, 1
        %s234 = scalar_select %p233, %s23, 1
        %p235 = scmp.lt.s32.totalorder %s24, 0
        %s236 = scalar_select %p235, %s24, 0
        %s237 = sadd.s32 %s236, %s234
        %s238 = smul.addr %s237, 4
        %s239 = scalar_lea.vmem %s3, %s238
        %p240 = pneg %p162
        %p241 = pneg %p159
        %s242 = sand.u32 %s149, 1
        %s243 = scalar_lea.sflag [#allocation3], %s242
        %s244 = sand.u32 %s149, 1
        %s245 = smul.addr %s244, 32
        %s246 = scalar_lea.vmem [#allocation2], %s245
        %p247 = scmp.lt.s32.totalorder %s23, 1
        %s248 = scalar_select %p247, %s23, 1
        %p249 = scmp.lt.s32.totalorder %s24, 0
        %s250 = scalar_select %p249, %s24, 0
        %s251 = sadd.s32 %s250, %s248
        %s252 = smul.addr %s251, 4
        %s253 = scalar_lea.vmem %s0, %s252
        %p254 = scmp.lt.s32.totalorder %s23, 1
        %s255 = scalar_select %p254, %s23, 1
        %s256 = smul.addr %s255, 4
        %s257 = scalar_lea.vmem %s1, %s256
        %p258 = scmp.lt.s32.totalorder %s23, 1
        %s259 = scalar_select %p258, %s23, 1
        %s260 = scalar_lea.vmem %s2, %s259
        %p261 = scmp.lt.s32.totalorder %s23, 1
        %s262 = scalar_select %p261, %s23, 1
        %p263 = scmp.lt.s32.totalorder %s24, 0
        %s264 = scalar_select %p263, %s24, 0
        %s265 = sadd.s32 %s264, %s262
        %s266 = smul.addr %s265, 4
        %s267 = scalar_lea.vmem %s3, %s266
        %v269 = vld [vmem:[%s260] sm:$0x1]
        %v270 = vld [vmem:[%s253] sm:$0xf]
        %v271 = vld [vmem:[%s257] sm:$0xf]
        %v273 = vunpack.c.l.b16 %v271
        %v274 = vpack.c.b16 %v273, %v273
        %275 = vrot.lane.b32.xlu0 %v274, 96
        %v276 = vpop.permute.xlu0 %275
        %vm277 = vcmask 64512
        %v279 = vsel %vm277, %v270, 0
        %v282 = vsel %vm277, %v276, 0
        %284 = vmatprep.subr.bf16.mxu0 0
        %285 = vmatpush1.bf16.xpose.msra.mxu0 %v282
        %286 = vmatprep.subr.bf16.mxu0 0
        %287 = vmatpush1.bf16.xpose.msra.mxu0 0
        %288 = vmatprep.subr.bf16.mxu0 0
        %289 = vmatpush1.bf16.xpose.msra.mxu0 0
        %290 = vmatprep.subr.bf16.mxu0 0
        %291 = vmatpush1.bf16.xpose.msra.mxu0 0
        %292 = vmatprep.subr.bf16.mxu0 0
        %293 = vmatpush1.bf16.xpose.msra.mxu0 0
        %294 = vmatprep.subr.bf16.mxu0 0
        %295 = vmatpush1.bf16.xpose.msra.mxu0 0
        %296 = vmatprep.subr.bf16.mxu0 0
        %297 = vmatpush1.bf16.xpose.msra.mxu0 0
        %298 = vmatprep.subr.bf16.mxu0 0
        %299 = vmatpush1.bf16.xpose.msra.mxu0 0
        %300 = vmatprep.subr.bf16.mxu0 0
        %301 = vmatpush1.bf16.xpose.msra.mxu0 0
        %302 = vmatprep.subr.bf16.mxu0 0
        %303 = vmatpush1.bf16.xpose.msra.mxu0 0
        %304 = vmatprep.subr.bf16.mxu0 0
        %305 = vmatpush1.bf16.xpose.msra.mxu0 0
        %306 = vmatprep.subr.bf16.mxu0 0
        %307 = vmatpush1.bf16.xpose.msra.mxu0 0
        %308 = vmatprep.subr.bf16.mxu0 0
        %309 = vmatpush1.bf16.xpose.msra.mxu0 0
        %310 = vmatprep.subr.bf16.mxu0 0
        %311 = vmatpush1.bf16.xpose.msra.mxu0 0
        %312 = vmatprep.subr.bf16.mxu0 0
        %313 = vmatpush1.bf16.xpose.msra.mxu0 0
        %314 = vmatprep.subr.bf16.mxu0 0
        %315 = vmatpush1.bf16.xpose.msra.mxu0 0
        %316 = vmatprep.mubr.bf16.mxu0 0
        %317 = vmatmul.mubr.bf16.gmra.mrb[0].mxu0 %v279
        %v318 = vpop.f32.mrb[0].mxu0
        %v319 = vadd.f32 0.0, %v318
        %v320 = vpop.f32.mrb[0].mxu0
        %v321 = vpop.f32.mrb[0].mxu0
        %v322 = vpop.f32.mrb[0].mxu0
        %323 = vdwg.mxu0
        %v324 = vmul.f32 %v319, 0.35355338
        %v326 = vlaneseq
        %v327 = vshrl.u32 %v326, 7
        %v328 = vsub.s32 0, %v327
        %v329 = vrot.slane %v269, %v328
        %v331 = vadd.f32 %v324, %v329
        %v332 = vsel %vm277, %v331, -inf
        %333 = vmax.xlane.f32.xlu0 %v332
        %v334 = vpop.xlane.xlu0 %333
        %v335 = vsub.f32 %v331, %v334
        %v336 = vmul.f32 %v335, 1.442695
        %v337 = vpow.pop %v336
        %v338 = vsel %vm277, %v337, 0.0
        %339 = vadd.xlane.f32.xlu0 %v338
        %v340 = vpop.xlane.xlu0 %339
        %v341 = vrcp.pop %v340
        %v342 = vmul.f32 %v337, %v341
        %v343 = vpack.c.bf16 %v342, %v342
        %344 = vrot.lane.b32.xlu0 %v274, 64
        %v345 = vpop.permute.xlu0 %344
        %v347 = vsel %vm277, %v343, 0
        %vm349 = vcmask 1043456
        %v351 = vsel %vm349, %v345, 0
        %353 = vmatprep.subr.bf16.mxu0 0
        %354 = vmatpush1.bf16.msra.mxu0 %v351
        %355 = vmatprep.subr.bf16.mxu0 0
        %356 = vmatpush1.bf16.msra.mxu0 0
        %357 = vmatprep.subr.bf16.mxu0 0
        %358 = vmatpush1.bf16.msra.mxu0 0
        %359 = vmatprep.subr.bf16.mxu0 0
        %360 = vmatpush1.bf16.msra.mxu0 0
        %361 = vmatprep.subr.bf16.mxu0 0
        %362 = vmatpush1.bf16.msra.mxu0 0
        %363 = vmatprep.subr.bf16.mxu0 0
        %364 = vmatpush1.bf16.msra.mxu0 0
        %365 = vmatprep.subr.bf16.mxu0 0
        %366 = vmatpush1.bf16.msra.mxu0 0
        %367 = vmatprep.subr.bf16.mxu0 0
        %368 = vmatpush1.bf16.msra.mxu0 0
        %369 = vmatprep.subr.bf16.mxu0 0
        %370 = vmatpush1.bf16.msra.mxu0 0
        %371 = vmatprep.subr.bf16.mxu0 0
        %372 = vmatpush1.bf16.msra.mxu0 0
        %373 = vmatprep.subr.bf16.mxu0 0
        %374 = vmatpush1.bf16.msra.mxu0 0
        %375 = vmatprep.subr.bf16.mxu0 0
        %376 = vmatpush1.bf16.msra.mxu0 0
        %377 = vmatprep.subr.bf16.mxu0 0
        %378 = vmatpush1.bf16.msra.mxu0 0
        %379 = vmatprep.subr.bf16.mxu0 0
        %380 = vmatpush1.bf16.msra.mxu0 0
        %381 = vmatprep.subr.bf16.mxu0 0
        %382 = vmatpush1.bf16.msra.mxu0 0
        %383 = vmatprep.subr.bf16.mxu0 0
        %384 = vmatpush1.bf16.msra.mxu0 0
        %385 = vmatprep.mubr.bf16.mxu0 0
        %386 = vmatmul.mubr.bf16.gmra.mrb[0].mxu0 %v347
        %v387 = vpop.f32.mrb[0].mxu0
        %v388 = vadd.f32 0.0, %v387
        %v389 = vpop.f32.mrb[0].mxu0
        %v390 = vpop.f32.mrb[0].mxu0
        %v391 = vpop.f32.mrb[0].mxu0
        %392 = vdwg.mxu0
        %393 = vst.msk [vmem:[%s246] sm:$0xff] %vm277, %v342
        %v394 = vld [vmem:[%s253] sm:$0xf]
        %v395 = vld [vmem:[%s257] sm:$0xf]
        %v397 = vunpack.c.l.b16 %v394
        %v398 = vpack.c.b16 %v397, %v397
        %399 = vrot.lane.b32.xlu0 %v398, 120
        %v400 = vpop.permute.xlu0 %399
        %v402 = vunpack.c.l.b16 %v395
        %v403 = vpack.c.b16 %v402, %v402
        %404 = vrot.lane.b32.xlu0 %v403, 88
        %v405 = vpop.permute.xlu0 %404
        %v407 = vsel %vm277, %v400, 0
        %v410 = vsel %vm277, %v405, 0
        %412 = vmatprep.subr.bf16.mxu0 0
        %413 = vmatpush1.bf16.xpose.msra.mxu0 %v410
        %414 = vmatprep.subr.bf16.mxu0 0
        %415 = vmatpush1.bf16.xpose.msra.mxu0 0
        %416 = vmatprep.subr.bf16.mxu0 0
        %417 = vmatpush1.bf16.xpose.msra.mxu0 0
        %418 = vmatprep.subr.bf16.mxu0 0
        %419 = vmatpush1.bf16.xpose.msra.mxu0 0
        %420 = vmatprep.subr.bf16.mxu0 0
        %421 = vmatpush1.bf16.xpose.msra.mxu0 0
        %422 = vmatprep.subr.bf16.mxu0 0
        %423 = vmatpush1.bf16.xpose.msra.mxu0 0
        %424 = vmatprep.subr.bf16.mxu0 0
        %425 = vmatpush1.bf16.xpose.msra.mxu0 0
        %426 = vmatprep.subr.bf16.mxu0 0
        %427 = vmatpush1.bf16.xpose.msra.mxu0 0
        %428 = vmatprep.subr.bf16.mxu0 0
        %429 = vmatpush1.bf16.xpose.msra.mxu0 0
        %430 = vmatprep.subr.bf16.mxu0 0
        %431 = vmatpush1.bf16.xpose.msra.mxu0 0
        %432 = vmatprep.subr.bf16.mxu0 0
        %433 = vmatpush1.bf16.xpose.msra.mxu0 0
        %434 = vmatprep.subr.bf16.mxu0 0
        %435 = vmatpush1.bf16.xpose.msra.mxu0 0
        %436 = vmatprep.subr.bf16.mxu0 0
        %437 = vmatpush1.bf16.xpose.msra.mxu0 0
        %438 = vmatprep.subr.bf16.mxu0 0
        %439 = vmatpush1.bf16.xpose.msra.mxu0 0
        %440 = vmatprep.subr.bf16.mxu0 0
        %441 = vmatpush1.bf16.xpose.msra.mxu0 0
        %442 = vmatprep.subr.bf16.mxu0 0
        %443 = vmatpush1.bf16.xpose.msra.mxu0 0
        %444 = vmatprep.mubr.bf16.mxu0 0
        %445 = vmatmul.mubr.bf16.gmra.mrb[0].mxu0 %v407
        %v446 = vpop.f32.mrb[0].mxu0
        %v447 = vadd.f32 0.0, %v446
        %v448 = vpop.f32.mrb[0].mxu0
        %v449 = vpop.f32.mrb[0].mxu0
        %v450 = vpop.f32.mrb[0].mxu0
        %451 = vdwg.mxu0
        %v452 = vmul.f32 %v447, 0.35355338
        %v453 = vadd.f32 %v452, %v329
        %v454 = vsel %vm277, %v453, -inf
        %455 = vmax.xlane.f32.xlu0 %v454
        %v456 = vpop.xlane.xlu0 %455
        %v457 = vsub.f32 %v453, %v456
        %v458 = vmul.f32 %v457, 1.442695
        %v459 = vpow.pop %v458
        %v460 = vsel %vm277, %v459, 0.0
        %461 = vadd.xlane.f32.xlu0 %v460
        %v462 = vpop.xlane.xlu0 %461
        %v463 = vrcp.pop %v462
        %v464 = vmul.f32 %v459, %v463
        %v465 = vpack.c.bf16 %v464, %v464
        %466 = vrot.lane.b32.xlu0 %v403, 56
        %v467 = vpop.permute.xlu0 %466
        %v469 = vsel %vm277, %v465, 0
        %v472 = vsel %vm349, %v467, 0
        %474 = vmatprep.subr.bf16.mxu0 0
        %475 = vmatpush1.bf16.msra.mxu0 %v472
        %476 = vmatprep.subr.bf16.mxu0 0
        %477 = vmatpush1.bf16.msra.mxu0 0
        %478 = vmatprep.subr.bf16.mxu0 0
        %479 = vmatpush1.bf16.msra.mxu0 0
        %480 = vmatprep.subr.bf16.mxu0 0
        %481 = vmatpush1.bf16.msra.mxu0 0
        %482 = vmatprep.subr.bf16.mxu0 0
        %483 = vmatpush1.bf16.msra.mxu0 0
        %484 = vmatprep.subr.bf16.mxu0 0
        %485 = vmatpush1.bf16.msra.mxu0 0
        %486 = vmatprep.subr.bf16.mxu0 0
        %487 = vmatpush1.bf16.msra.mxu0 0
        %488 = vmatprep.subr.bf16.mxu0 0
        %489 = vmatpush1.bf16.msra.mxu0 0
        %490 = vmatprep.subr.bf16.mxu0 0
        %491 = vmatpush1.bf16.msra.mxu0 0
        %492 = vmatprep.subr.bf16.mxu0 0
        %493 = vmatpush1.bf16.msra.mxu0 0
        %494 = vmatprep.subr.bf16.mxu0 0
        %495 = vmatpush1.bf16.msra.mxu0 0
        %496 = vmatprep.subr.bf16.mxu0 0
        %497 = vmatpush1.bf16.msra.mxu0 0
        %498 = vmatprep.subr.bf16.mxu0 0
        %499 = vmatpush1.bf16.msra.mxu0 0
        %500 = vmatprep.subr.bf16.mxu0 0
        %501 = vmatpush1.bf16.msra.mxu0 0
        %502 = vmatprep.subr.bf16.mxu0 0
        %503 = vmatpush1.bf16.msra.mxu0 0
        %504 = vmatprep.subr.bf16.mxu0 0
        %505 = vmatpush1.bf16.msra.mxu0 0
        %506 = vmatprep.mubr.bf16.mxu0 0
        %507 = vmatmul.mubr.bf16.gmra.mrb[0].mxu0 %v469
        %v508 = vpop.f32.mrb[0].mxu0
        %v509 = vadd.f32 0.0, %v508
        %v510 = vpop.f32.mrb[0].mxu0
        %v511 = vpop.f32.mrb[0].mxu0
        %v512 = vpop.f32.mrb[0].mxu0
        %513 = vdwg.mxu0
        %s514 = scalar_lea.vmem %s246, 8 [#allocation2]
        %515 = vst.msk [vmem:[%s514] sm:$0xff] %vm277, %v464
        %v516 = vld [vmem:[%s253] sm:$0xf]
        %v517 = vld [vmem:[%s257] sm:$0xf]
        %v519 = vunpack.c.l.b16 %v516
        %v520 = vpack.c.b16 %v519, %v519
        %521 = vrot.lane.b32.xlu0 %v520, 112
        %v522 = vpop.permute.xlu0 %521
        %v524 = vunpack.c.l.b16 %v517
        %v525 = vpack.c.b16 %v524, %v524
        %526 = vrot.lane.b32.xlu0 %v525, 80
        %v527 = vpop.permute.xlu0 %526
        %v529 = vsel %vm277, %v522, 0
        %v532 = vsel %vm277, %v527, 0
        %534 = vmatprep.subr.bf16.mxu0 0
        %535 = vmatpush1.bf16.xpose.msra.mxu0 %v532
        %536 = vmatprep.subr.bf16.mxu0 0
        %537 = vmatpush1.bf16.xpose.msra.mxu0 0
        %538 = vmatprep.subr.bf16.mxu0 0
        %539 = vmatpush1.bf16.xpose.msra.mxu0 0
        %540 = vmatprep.subr.bf16.mxu0 0
        %541 = vmatpush1.bf16.xpose.msra.mxu0 0
        %542 = vmatprep.subr.bf16.mxu0 0
        %543 = vmatpush1.bf16.xpose.msra.mxu0 0
        %544 = vmatprep.subr.bf16.mxu0 0
        %545 = vmatpush1.bf16.xpose.msra.mxu0 0
        %546 = vmatprep.subr.bf16.mxu0 0
        %547 = vmatpush1.bf16.xpose.msra.mxu0 0
        %548 = vmatprep.subr.bf16.mxu0 0
        %549 = vmatpush1.bf16.xpose.msra.mxu0 0
        %550 = vmatprep.subr.bf16.mxu0 0
        %551 = vmatpush1.bf16.xpose.msra.mxu0 0
        %552 = vmatprep.subr.bf16.mxu0 0
        %553 = vmatpush1.bf16.xpose.msra.mxu0 0
        %554 = vmatprep.subr.bf16.mxu0 0
        %555 = vmatpush1.bf16.xpose.msra.mxu0 0
        %556 = vmatprep.subr.bf16.mxu0 0
        %557 = vmatpush1.bf16.xpose.msra.mxu0 0
        %558 = vmatprep.subr.bf16.mxu0 0
        %559 = vmatpush1.bf16.xpose.msra.mxu0 0
        %560 = vmatprep.subr.bf16.mxu0 0
        %561 = vmatpush1.bf16.xpose.msra.mxu0 0
        %562 = vmatprep.subr.bf16.mxu0 0
        %563 = vmatpush1.bf16.xpose.msra.mxu0 0
        %564 = vmatprep.subr.bf16.mxu0 0
        %565 = vmatpush1.bf16.xpose.msra.mxu0 0
        %566 = vmatprep.mubr.bf16.mxu0 0
        %567 = vmatmul.mubr.bf16.gmra.mrb[0].mxu0 %v529
        %v568 = vpop.f32.mrb[0].mxu0
        %v569 = vadd.f32 0.0, %v568
        %v570 = vpop.f32.mrb[0].mxu0
        %v571 = vpop.f32.mrb[0].mxu0
        %v572 = vpop.f32.mrb[0].mxu0
        %573 = vdwg.mxu0
        %v574 = vmul.f32 %v569, 0.35355338
        %v575 = vadd.f32 %v574, %v329
        %v576 = vsel %vm277, %v575, -inf
        %577 = vmax.xlane.f32.xlu0 %v576
        %v578 = vpop.xlane.xlu0 %577
        %v579 = vsub.f32 %v575, %v578
        %v580 = vmul.f32 %v579, 1.442695
        %v581 = vpow.pop %v580
        %v582 = vsel %vm277, %v581, 0.0
        %583 = vadd.xlane.f32.xlu0 %v582
        %v584 = vpop.xlane.xlu0 %583
        %v585 = vrcp.pop %v584
        %v586 = vmul.f32 %v581, %v585
        %v587 = vpack.c.bf16 %v586, %v586
        %588 = vrot.lane.b32.xlu0 %v525, 48
        %v589 = vpop.permute.xlu0 %588
        %v591 = vsel %vm277, %v587, 0
        %v594 = vsel %vm349, %v589, 0
        %596 = vmatprep.subr.bf16.mxu0 0
        %597 = vmatpush1.bf16.msra.mxu0 %v594
        %598 = vmatprep.subr.bf16.mxu0 0
        %599 = vmatpush1.bf16.msra.mxu0 0
        %600 = vmatprep.subr.bf16.mxu0 0
        %601 = vmatpush1.bf16.msra.mxu0 0
        %602 = vmatprep.subr.bf16.mxu0 0
        %603 = vmatpush1.bf16.msra.mxu0 0
        %604 = vmatprep.subr.bf16.mxu0 0
        %605 = vmatpush1.bf16.msra.mxu0 0
        %606 = vmatprep.subr.bf16.mxu0 0
        %607 = vmatpush1.bf16.msra.mxu0 0
        %608 = vmatprep.subr.bf16.mxu0 0
        %609 = vmatpush1.bf16.msra.mxu0 0
        %610 = vmatprep.subr.bf16.mxu0 0
        %611 = vmatpush1.bf16.msra.mxu0 0
        %612 = vmatprep.subr.bf16.mxu0 0
        %613 = vmatpush1.bf16.msra.mxu0 0
        %614 = vmatprep.subr.bf16.mxu0 0
        %615 = vmatpush1.bf16.msra.mxu0 0
        %616 = vmatprep.subr.bf16.mxu0 0
        %617 = vmatpush1.bf16.msra.mxu0 0
        %618 = vmatprep.subr.bf16.mxu0 0
        %619 = vmatpush1.bf16.msra.mxu0 0
        %620 = vmatprep.subr.bf16.mxu0 0
        %621 = vmatpush1.bf16.msra.mxu0 0
        %622 = vmatprep.subr.bf16.mxu0 0
        %623 = vmatpush1.bf16.msra.mxu0 0
        %624 = vmatprep.subr.bf16.mxu0 0
        %625 = vmatpush1.bf16.msra.mxu0 0
        %626 = vmatprep.subr.bf16.mxu0 0
        %627 = vmatpush1.bf16.msra.mxu0 0
        %628 = vmatprep.mubr.bf16.mxu0 0
        %629 = vmatmul.mubr.bf16.gmra.mrb[0].mxu0 %v591
        %v630 = vpop.f32.mrb[0].mxu0
        %v631 = vadd.f32 0.0, %v630
        %v632 = vpop.f32.mrb[0].mxu0
        %v633 = vpop.f32.mrb[0].mxu0
        %v634 = vpop.f32.mrb[0].mxu0
        %635 = vdwg.mxu0
        %s636 = scalar_lea.vmem %s246, 16 [#allocation2]
        %637 = vst.msk [vmem:[%s636] sm:$0xff] %vm277, %v586
        %v638 = vld [vmem:[%s253] sm:$0xf]
        %v639 = vld [vmem:[%s257] sm:$0xf]
        %v641 = vunpack.c.l.b16 %v638
        %v642 = vpack.c.b16 %v641, %v641
        %643 = vrot.lane.b32.xlu0 %v642, 104
        %v644 = vpop.permute.xlu0 %643
        %v646 = vunpack.c.l.b16 %v639
        %v647 = vpack.c.b16 %v646, %v646
        %648 = vrot.lane.b32.xlu0 %v647, 72
        %v649 = vpop.permute.xlu0 %648
        %v651 = vsel %vm277, %v644, 0
        %v654 = vsel %vm277, %v649, 0
        %656 = vmatprep.subr.bf16.mxu0 0
        %657 = vmatpush1.bf16.xpose.msra.mxu0 %v654
        %658 = vmatprep.subr.bf16.mxu0 0
        %659 = vmatpush1.bf16.xpose.msra.mxu0 0
        %660 = vmatprep.subr.bf16.mxu0 0
        %661 = vmatpush1.bf16.xpose.msra.mxu0 0
        %662 = vmatprep.subr.bf16.mxu0 0
        %663 = vmatpush1.bf16.xpose.msra.mxu0 0
        %664 = vmatprep.subr.bf16.mxu0 0
        %665 = vmatpush1.bf16.xpose.msra.mxu0 0
        %666 = vmatprep.subr.bf16.mxu0 0
        %667 = vmatpush1.bf16.xpose.msra.mxu0 0
        %668 = vmatprep.subr.bf16.mxu0 0
        %669 = vmatpush1.bf16.xpose.msra.mxu0 0
        %670 = vmatprep.subr.bf16.mxu0 0
        %671 = vmatpush1.bf16.xpose.msra.mxu0 0
        %672 = vmatprep.subr.bf16.mxu0 0
        %673 = vmatpush1.bf16.xpose.msra.mxu0 0
        %674 = vmatprep.subr.bf16.mxu0 0
        %675 = vmatpush1.bf16.xpose.msra.mxu0 0
        %676 = vmatprep.subr.bf16.mxu0 0
        %677 = vmatpush1.bf16.xpose.msra.mxu0 0
        %678 = vmatprep.subr.bf16.mxu0 0
        %679 = vmatpush1.bf16.xpose.msra.mxu0 0
        %680 = vmatprep.subr.bf16.mxu0 0
        %681 = vmatpush1.bf16.xpose.msra.mxu0 0
        %682 = vmatprep.subr.bf16.mxu0 0
        %683 = vmatpush1.bf16.xpose.msra.mxu0 0
        %684 = vmatprep.subr.bf16.mxu0 0
        %685 = vmatpush1.bf16.xpose.msra.mxu0 0
        %686 = vmatprep.subr.bf16.mxu0 0
        %687 = vmatpush1.bf16.xpose.msra.mxu0 0
        %688 = vmatprep.mubr.bf16.mxu0 0
        %689 = vmatmul.mubr.bf16.gmra.mrb[0].mxu0 %v651
        %v690 = vpop.f32.mrb[0].mxu0
        %v691 = vadd.f32 0.0, %v690
        %v692 = vpop.f32.mrb[0].mxu0
        %v693 = vpop.f32.mrb[0].mxu0
        %v694 = vpop.f32.mrb[0].mxu0
        %695 = vdwg.mxu0
        %v696 = vmul.f32 %v691, 0.35355338
        %v697 = vadd.f32 %v696, %v329
        %v698 = vsel %vm277, %v697, -inf
        %699 = vmax.xlane.f32.xlu0 %v698
        %v700 = vpop.xlane.xlu0 %699
        %v701 = vsub.f32 %v697, %v700
        %v702 = vmul.f32 %v701, 1.442695
        %v703 = vpow.pop %v702
        %v704 = vsel %vm277, %v703, 0.0
        %705 = vadd.xlane.f32.xlu0 %v704
        %v706 = vpop.xlane.xlu0 %705
        %v707 = vrcp.pop %v706
        %v708 = vmul.f32 %v703, %v707
        %v709 = vpack.c.bf16 %v708, %v708
        %710 = vrot.lane.b32.xlu0 %v647, 40
        %v711 = vpop.permute.xlu0 %710
        %v713 = vsel %vm277, %v709, 0
        %v716 = vsel %vm349, %v711, 0
        %718 = vmatprep.subr.bf16.mxu0 0
        %719 = vmatpush1.bf16.msra.mxu0 %v716
        %720 = vmatprep.subr.bf16.mxu0 0
        %721 = vmatpush1.bf16.msra.mxu0 0
        %722 = vmatprep.subr.bf16.mxu0 0
        %723 = vmatpush1.bf16.msra.mxu0 0
        %724 = vmatprep.subr.bf16.mxu0 0
        %725 = vmatpush1.bf16.msra.mxu0 0
        %726 = vmatprep.subr.bf16.mxu0 0
        %727 = vmatpush1.bf16.msra.mxu0 0
        %728 = vmatprep.subr.bf16.mxu0 0
        %729 = vmatpush1.bf16.msra.mxu0 0
        %730 = vmatprep.subr.bf16.mxu0 0
        %731 = vmatpush1.bf16.msra.mxu0 0
        %732 = vmatprep.subr.bf16.mxu0 0
        %733 = vmatpush1.bf16.msra.mxu0 0
        %734 = vmatprep.subr.bf16.mxu0 0
        %735 = vmatpush1.bf16.msra.mxu0 0
        %736 = vmatprep.subr.bf16.mxu0 0
        %737 = vmatpush1.bf16.msra.mxu0 0
        %738 = vmatprep.subr.bf16.mxu0 0
        %739 = vmatpush1.bf16.msra.mxu0 0
        %740 = vmatprep.subr.bf16.mxu0 0
        %741 = vmatpush1.bf16.msra.mxu0 0
        %742 = vmatprep.subr.bf16.mxu0 0
        %743 = vmatpush1.bf16.msra.mxu0 0
        %744 = vmatprep.subr.bf16.mxu0 0
        %745 = vmatpush1.bf16.msra.mxu0 0
        %746 = vmatprep.subr.bf16.mxu0 0
        %747 = vmatpush1.bf16.msra.mxu0 0
        %748 = vmatprep.subr.bf16.mxu0 0
        %749 = vmatpush1.bf16.msra.mxu0 0
        %750 = vmatprep.mubr.bf16.mxu0 0
        %751 = vmatmul.mubr.bf16.gmra.mrb[0].mxu0 %v713
        %v752 = vpop.f32.mrb[0].mxu0
        %v753 = vadd.f32 0.0, %v752
        %v754 = vpop.f32.mrb[0].mxu0
        %v755 = vpop.f32.mrb[0].mxu0
        %v756 = vpop.f32.mrb[0].mxu0
        %757 = vdwg.mxu0
        %s758 = scalar_lea.vmem %s246, 24 [#allocation2]
        %759 = vst.msk [vmem:[%s758] sm:$0xff] %vm277, %v708
        %761 = vrot.lane.b32.xlu0 %v509, 8
        %v762 = vpop.permute.xlu0 %761
        %765 = vrot.lane.b32.xlu0 %v631, 16
        %v766 = vpop.permute.xlu0 %765
        %769 = vrot.lane.b32.xlu0 %v753, 24
        %v770 = vpop.permute.xlu0 %769
        %v772 = vsel %vm277, %v388, %v762
        %vm773 = vcmask 130048
        %v774 = vsel %vm773, %v772, %v766
        %vm775 = vcmask 195584
        %v776 = vsel %vm775, %v774, %v770
        %v777 = vpack.c.bf16 %v776, %v776
        %vm778 = vcmask 257024
        %779 = vst.msk [vmem:[%s267] sm:$0xf] %vm778, %v777
        %p780 = scmp.lt.s32.totalorder %s23, 1
        %s781 = scalar_select %p780, %s23, 1
        %p782 = scmp.lt.s32.totalorder %s24, 0
        %s783 = scalar_select %p782, %s24, 0
        %s784 = sadd.s32 %s783, %s781
        %s785 = smul.addr %s784, 4
        %s786 = scalar_lea.vmem %s3, %s785
        %s787 = sand.u32 %s149, 1
        %s788 = scalar_lea.sflag [#allocation3], %s787
        %s789 = sand.u32 %s149, 1
        %s790 = smul.addr %s789, 32
        %s791 = scalar_lea.vmem [#allocation2], %s790
        // Predicated region
        $region33: #{model_forward.16} parent=31 // pred_check
          %p792 = pneg %p131
        $region34: #{model_forward.16} parent=31 // pred_check_branch
          %794 = sbr.rel (%p792) target = $region36
        $region35: #{model_forward.16} parent=31 // pred_region
          _
        $region36: #{model_forward.16} parent=31 // pred_fallthru
          _
        // Predicated region
        $region37: #{model_forward.16} parent=31 // pred_check
          %p795 = pneg %p159
        $region38: #{model_forward.16} parent=31 // pred_check_branch
          %797 = sbr.rel (%p795) target = $region40
        $region39: #{model_forward.16} parent=31 // pred_region
          %s799 = ssub.s32 512, 512
          %800 = vsyncadd %s788, %s799
          %s801 = smul.addr %s23, 4
          %s802 = sadd.s32 %s24, %s801
          %s803 = smul.addr %s802, 128
          %s804 = scalar_lea.hbm %s4, %s803
          %s805 = sshll.u32 %s791, 4
          %s806 = int_to_ptr.vmem [resolvable:$true] %s805
          %811 = dma.vmem_to_hbm [thread:$0]  %s806, 512, %s804, %s788, 128, 128, 8
        $region40: #{model_forward.16} parent=31 // pred_fallthru
          _
      $region32: #{model_forward.16} parent=5 // pred_fallthru
        _
      %p812 = scmp.le.s32.totalorder 2, %s14
      // Predicated region
      $region41: #{model_forward.16} parent=5 // pred_check
        %p813 = pneg %p812
      $region42: #{model_forward.16} parent=5 // pred_check_branch
        %815 = sbr.rel (%p813) target = $region44
      $region43: #{model_forward.16} parent=5 // pred_region
        %s816 = ssub.s32 %s14, 2
        // Predicated region
        $region45: #{model_forward.16} parent=43 // pred_check
          %p817 = pneg %p137
        $region46: #{model_forward.16} parent=43 // pred_check_branch
          %819 = sbr.rel (%p817) target = $region48
        $region47: #{model_forward.16} parent=43 // pred_region
          %p820 = scmp.lt.s32.totalorder %s25, 1
          %s821 = scalar_select %p820, %s25, 1
          %p822 = scmp.lt.s32.totalorder %s26, 0
          %s823 = scalar_select %p822, %s26, 0
          %s824 = sadd.s32 %s823, %s821
          %s825 = smul.addr %s824, 4
          %s826 = scalar_lea.vmem %s3, %s825
        $region48: #{model_forward.16} parent=43 // pred_fallthru
          _
        // Predicated region
        $region49: #{model_forward.16} parent=43 // pred_check
          %p827 = pneg %p165
        $region50: #{model_forward.16} parent=43 // pred_check_branch
          %829 = sbr.rel (%p827) target = $region52
        $region51: #{model_forward.16} parent=43 // pred_region
          %s830 = sand.u32 %s150, 1
          %s831 = scalar_lea.sflag [#allocation3], %s830
          %s832 = sand.u32 %s150, 1
          %s833 = smul.addr %s832, 32
          %s834 = scalar_lea.vmem [#allocation2], %s833
          %835 = dma.done %s831, 512
        $region52: #{model_forward.16} parent=43 // pred_fallthru
          _
      $region44: #{model_forward.16} parent=5 // pred_fallthru
        _
    $region6: #{model_forward.16} parent=1 // loop_footer
      %s18 = sadd.s32 1, %s14
    $region7: #{model_forward.16} parent=1 // loop_footer_branch
      %13 = sbr.rel target = $region3
    $region8: #{model_forward.16} parent=1 // loop_exit
      _
    %836 = vsyncpa [#allocation3], 1
    %s837 = scalar_lea.sflag [#allocation3], 1
    %838 = vsyncpa %s837, 1

</llo_original>
